<compile_context>
chip_gen: v6e
topology: v6e:2x2x1
jax: 0.10.0
libtpu: 0.0.40
codegen_flags: <defaults>
</compile_context>

<pallas_src>
import jax
import jax.numpy as jnp
import numpy as np
from jax.experimental import pallas as pl
from jax.experimental.pallas import tpu as pltpu


def _fused_kernel(x_ref, w2_ref, b2_ref, w1_ref, b1_ref, o_ref, y_scr):
    # x_ref : (t, cin, Pb)         input frames, channels on sublanes, pixels on lanes
    # w2_ref: (4*cout, cin)        fused sub-pixel transposed-conv weight
    # b2_ref: (4*cout, 1)
    # w1_ref: (3, 4*cout, 4*cout)  block-diagonal temporal-conv weight per tap
    # b1_ref: (4*cout, 1)
    # o_ref : (t, 4*cout, Pb)      output
    # y_scr : (t, 4*cout, Pb)      VMEM scratch holding stage-1 results (no HBM trip)
    t = x_ref.shape[0]

    # ---- Stage 1: 2x2 stride-2 transposed conv (pure channel matmul) + ReLU ----
    for g in range(t):
        y = jnp.dot(w2_ref[...], x_ref[g], preferred_element_type=jnp.float32)
        y = y + b2_ref[...]
        y_scr[g] = jnp.maximum(y, 0.0)

    # ---- Stage 2: circular temporal Conv1d, kernel size 3 ----
    #   z[g] = W1[0] @ y[(g-1)%t] + W1[1] @ y[g] + W1[2] @ y[(g+1)%t] + b1
    for g in range(t):
        acc = jnp.dot(w1_ref[0], y_scr[(g - 1) % t], preferred_element_type=jnp.float32)
        acc = acc + jnp.dot(w1_ref[1], y_scr[g], preferred_element_type=jnp.float32)
        acc = acc + jnp.dot(w1_ref[2], y_scr[(g + 1) % t], preferred_element_type=jnp.float32)
        o_ref[g] = (acc + b1_ref[...]).astype(o_ref.dtype)


def _pick_p_block(P, t, cin, c4, budget_bytes=24 << 20):
    """Largest lane-dense (multiple-of-128) P tile that divides P and fits the VMEM
    budget (x tile x2 buffers + out tile x2 buffers + 1 scratch). Falls back to the
    whole P axis when P is not a multiple of 128 (small problems)."""
    if P % 128 != 0:
        return P

    def need(pb):
        return 4 * pb * t * (2 * cin + 3 * c4)

    pb = min(P, 2048)
    pb -= pb % 128
    while pb >= 128:
        if P % pb == 0 and need(pb) <= budget_bytes:
            return pb
        pb -= 128
    return 128


def conv_transpose2_1d(x, w2, b2, w1, b1):
    """x: (t, c_in, d1, d2); w2: (c_in, chans, 2, 2); b2: (chans,);
    w1: (chans, chans, 3); b1: (chans,). Returns (t, chans, 2*d1, 2*d2)."""
    # TODO(synk): only the default tcp=True branch (circular temporal padding) is implemented.
    t, cin, d1, d2 = x.shape
    cout = w2.shape[1]
    P = d1 * d2
    C4 = 4 * cout

    # ---- JAX glue: pure layout transforms (all cheap) ----
    x_cl = x.reshape(t, cin, P)                                   # (t, cin, P), free reshape
    # W2T[(ki*2+kj)*cout + oc, ic] = w2[ic, oc, ki, kj]
    w2t = jnp.transpose(w2, (2, 3, 1, 0)).reshape(C4, cin)        # (4*cout, cin)
    b2e = jnp.tile(b2, 4).reshape(C4, 1)
    # Block-diagonal temporal weights: one (4*cout, 4*cout) matrix per tap.
    eye4 = jnp.eye(4, dtype=w1.dtype)
    w1bd = jnp.stack([jnp.kron(eye4, w1[:, :, k]) for k in range(3)], axis=0)
    b1e = jnp.tile(b1, 4).reshape(C4, 1)

    pb = _pick_p_block(P, t, cin, C4)
    grid = (P // pb,)

    z = pl.pallas_call(
        _fused_kernel,
        out_shape=jax.ShapeDtypeStruct((t, C4, P), jnp.float32),
        grid=grid,
        in_specs=[
            pl.BlockSpec((t, cin, pb), lambda pi: (0, 0, pi)),
            pl.BlockSpec((C4, cin), lambda pi: (0, 0)),
            pl.BlockSpec((C4, 1), lambda pi: (0, 0)),
            pl.BlockSpec((3, C4, C4), lambda pi: (0, 0, 0)),
            pl.BlockSpec((C4, 1), lambda pi: (0, 0)),
        ],
        out_specs=pl.BlockSpec((t, C4, pb), lambda pi: (0, 0, pi)),
        scratch_shapes=[pltpu.VMEM((t, C4, pb), jnp.float32)],
        compiler_params=pltpu.CompilerParams(
            dimension_semantics=("parallel",),
            vmem_limit_bytes=32 * 1024 * 1024,
        ),
    )(x_cl, w2t, b2e, w1bd, b1e)

    # ---- JAX glue: interleave sub-pixel axis back into NCHW ----
    z = z.reshape(t, 2, 2, cout, d1, d2)      # (t, ki, kj, oc, i, j)
    z = z.transpose(0, 3, 4, 1, 5, 2)         # (t, oc, i, ki, j, kj)
    return z.reshape(t, cout, 2 * d1, 2 * d2)


def ref_forward(x, w2, b2, w1, b1):
    """Pure-JAX reference matching the PyTorch module (tcp=True)."""
    t, cin, d1, d2 = x.shape
    cout = w2.shape[1]
    # ConvTranspose2d, k=2, s=2, p=0
    y = jnp.einsum('tcij,cokl->toikjl', x, w2).reshape(t, cout, 2 * d1, 2 * d2)
    y = jnp.maximum(y + b2[None, :, None, None], 0.0)
    # circular temporal Conv1d, k=3
    ypad = jnp.concatenate([y[t - 1:t], y, y[0:1]], axis=0)
    z = jnp.zeros_like(y)
    for k in range(3):
        z = z + jnp.einsum('tcij,oc->toij', ypad[k:k + t], w1[:, :, k])
    return z + b1[None, :, None, None]


if __name__ == "__main__":
    t, in_chans, chans, d1, d2 = 8, 4, 8, 16, 16   # P = d1*d2 = 256 (lane-dense)

    key = jax.random.PRNGKey(0)
    k1, k2, k3, k4, k5 = jax.random.split(key, 5)
    x = jax.random.normal(k1, (t, in_chans, d1, d2), jnp.float32)
    w2 = jax.random.normal(k2, (in_chans, chans, 2, 2), jnp.float32) * 0.3
    b2 = jax.random.normal(k3, (chans,), jnp.float32) * 0.1
    w1 = jax.random.normal(k4, (chans, chans, 3), jnp.float32) * 0.2
    b1 = jax.random.normal(k5, (chans,), jnp.float32) * 0.1

    out = jax.block_until_ready(conv_transpose2_1d(x, w2, b2, w1, b1))
    ref = jax.block_until_ready(ref_forward(x, w2, b2, w1, b1))

    assert out.shape == (t, chans, 2 * d1, 2 * d2), out.shape
    np.testing.assert_allclose(np.asarray(out), np.asarray(ref), rtol=1e-4, atol=1e-4)
    print("KERNEL_OK")
</pallas_src>

<mosaic_0001>
module attributes {stable_mosaic.version = 11 : i64} {
  func.func @_fused_kernel(%arg0: i32, %arg1: memref<8x4x256xf32, #tpu.memory_space<vmem>>, %arg2: memref<32x4xf32, #tpu.memory_space<vmem>>, %arg3: memref<32x1xf32, #tpu.memory_space<vmem>>, %arg4: memref<3x32x32xf32, #tpu.memory_space<vmem>>, %arg5: memref<32x1xf32, #tpu.memory_space<vmem>>, %arg6: memref<8x32x256xf32, #tpu.memory_space<vmem>>, %arg7: memref<8x32x256xf32, #tpu.memory_space<vmem>>) attributes {dimension_semantics = [#tpu.dimension_semantics<parallel>], iteration_bounds = array<i64: 1>, scalar_prefetch = 0 : i64, scratch_operands = 1 : i64, tpu.core_type = #tpu.core_type<tc>, window_params = [{transform_indices = @transform_0, window_bounds = array<i64: 8, 4, 256>}, {pipeline_mode = #tpu.pipeline_mode<synchronous>, transform_indices = @transform_1, window_bounds = array<i64: 32, 4>}, {pipeline_mode = #tpu.pipeline_mode<synchronous>, transform_indices = @transform_2, window_bounds = array<i64: 32, 1>}, {pipeline_mode = #tpu.pipeline_mode<synchronous>, transform_indices = @transform_3, window_bounds = array<i64: 3, 32, 32>}, {pipeline_mode = #tpu.pipeline_mode<synchronous>, transform_indices = @transform_4, window_bounds = array<i64: 32, 1>}, {transform_indices = @transform_5, window_bounds = array<i64: 8, 32, 256>}]} {
    %c0 = arith.constant 0 : index
    %c0_0 = arith.constant 0 : index
    %0 = vector.load %arg2[%c0, %c0_0] : memref<32x4xf32, #tpu.memory_space<vmem>>, vector<32x4xf32>
    %c0_1 = arith.constant 0 : index
    %c0_2 = arith.constant 0 : index
    %c0_3 = arith.constant 0 : index
    %1 = vector.load %arg1[%c0_1, %c0_2, %c0_3] : memref<8x4x256xf32, #tpu.memory_space<vmem>>, vector<1x4x256xf32>
    %2 = vector.shape_cast %1 : vector<1x4x256xf32> to vector<4x256xf32>
    %cst = arith.constant dense<0.000000e+00> : vector<32x256xf32>
    %3 = tpu.matmul %0, %2, %cst {dimension_numbers = #tpu.dot_dimension_numbers<[1], [0], [0], [1], [0, 0, 1, 1], [], []>} : vector<32x4xf32>, vector<4x256xf32>, vector<32x256xf32> -> vector<32x256xf32>
    %c0_4 = arith.constant 0 : index
    %c0_5 = arith.constant 0 : index
    %4 = vector.load %arg3[%c0_4, %c0_5] : memref<32x1xf32, #tpu.memory_space<vmem>>, vector<32x1xf32>
    %5 = vector.broadcast %4 : vector<32x1xf32> to vector<32x256xf32>
    %6 = arith.addf %3, %5 : vector<32x256xf32>
    %cst_6 = arith.constant 0.000000e+00 : f32
    %7 = vector.broadcast %cst_6 : f32 to vector<32x256xf32>
    %8 = arith.maximumf %6, %7 : vector<32x256xf32>
    %c0_7 = arith.constant 0 : index
    %c0_8 = arith.constant 0 : index
    %c0_9 = arith.constant 0 : index
    %9 = vector.load %arg7[%c0_7, %c0_8, %c0_9] : memref<8x32x256xf32, #tpu.memory_space<vmem>>, vector<1x32x256xf32>
    %10 = vector.shape_cast %9 : vector<1x32x256xf32> to vector<32x256xf32>
    %11 = vector.shape_cast %8 : vector<32x256xf32> to vector<1x32x256xf32>
    tpu.vector_store %arg7[%c0_7, %c0_8, %c0_9], %11 {strides = array<i32>} : memref<8x32x256xf32, #tpu.memory_space<vmem>>, vector<1x32x256xf32>,
    %c0_10 = arith.constant 0 : index
    %c0_11 = arith.constant 0 : index
    %12 = vector.load %arg2[%c0_10, %c0_11] : memref<32x4xf32, #tpu.memory_space<vmem>>, vector<32x4xf32>
    %c1 = arith.constant 1 : index
    %c0_12 = arith.constant 0 : index
    %c0_13 = arith.constant 0 : index
    %13 = vector.load %arg1[%c1, %c0_12, %c0_13] : memref<8x4x256xf32, #tpu.memory_space<vmem>>, vector<1x4x256xf32>
    %14 = vector.shape_cast %13 : vector<1x4x256xf32> to vector<4x256xf32>
    %cst_14 = arith.constant dense<0.000000e+00> : vector<32x256xf32>
    %15 = tpu.matmul %12, %14, %cst_14 {dimension_numbers = #tpu.dot_dimension_numbers<[1], [0], [0], [1], [0, 0, 1, 1], [], []>} : vector<32x4xf32>, vector<4x256xf32>, vector<32x256xf32> -> vector<32x256xf32>
    %c0_15 = arith.constant 0 : index
    %c0_16 = arith.constant 0 : index
    %16 = vector.load %arg3[%c0_15, %c0_16] : memref<32x1xf32, #tpu.memory_space<vmem>>, vector<32x1xf32>
    %17 = vector.broadcast %16 : vector<32x1xf32> to vector<32x256xf32>
    %18 = arith.addf %15, %17 : vector<32x256xf32>
    %cst_17 = arith.constant 0.000000e+00 : f32
    %19 = vector.broadcast %cst_17 : f32 to vector<32x256xf32>
    %20 = arith.maximumf %18, %19 : vector<32x256xf32>
    %c1_18 = arith.constant 1 : index
    %c0_19 = arith.constant 0 : index
    %c0_20 = arith.constant 0 : index
    %21 = vector.load %arg7[%c1_18, %c0_19, %c0_20] : memref<8x32x256xf32, #tpu.memory_space<vmem>>, vector<1x32x256xf32>
    %22 = vector.shape_cast %21 : vector<1x32x256xf32> to vector<32x256xf32>
    %23 = vector.shape_cast %20 : vector<32x256xf32> to vector<1x32x256xf32>
    tpu.vector_store %arg7[%c1_18, %c0_19, %c0_20], %23 {strides = array<i32>} : memref<8x32x256xf32, #tpu.memory_space<vmem>>, vector<1x32x256xf32>,
    %c0_21 = arith.constant 0 : index
    %c0_22 = arith.constant 0 : index
    %24 = vector.load %arg2[%c0_21, %c0_22] : memref<32x4xf32, #tpu.memory_space<vmem>>, vector<32x4xf32>
    %c2 = arith.constant 2 : index
    %c0_23 = arith.constant 0 : index
    %c0_24 = arith.constant 0 : index
    %25 = vector.load %arg1[%c2, %c0_23, %c0_24] : memref<8x4x256xf32, #tpu.memory_space<vmem>>, vector<1x4x256xf32>
    %26 = vector.shape_cast %25 : vector<1x4x256xf32> to vector<4x256xf32>
    %cst_25 = arith.constant dense<0.000000e+00> : vector<32x256xf32>
    %27 = tpu.matmul %24, %26, %cst_25 {dimension_numbers = #tpu.dot_dimension_numbers<[1], [0], [0], [1], [0, 0, 1, 1], [], []>} : vector<32x4xf32>, vector<4x256xf32>, vector<32x256xf32> -> vector<32x256xf32>
    %c0_26 = arith.constant 0 : index
    %c0_27 = arith.constant 0 : index
    %28 = vector.load %arg3[%c0_26, %c0_27] : memref<32x1xf32, #tpu.memory_space<vmem>>, vector<32x1xf32>
    %29 = vector.broadcast %28 : vector<32x1xf32> to vector<32x256xf32>
    %30 = arith.addf %27, %29 : vector<32x256xf32>
    %cst_28 = arith.constant 0.000000e+00 : f32
    %31 = vector.broadcast %cst_28 : f32 to vector<32x256xf32>
    %32 = arith.maximumf %30, %31 : vector<32x256xf32>
    %c2_29 = arith.constant 2 : index
    %c0_30 = arith.constant 0 : index
    %c0_31 = arith.constant 0 : index
    %33 = vector.load %arg7[%c2_29, %c0_30, %c0_31] : memref<8x32x256xf32, #tpu.memory_space<vmem>>, vector<1x32x256xf32>
    %34 = vector.shape_cast %33 : vector<1x32x256xf32> to vector<32x256xf32>
    %35 = vector.shape_cast %32 : vector<32x256xf32> to vector<1x32x256xf32>
    tpu.vector_store %arg7[%c2_29, %c0_30, %c0_31], %35 {strides = array<i32>} : memref<8x32x256xf32, #tpu.memory_space<vmem>>, vector<1x32x256xf32>,
    %c0_32 = arith.constant 0 : index
    %c0_33 = arith.constant 0 : index
    %36 = vector.load %arg2[%c0_32, %c0_33] : memref<32x4xf32, #tpu.memory_space<vmem>>, vector<32x4xf32>
    %c3 = arith.constant 3 : index
    %c0_34 = arith.constant 0 : index
    %c0_35 = arith.constant 0 : index
    %37 = vector.load %arg1[%c3, %c0_34, %c0_35] : memref<8x4x256xf32, #tpu.memory_space<vmem>>, vector<1x4x256xf32>
    %38 = vector.shape_cast %37 : vector<1x4x256xf32> to vector<4x256xf32>
    %cst_36 = arith.constant dense<0.000000e+00> : vector<32x256xf32>
    %39 = tpu.matmul %36, %38, %cst_36 {dimension_numbers = #tpu.dot_dimension_numbers<[1], [0], [0], [1], [0, 0, 1, 1], [], []>} : vector<32x4xf32>, vector<4x256xf32>, vector<32x256xf32> -> vector<32x256xf32>
    %c0_37 = arith.constant 0 : index
    %c0_38 = arith.constant 0 : index
    %40 = vector.load %arg3[%c0_37, %c0_38] : memref<32x1xf32, #tpu.memory_space<vmem>>, vector<32x1xf32>
    %41 = vector.broadcast %40 : vector<32x1xf32> to vector<32x256xf32>
    %42 = arith.addf %39, %41 : vector<32x256xf32>
    %cst_39 = arith.constant 0.000000e+00 : f32
    %43 = vector.broadcast %cst_39 : f32 to vector<32x256xf32>
    %44 = arith.maximumf %42, %43 : vector<32x256xf32>
    %c3_40 = arith.constant 3 : index
    %c0_41 = arith.constant 0 : index
    %c0_42 = arith.constant 0 : index
    %45 = vector.load %arg7[%c3_40, %c0_41, %c0_42] : memref<8x32x256xf32, #tpu.memory_space<vmem>>, vector<1x32x256xf32>
    %46 = vector.shape_cast %45 : vector<1x32x256xf32> to vector<32x256xf32>
    %47 = vector.shape_cast %44 : vector<32x256xf32> to vector<1x32x256xf32>
    tpu.vector_store %arg7[%c3_40, %c0_41, %c0_42], %47 {strides = array<i32>} : memref<8x32x256xf32, #tpu.memory_space<vmem>>, vector<1x32x256xf32>,
    %c0_43 = arith.constant 0 : index
    %c0_44 = arith.constant 0 : index
    %48 = vector.load %arg2[%c0_43, %c0_44] : memref<32x4xf32, #tpu.memory_space<vmem>>, vector<32x4xf32>
    %c4 = arith.constant 4 : index
    %c0_45 = arith.constant 0 : index
    %c0_46 = arith.constant 0 : index
    %49 = vector.load %arg1[%c4, %c0_45, %c0_46] : memref<8x4x256xf32, #tpu.memory_space<vmem>>, vector<1x4x256xf32>
    %50 = vector.shape_cast %49 : vector<1x4x256xf32> to vector<4x256xf32>
    %cst_47 = arith.constant dense<0.000000e+00> : vector<32x256xf32>
    %51 = tpu.matmul %48, %50, %cst_47 {dimension_numbers = #tpu.dot_dimension_numbers<[1], [0], [0], [1], [0, 0, 1, 1], [], []>} : vector<32x4xf32>, vector<4x256xf32>, vector<32x256xf32> -> vector<32x256xf32>
    %c0_48 = arith.constant 0 : index
    %c0_49 = arith.constant 0 : index
    %52 = vector.load %arg3[%c0_48, %c0_49] : memref<32x1xf32, #tpu.memory_space<vmem>>, vector<32x1xf32>
    %53 = vector.broadcast %52 : vector<32x1xf32> to vector<32x256xf32>
    %54 = arith.addf %51, %53 : vector<32x256xf32>
    %cst_50 = arith.constant 0.000000e+00 : f32
    %55 = vector.broadcast %cst_50 : f32 to vector<32x256xf32>
    %56 = arith.maximumf %54, %55 : vector<32x256xf32>
    %c4_51 = arith.constant 4 : index
    %c0_52 = arith.constant 0 : index
    %c0_53 = arith.constant 0 : index
    %57 = vector.load %arg7[%c4_51, %c0_52, %c0_53] : memref<8x32x256xf32, #tpu.memory_space<vmem>>, vector<1x32x256xf32>
    %58 = vector.shape_cast %57 : vector<1x32x256xf32> to vector<32x256xf32>
    %59 = vector.shape_cast %56 : vector<32x256xf32> to vector<1x32x256xf32>
    tpu.vector_store %arg7[%c4_51, %c0_52, %c0_53], %59 {strides = array<i32>} : memref<8x32x256xf32, #tpu.memory_space<vmem>>, vector<1x32x256xf32>,
    %c0_54 = arith.constant 0 : index
    %c0_55 = arith.constant 0 : index
    %60 = vector.load %arg2[%c0_54, %c0_55] : memref<32x4xf32, #tpu.memory_space<vmem>>, vector<32x4xf32>
    %c5 = arith.constant 5 : index
    %c0_56 = arith.constant 0 : index
    %c0_57 = arith.constant 0 : index
    %61 = vector.load %arg1[%c5, %c0_56, %c0_57] : memref<8x4x256xf32, #tpu.memory_space<vmem>>, vector<1x4x256xf32>
    %62 = vector.shape_cast %61 : vector<1x4x256xf32> to vector<4x256xf32>
    %cst_58 = arith.constant dense<0.000000e+00> : vector<32x256xf32>
    %63 = tpu.matmul %60, %62, %cst_58 {dimension_numbers = #tpu.dot_dimension_numbers<[1], [0], [0], [1], [0, 0, 1, 1], [], []>} : vector<32x4xf32>, vector<4x256xf32>, vector<32x256xf32> -> vector<32x256xf32>
    %c0_59 = arith.constant 0 : index
    %c0_60 = arith.constant 0 : index
    %64 = vector.load %arg3[%c0_59, %c0_60] : memref<32x1xf32, #tpu.memory_space<vmem>>, vector<32x1xf32>
    %65 = vector.broadcast %64 : vector<32x1xf32> to vector<32x256xf32>
    %66 = arith.addf %63, %65 : vector<32x256xf32>
    %cst_61 = arith.constant 0.000000e+00 : f32
    %67 = vector.broadcast %cst_61 : f32 to vector<32x256xf32>
    %68 = arith.maximumf %66, %67 : vector<32x256xf32>
    %c5_62 = arith.constant 5 : index
    %c0_63 = arith.constant 0 : index
    %c0_64 = arith.constant 0 : index
    %69 = vector.load %arg7[%c5_62, %c0_63, %c0_64] : memref<8x32x256xf32, #tpu.memory_space<vmem>>, vector<1x32x256xf32>
    %70 = vector.shape_cast %69 : vector<1x32x256xf32> to vector<32x256xf32>
    %71 = vector.shape_cast %68 : vector<32x256xf32> to vector<1x32x256xf32>
    tpu.vector_store %arg7[%c5_62, %c0_63, %c0_64], %71 {strides = array<i32>} : memref<8x32x256xf32, #tpu.memory_space<vmem>>, vector<1x32x256xf32>,
    %c0_65 = arith.constant 0 : index
    %c0_66 = arith.constant 0 : index
    %72 = vector.load %arg2[%c0_65, %c0_66] : memref<32x4xf32, #tpu.memory_space<vmem>>, vector<32x4xf32>
    %c6 = arith.constant 6 : index
    %c0_67 = arith.constant 0 : index
    %c0_68 = arith.constant 0 : index
    %73 = vector.load %arg1[%c6, %c0_67, %c0_68] : memref<8x4x256xf32, #tpu.memory_space<vmem>>, vector<1x4x256xf32>
    %74 = vector.shape_cast %73 : vector<1x4x256xf32> to vector<4x256xf32>
    %cst_69 = arith.constant dense<0.000000e+00> : vector<32x256xf32>
    %75 = tpu.matmul %72, %74, %cst_69 {dimension_numbers = #tpu.dot_dimension_numbers<[1], [0], [0], [1], [0, 0, 1, 1], [], []>} : vector<32x4xf32>, vector<4x256xf32>, vector<32x256xf32> -> vector<32x256xf32>
    %c0_70 = arith.constant 0 : index
    %c0_71 = arith.constant 0 : index
    %76 = vector.load %arg3[%c0_70, %c0_71] : memref<32x1xf32, #tpu.memory_space<vmem>>, vector<32x1xf32>
    %77 = vector.broadcast %76 : vector<32x1xf32> to vector<32x256xf32>
    %78 = arith.addf %75, %77 : vector<32x256xf32>
    %cst_72 = arith.constant 0.000000e+00 : f32
    %79 = vector.broadcast %cst_72 : f32 to vector<32x256xf32>
    %80 = arith.maximumf %78, %79 : vector<32x256xf32>
    %c6_73 = arith.constant 6 : index
    %c0_74 = arith.constant 0 : index
    %c0_75 = arith.constant 0 : index
    %81 = vector.load %arg7[%c6_73, %c0_74, %c0_75] : memref<8x32x256xf32, #tpu.memory_space<vmem>>, vector<1x32x256xf32>
    %82 = vector.shape_cast %81 : vector<1x32x256xf32> to vector<32x256xf32>
    %83 = vector.shape_cast %80 : vector<32x256xf32> to vector<1x32x256xf32>
    tpu.vector_store %arg7[%c6_73, %c0_74, %c0_75], %83 {strides = array<i32>} : memref<8x32x256xf32, #tpu.memory_space<vmem>>, vector<1x32x256xf32>,
    %c0_76 = arith.constant 0 : index
    %c0_77 = arith.constant 0 : index
    %84 = vector.load %arg2[%c0_76, %c0_77] : memref<32x4xf32, #tpu.memory_space<vmem>>, vector<32x4xf32>
    %c7 = arith.constant 7 : index
    %c0_78 = arith.constant 0 : index
    %c0_79 = arith.constant 0 : index
    %85 = vector.load %arg1[%c7, %c0_78, %c0_79] : memref<8x4x256xf32, #tpu.memory_space<vmem>>, vector<1x4x256xf32>
    %86 = vector.shape_cast %85 : vector<1x4x256xf32> to vector<4x256xf32>
    %cst_80 = arith.constant dense<0.000000e+00> : vector<32x256xf32>
    %87 = tpu.matmul %84, %86, %cst_80 {dimension_numbers = #tpu.dot_dimension_numbers<[1], [0], [0], [1], [0, 0, 1, 1], [], []>} : vector<32x4xf32>, vector<4x256xf32>, vector<32x256xf32> -> vector<32x256xf32>
    %c0_81 = arith.constant 0 : index
    %c0_82 = arith.constant 0 : index
    %88 = vector.load %arg3[%c0_81, %c0_82] : memref<32x1xf32, #tpu.memory_space<vmem>>, vector<32x1xf32>
    %89 = vector.broadcast %88 : vector<32x1xf32> to vector<32x256xf32>
    %90 = arith.addf %87, %89 : vector<32x256xf32>
    %cst_83 = arith.constant 0.000000e+00 : f32
    %91 = vector.broadcast %cst_83 : f32 to vector<32x256xf32>
    %92 = arith.maximumf %90, %91 : vector<32x256xf32>
    %c7_84 = arith.constant 7 : index
    %c0_85 = arith.constant 0 : index
    %c0_86 = arith.constant 0 : index
    %93 = vector.load %arg7[%c7_84, %c0_85, %c0_86] : memref<8x32x256xf32, #tpu.memory_space<vmem>>, vector<1x32x256xf32>
    %94 = vector.shape_cast %93 : vector<1x32x256xf32> to vector<32x256xf32>
    %95 = vector.shape_cast %92 : vector<32x256xf32> to vector<1x32x256xf32>
    tpu.vector_store %arg7[%c7_84, %c0_85, %c0_86], %95 {strides = array<i32>} : memref<8x32x256xf32, #tpu.memory_space<vmem>>, vector<1x32x256xf32>,
    %c0_87 = arith.constant 0 : index
    %c0_88 = arith.constant 0 : index
    %c0_89 = arith.constant 0 : index
    %96 = vector.load %arg4[%c0_87, %c0_88, %c0_89] : memref<3x32x32xf32, #tpu.memory_space<vmem>>, vector<1x32x32xf32>
    %97 = vector.shape_cast %96 : vector<1x32x32xf32> to vector<32x32xf32>
    %c7_90 = arith.constant 7 : index
    %c0_91 = arith.constant 0 : index
    %c0_92 = arith.constant 0 : index
    %98 = vector.load %arg7[%c7_90, %c0_91, %c0_92] : memref<8x32x256xf32, #tpu.memory_space<vmem>>, vector<1x32x256xf32>
    %99 = vector.shape_cast %98 : vector<1x32x256xf32> to vector<32x256xf32>
    %cst_93 = arith.constant dense<0.000000e+00> : vector<32x256xf32>
    %100 = tpu.matmul %97, %99, %cst_93 {dimension_numbers = #tpu.dot_dimension_numbers<[1], [0], [0], [1], [0, 0, 1, 1], [], []>} : vector<32x32xf32>, vector<32x256xf32>, vector<32x256xf32> -> vector<32x256xf32>
    %c1_94 = arith.constant 1 : index
    %c0_95 = arith.constant 0 : index
    %c0_96 = arith.constant 0 : index
    %101 = vector.load %arg4[%c1_94, %c0_95, %c0_96] : memref<3x32x32xf32, #tpu.memory_space<vmem>>, vector<1x32x32xf32>
    %102 = vector.shape_cast %101 : vector<1x32x32xf32> to vector<32x32xf32>
    %c0_97 = arith.constant 0 : index
    %c0_98 = arith.constant 0 : index
    %c0_99 = arith.constant 0 : index
    %103 = vector.load %arg7[%c0_97, %c0_98, %c0_99] : memref<8x32x256xf32, #tpu.memory_space<vmem>>, vector<1x32x256xf32>
    %104 = vector.shape_cast %103 : vector<1x32x256xf32> to vector<32x256xf32>
    %cst_100 = arith.constant dense<0.000000e+00> : vector<32x256xf32>
    %105 = tpu.matmul %102, %104, %cst_100 {dimension_numbers = #tpu.dot_dimension_numbers<[1], [0], [0], [1], [0, 0, 1, 1], [], []>} : vector<32x32xf32>, vector<32x256xf32>, vector<32x256xf32> -> vector<32x256xf32>
    %106 = arith.addf %100, %105 : vector<32x256xf32>
    %c2_101 = arith.constant 2 : index
    %c0_102 = arith.constant 0 : index
    %c0_103 = arith.constant 0 : index
    %107 = vector.load %arg4[%c2_101, %c0_102, %c0_103] : memref<3x32x32xf32, #tpu.memory_space<vmem>>, vector<1x32x32xf32>
    %108 = vector.shape_cast %107 : vector<1x32x32xf32> to vector<32x32xf32>
    %c1_104 = arith.constant 1 : index
    %c0_105 = arith.constant 0 : index
    %c0_106 = arith.constant 0 : index
    %109 = vector.load %arg7[%c1_104, %c0_105, %c0_106] : memref<8x32x256xf32, #tpu.memory_space<vmem>>, vector<1x32x256xf32>
    %110 = vector.shape_cast %109 : vector<1x32x256xf32> to vector<32x256xf32>
    %cst_107 = arith.constant dense<0.000000e+00> : vector<32x256xf32>
    %111 = tpu.matmul %108, %110, %cst_107 {dimension_numbers = #tpu.dot_dimension_numbers<[1], [0], [0], [1], [0, 0, 1, 1], [], []>} : vector<32x32xf32>, vector<32x256xf32>, vector<32x256xf32> -> vector<32x256xf32>
    %112 = arith.addf %106, %111 : vector<32x256xf32>
    %c0_108 = arith.constant 0 : index
    %c0_109 = arith.constant 0 : index
    %113 = vector.load %arg5[%c0_108, %c0_109] : memref<32x1xf32, #tpu.memory_space<vmem>>, vector<32x1xf32>
    %114 = vector.broadcast %113 : vector<32x1xf32> to vector<32x256xf32>
    %115 = arith.addf %112, %114 : vector<32x256xf32>
    %c0_110 = arith.constant 0 : index
    %c0_111 = arith.constant 0 : index
    %c0_112 = arith.constant 0 : index
    %116 = vector.load %arg6[%c0_110, %c0_111, %c0_112] : memref<8x32x256xf32, #tpu.memory_space<vmem>>, vector<1x32x256xf32>
    %117 = vector.shape_cast %116 : vector<1x32x256xf32> to vector<32x256xf32>
    %118 = vector.shape_cast %115 : vector<32x256xf32> to vector<1x32x256xf32>
    tpu.vector_store %arg6[%c0_110, %c0_111, %c0_112], %118 {strides = array<i32>} : memref<8x32x256xf32, #tpu.memory_space<vmem>>, vector<1x32x256xf32>,
    %c0_113 = arith.constant 0 : index
    %c0_114 = arith.constant 0 : index
    %c0_115 = arith.constant 0 : index
    %119 = vector.load %arg4[%c0_113, %c0_114, %c0_115] : memref<3x32x32xf32, #tpu.memory_space<vmem>>, vector<1x32x32xf32>
    %120 = vector.shape_cast %119 : vector<1x32x32xf32> to vector<32x32xf32>
    %c0_116 = arith.constant 0 : index
    %c0_117 = arith.constant 0 : index
    %c0_118 = arith.constant 0 : index
    %121 = vector.load %arg7[%c0_116, %c0_117, %c0_118] : memref<8x32x256xf32, #tpu.memory_space<vmem>>, vector<1x32x256xf32>
    %122 = vector.shape_cast %121 : vector<1x32x256xf32> to vector<32x256xf32>
    %cst_119 = arith.constant dense<0.000000e+00> : vector<32x256xf32>
    %123 = tpu.matmul %120, %122, %cst_119 {dimension_numbers = #tpu.dot_dimension_numbers<[1], [0], [0], [1], [0, 0, 1, 1], [], []>} : vector<32x32xf32>, vector<32x256xf32>, vector<32x256xf32> -> vector<32x256xf32>
    %c1_120 = arith.constant 1 : index
    %c0_121 = arith.constant 0 : index
    %c0_122 = arith.constant 0 : index
    %124 = vector.load %arg4[%c1_120, %c0_121, %c0_122] : memref<3x32x32xf32, #tpu.memory_space<vmem>>, vector<1x32x32xf32>
    %125 = vector.shape_cast %124 : vector<1x32x32xf32> to vector<32x32xf32>
    %c1_123 = arith.constant 1 : index
    %c0_124 = arith.constant 0 : index
    %c0_125 = arith.constant 0 : index
    %126 = vector.load %arg7[%c1_123, %c0_124, %c0_125] : memref<8x32x256xf32, #tpu.memory_space<vmem>>, vector<1x32x256xf32>
    %127 = vector.shape_cast %126 : vector<1x32x256xf32> to vector<32x256xf32>
    %cst_126 = arith.constant dense<0.000000e+00> : vector<32x256xf32>
    %128 = tpu.matmul %125, %127, %cst_126 {dimension_numbers = #tpu.dot_dimension_numbers<[1], [0], [0], [1], [0, 0, 1, 1], [], []>} : vector<32x32xf32>, vector<32x256xf32>, vector<32x256xf32> -> vector<32x256xf32>
    %129 = arith.addf %123, %128 : vector<32x256xf32>
    %c2_127 = arith.constant 2 : index
    %c0_128 = arith.constant 0 : index
    %c0_129 = arith.constant 0 : index
    %130 = vector.load %arg4[%c2_127, %c0_128, %c0_129] : memref<3x32x32xf32, #tpu.memory_space<vmem>>, vector<1x32x32xf32>
    %131 = vector.shape_cast %130 : vector<1x32x32xf32> to vector<32x32xf32>
    %c2_130 = arith.constant 2 : index
    %c0_131 = arith.constant 0 : index
    %c0_132 = arith.constant 0 : index
    %132 = vector.load %arg7[%c2_130, %c0_131, %c0_132] : memref<8x32x256xf32, #tpu.memory_space<vmem>>, vector<1x32x256xf32>
    %133 = vector.shape_cast %132 : vector<1x32x256xf32> to vector<32x256xf32>
    %cst_133 = arith.constant dense<0.000000e+00> : vector<32x256xf32>
    %134 = tpu.matmul %131, %133, %cst_133 {dimension_numbers = #tpu.dot_dimension_numbers<[1], [0], [0], [1], [0, 0, 1, 1], [], []>} : vector<32x32xf32>, vector<32x256xf32>, vector<32x256xf32> -> vector<32x256xf32>
    %135 = arith.addf %129, %134 : vector<32x256xf32>
    %c0_134 = arith.constant 0 : index
    %c0_135 = arith.constant 0 : index
    %136 = vector.load %arg5[%c0_134, %c0_135] : memref<32x1xf32, #tpu.memory_space<vmem>>, vector<32x1xf32>
    %137 = vector.broadcast %136 : vector<32x1xf32> to vector<32x256xf32>
    %138 = arith.addf %135, %137 : vector<32x256xf32>
    %c1_136 = arith.constant 1 : index
    %c0_137 = arith.constant 0 : index
    %c0_138 = arith.constant 0 : index
    %139 = vector.load %arg6[%c1_136, %c0_137, %c0_138] : memref<8x32x256xf32, #tpu.memory_space<vmem>>, vector<1x32x256xf32>
    %140 = vector.shape_cast %139 : vector<1x32x256xf32> to vector<32x256xf32>
    %141 = vector.shape_cast %138 : vector<32x256xf32> to vector<1x32x256xf32>
    tpu.vector_store %arg6[%c1_136, %c0_137, %c0_138], %141 {strides = array<i32>} : memref<8x32x256xf32, #tpu.memory_space<vmem>>, vector<1x32x256xf32>,
    %c0_139 = arith.constant 0 : index
    %c0_140 = arith.constant 0 : index
    %c0_141 = arith.constant 0 : index
    %142 = vector.load %arg4[%c0_139, %c0_140, %c0_141] : memref<3x32x32xf32, #tpu.memory_space<vmem>>, vector<1x32x32xf32>
    %143 = vector.shape_cast %142 : vector<1x32x32xf32> to vector<32x32xf32>
    %c1_142 = arith.constant 1 : index
    %c0_143 = arith.constant 0 : index
    %c0_144 = arith.constant 0 : index
    %144 = vector.load %arg7[%c1_142, %c0_143, %c0_144] : memref<8x32x256xf32, #tpu.memory_space<vmem>>, vector<1x32x256xf32>
    %145 = vector.shape_cast %144 : vector<1x32x256xf32> to vector<32x256xf32>
    %cst_145 = arith.constant dense<0.000000e+00> : vector<32x256xf32>
    %146 = tpu.matmul %143, %145, %cst_145 {dimension_numbers = #tpu.dot_dimension_numbers<[1], [0], [0], [1], [0, 0, 1, 1], [], []>} : vector<32x32xf32>, vector<32x256xf32>, vector<32x256xf32> -> vector<32x256xf32>
    %c1_146 = arith.constant 1 : index
    %c0_147 = arith.constant 0 : index
    %c0_148 = arith.constant 0 : index
    %147 = vector.load %arg4[%c1_146, %c0_147, %c0_148] : memref<3x32x32xf32, #tpu.memory_space<vmem>>, vector<1x32x32xf32>
    %148 = vector.shape_cast %147 : vector<1x32x32xf32> to vector<32x32xf32>
    %c2_149 = arith.constant 2 : index
    %c0_150 = arith.constant 0 : index
    %c0_151 = arith.constant 0 : index
    %149 = vector.load %arg7[%c2_149, %c0_150, %c0_151] : memref<8x32x256xf32, #tpu.memory_space<vmem>>, vector<1x32x256xf32>
    %150 = vector.shape_cast %149 : vector<1x32x256xf32> to vector<32x256xf32>
    %cst_152 = arith.constant dense<0.000000e+00> : vector<32x256xf32>
    %151 = tpu.matmul %148, %150, %cst_152 {dimension_numbers = #tpu.dot_dimension_numbers<[1], [0], [0], [1], [0, 0, 1, 1], [], []>} : vector<32x32xf32>, vector<32x256xf32>, vector<32x256xf32> -> vector<32x256xf32>
    %152 = arith.addf %146, %151 : vector<32x256xf32>
    %c2_153 = arith.constant 2 : index
    %c0_154 = arith.constant 0 : index
    %c0_155 = arith.constant 0 : index
    %153 = vector.load %arg4[%c2_153, %c0_154, %c0_155] : memref<3x32x32xf32, #tpu.memory_space<vmem>>, vector<1x32x32xf32>
    %154 = vector.shape_cast %153 : vector<1x32x32xf32> to vector<32x32xf32>
    %c3_156 = arith.constant 3 : index
    %c0_157 = arith.constant 0 : index
    %c0_158 = arith.constant 0 : index
    %155 = vector.load %arg7[%c3_156, %c0_157, %c0_158] : memref<8x32x256xf32, #tpu.memory_space<vmem>>, vector<1x32x256xf32>
    %156 = vector.shape_cast %155 : vector<1x32x256xf32> to vector<32x256xf32>
    %cst_159 = arith.constant dense<0.000000e+00> : vector<32x256xf32>
    %157 = tpu.matmul %154, %156, %cst_159 {dimension_numbers = #tpu.dot_dimension_numbers<[1], [0], [0], [1], [0, 0, 1, 1], [], []>} : vector<32x32xf32>, vector<32x256xf32>, vector<32x256xf32> -> vector<32x256xf32>
    %158 = arith.addf %152, %157 : vector<32x256xf32>
    %c0_160 = arith.constant 0 : index
    %c0_161 = arith.constant 0 : index
    %159 = vector.load %arg5[%c0_160, %c0_161] : memref<32x1xf32, #tpu.memory_space<vmem>>, vector<32x1xf32>
    %160 = vector.broadcast %159 : vector<32x1xf32> to vector<32x256xf32>
    %161 = arith.addf %158, %160 : vector<32x256xf32>
    %c2_162 = arith.constant 2 : index
    %c0_163 = arith.constant 0 : index
    %c0_164 = arith.constant 0 : index
    %162 = vector.load %arg6[%c2_162, %c0_163, %c0_164] : memref<8x32x256xf32, #tpu.memory_space<vmem>>, vector<1x32x256xf32>
    %163 = vector.shape_cast %162 : vector<1x32x256xf32> to vector<32x256xf32>
    %164 = vector.shape_cast %161 : vector<32x256xf32> to vector<1x32x256xf32>
    tpu.vector_store %arg6[%c2_162, %c0_163, %c0_164], %164 {strides = array<i32>} : memref<8x32x256xf32, #tpu.memory_space<vmem>>, vector<1x32x256xf32>,
    %c0_165 = arith.constant 0 : index
    %c0_166 = arith.constant 0 : index
    %c0_167 = arith.constant 0 : index
    %165 = vector.load %arg4[%c0_165, %c0_166, %c0_167] : memref<3x32x32xf32, #tpu.memory_space<vmem>>, vector<1x32x32xf32>
    %166 = vector.shape_cast %165 : vector<1x32x32xf32> to vector<32x32xf32>
    %c2_168 = arith.constant 2 : index
    %c0_169 = arith.constant 0 : index
    %c0_170 = arith.constant 0 : index
    %167 = vector.load %arg7[%c2_168, %c0_169, %c0_170] : memref<8x32x256xf32, #tpu.memory_space<vmem>>, vector<1x32x256xf32>
    %168 = vector.shape_cast %167 : vector<1x32x256xf32> to vector<32x256xf32>
    %cst_171 = arith.constant dense<0.000000e+00> : vector<32x256xf32>
    %169 = tpu.matmul %166, %168, %cst_171 {dimension_numbers = #tpu.dot_dimension_numbers<[1], [0], [0], [1], [0, 0, 1, 1], [], []>} : vector<32x32xf32>, vector<32x256xf32>, vector<32x256xf32> -> vector<32x256xf32>
    %c1_172 = arith.constant 1 : index
    %c0_173 = arith.constant 0 : index
    %c0_174 = arith.constant 0 : index
    %170 = vector.load %arg4[%c1_172, %c0_173, %c0_174] : memref<3x32x32xf32, #tpu.memory_space<vmem>>, vector<1x32x32xf32>
    %171 = vector.shape_cast %170 : vector<1x32x32xf32> to vector<32x32xf32>
    %c3_175 = arith.constant 3 : index
    %c0_176 = arith.constant 0 : index
    %c0_177 = arith.constant 0 : index
    %172 = vector.load %arg7[%c3_175, %c0_176, %c0_177] : memref<8x32x256xf32, #tpu.memory_space<vmem>>, vector<1x32x256xf32>
    %173 = vector.shape_cast %172 : vector<1x32x256xf32> to vector<32x256xf32>
    %cst_178 = arith.constant dense<0.000000e+00> : vector<32x256xf32>
    %174 = tpu.matmul %171, %173, %cst_178 {dimension_numbers = #tpu.dot_dimension_numbers<[1], [0], [0], [1], [0, 0, 1, 1], [], []>} : vector<32x32xf32>, vector<32x256xf32>, vector<32x256xf32> -> vector<32x256xf32>
    %175 = arith.addf %169, %174 : vector<32x256xf32>
    %c2_179 = arith.constant 2 : index
    %c0_180 = arith.constant 0 : index
    %c0_181 = arith.constant 0 : index
    %176 = vector.load %arg4[%c2_179, %c0_180, %c0_181] : memref<3x32x32xf32, #tpu.memory_space<vmem>>, vector<1x32x32xf32>
    %177 = vector.shape_cast %176 : vector<1x32x32xf32> to vector<32x32xf32>
    %c4_182 = arith.constant 4 : index
    %c0_183 = arith.constant 0 : index
    %c0_184 = arith.constant 0 : index
    %178 = vector.load %arg7[%c4_182, %c0_183, %c0_184] : memref<8x32x256xf32, #tpu.memory_space<vmem>>, vector<1x32x256xf32>
    %179 = vector.shape_cast %178 : vector<1x32x256xf32> to vector<32x256xf32>
    %cst_185 = arith.constant dense<0.000000e+00> : vector<32x256xf32>
    %180 = tpu.matmul %177, %179, %cst_185 {dimension_numbers = #tpu.dot_dimension_numbers<[1], [0], [0], [1], [0, 0, 1, 1], [], []>} : vector<32x32xf32>, vector<32x256xf32>, vector<32x256xf32> -> vector<32x256xf32>
    %181 = arith.addf %175, %180 : vector<32x256xf32>
    %c0_186 = arith.constant 0 : index
    %c0_187 = arith.constant 0 : index
    %182 = vector.load %arg5[%c0_186, %c0_187] : memref<32x1xf32, #tpu.memory_space<vmem>>, vector<32x1xf32>
    %183 = vector.broadcast %182 : vector<32x1xf32> to vector<32x256xf32>
    %184 = arith.addf %181, %183 : vector<32x256xf32>
    %c3_188 = arith.constant 3 : index
    %c0_189 = arith.constant 0 : index
    %c0_190 = arith.constant 0 : index
    %185 = vector.load %arg6[%c3_188, %c0_189, %c0_190] : memref<8x32x256xf32, #tpu.memory_space<vmem>>, vector<1x32x256xf32>
    %186 = vector.shape_cast %185 : vector<1x32x256xf32> to vector<32x256xf32>
    %187 = vector.shape_cast %184 : vector<32x256xf32> to vector<1x32x256xf32>
    tpu.vector_store %arg6[%c3_188, %c0_189, %c0_190], %187 {strides = array<i32>} : memref<8x32x256xf32, #tpu.memory_space<vmem>>, vector<1x32x256xf32>,
    %c0_191 = arith.constant 0 : index
    %c0_192 = arith.constant 0 : index
    %c0_193 = arith.constant 0 : index
    %188 = vector.load %arg4[%c0_191, %c0_192, %c0_193] : memref<3x32x32xf32, #tpu.memory_space<vmem>>, vector<1x32x32xf32>
    %189 = vector.shape_cast %188 : vector<1x32x32xf32> to vector<32x32xf32>
    %c3_194 = arith.constant 3 : index
    %c0_195 = arith.constant 0 : index
    %c0_196 = arith.constant 0 : index
    %190 = vector.load %arg7[%c3_194, %c0_195, %c0_196] : memref<8x32x256xf32, #tpu.memory_space<vmem>>, vector<1x32x256xf32>
    %191 = vector.shape_cast %190 : vector<1x32x256xf32> to vector<32x256xf32>
    %cst_197 = arith.constant dense<0.000000e+00> : vector<32x256xf32>
    %192 = tpu.matmul %189, %191, %cst_197 {dimension_numbers = #tpu.dot_dimension_numbers<[1], [0], [0], [1], [0, 0, 1, 1], [], []>} : vector<32x32xf32>, vector<32x256xf32>, vector<32x256xf32> -> vector<32x256xf32>
    %c1_198 = arith.constant 1 : index
    %c0_199 = arith.constant 0 : index
    %c0_200 = arith.constant 0 : index
    %193 = vector.load %arg4[%c1_198, %c0_199, %c0_200] : memref<3x32x32xf32, #tpu.memory_space<vmem>>, vector<1x32x32xf32>
    %194 = vector.shape_cast %193 : vector<1x32x32xf32> to vector<32x32xf32>
    %c4_201 = arith.constant 4 : index
    %c0_202 = arith.constant 0 : index
    %c0_203 = arith.constant 0 : index
    %195 = vector.load %arg7[%c4_201, %c0_202, %c0_203] : memref<8x32x256xf32, #tpu.memory_space<vmem>>, vector<1x32x256xf32>
    %196 = vector.shape_cast %195 : vector<1x32x256xf32> to vector<32x256xf32>
    %cst_204 = arith.constant dense<0.000000e+00> : vector<32x256xf32>
    %197 = tpu.matmul %194, %196, %cst_204 {dimension_numbers = #tpu.dot_dimension_numbers<[1], [0], [0], [1], [0, 0, 1, 1], [], []>} : vector<32x32xf32>, vector<32x256xf32>, vector<32x256xf32> -> vector<32x256xf32>
    %198 = arith.addf %192, %197 : vector<32x256xf32>
    %c2_205 = arith.constant 2 : index
    %c0_206 = arith.constant 0 : index
    %c0_207 = arith.constant 0 : index
    %199 = vector.load %arg4[%c2_205, %c0_206, %c0_207] : memref<3x32x32xf32, #tpu.memory_space<vmem>>, vector<1x32x32xf32>
    %200 = vector.shape_cast %199 : vector<1x32x32xf32> to vector<32x32xf32>
    %c5_208 = arith.constant 5 : index
    %c0_209 = arith.constant 0 : index
    %c0_210 = arith.constant 0 : index
    %201 = vector.load %arg7[%c5_208, %c0_209, %c0_210] : memref<8x32x256xf32, #tpu.memory_space<vmem>>, vector<1x32x256xf32>
    %202 = vector.shape_cast %201 : vector<1x32x256xf32> to vector<32x256xf32>
    %cst_211 = arith.constant dense<0.000000e+00> : vector<32x256xf32>
    %203 = tpu.matmul %200, %202, %cst_211 {dimension_numbers = #tpu.dot_dimension_numbers<[1], [0], [0], [1], [0, 0, 1, 1], [], []>} : vector<32x32xf32>, vector<32x256xf32>, vector<32x256xf32> -> vector<32x256xf32>
    %204 = arith.addf %198, %203 : vector<32x256xf32>
    %c0_212 = arith.constant 0 : index
    %c0_213 = arith.constant 0 : index
    %205 = vector.load %arg5[%c0_212, %c0_213] : memref<32x1xf32, #tpu.memory_space<vmem>>, vector<32x1xf32>
    %206 = vector.broadcast %205 : vector<32x1xf32> to vector<32x256xf32>
    %207 = arith.addf %204, %206 : vector<32x256xf32>
    %c4_214 = arith.constant 4 : index
    %c0_215 = arith.constant 0 : index
    %c0_216 = arith.constant 0 : index
    %208 = vector.load %arg6[%c4_214, %c0_215, %c0_216] : memref<8x32x256xf32, #tpu.memory_space<vmem>>, vector<1x32x256xf32>
    %209 = vector.shape_cast %208 : vector<1x32x256xf32> to vector<32x256xf32>
    %210 = vector.shape_cast %207 : vector<32x256xf32> to vector<1x32x256xf32>
    tpu.vector_store %arg6[%c4_214, %c0_215, %c0_216], %210 {strides = array<i32>} : memref<8x32x256xf32, #tpu.memory_space<vmem>>, vector<1x32x256xf32>,
    %c0_217 = arith.constant 0 : index
    %c0_218 = arith.constant 0 : index
    %c0_219 = arith.constant 0 : index
    %211 = vector.load %arg4[%c0_217, %c0_218, %c0_219] : memref<3x32x32xf32, #tpu.memory_space<vmem>>, vector<1x32x32xf32>
    %212 = vector.shape_cast %211 : vector<1x32x32xf32> to vector<32x32xf32>
    %c4_220 = arith.constant 4 : index
    %c0_221 = arith.constant 0 : index
    %c0_222 = arith.constant 0 : index
    %213 = vector.load %arg7[%c4_220, %c0_221, %c0_222] : memref<8x32x256xf32, #tpu.memory_space<vmem>>, vector<1x32x256xf32>
    %214 = vector.shape_cast %213 : vector<1x32x256xf32> to vector<32x256xf32>
    %cst_223 = arith.constant dense<0.000000e+00> : vector<32x256xf32>
    %215 = tpu.matmul %212, %214, %cst_223 {dimension_numbers = #tpu.dot_dimension_numbers<[1], [0], [0], [1], [0, 0, 1, 1], [], []>} : vector<32x32xf32>, vector<32x256xf32>, vector<32x256xf32> -> vector<32x256xf32>
    %c1_224 = arith.constant 1 : index
    %c0_225 = arith.constant 0 : index
    %c0_226 = arith.constant 0 : index
    %216 = vector.load %arg4[%c1_224, %c0_225, %c0_226] : memref<3x32x32xf32, #tpu.memory_space<vmem>>, vector<1x32x32xf32>
    %217 = vector.shape_cast %216 : vector<1x32x32xf32> to vector<32x32xf32>
    %c5_227 = arith.constant 5 : index
    %c0_228 = arith.constant 0 : index
    %c0_229 = arith.constant 0 : index
    %218 = vector.load %arg7[%c5_227, %c0_228, %c0_229] : memref<8x32x256xf32, #tpu.memory_space<vmem>>, vector<1x32x256xf32>
    %219 = vector.shape_cast %218 : vector<1x32x256xf32> to vector<32x256xf32>
    %cst_230 = arith.constant dense<0.000000e+00> : vector<32x256xf32>
    %220 = tpu.matmul %217, %219, %cst_230 {dimension_numbers = #tpu.dot_dimension_numbers<[1], [0], [0], [1], [0, 0, 1, 1], [], []>} : vector<32x32xf32>, vector<32x256xf32>, vector<32x256xf32> -> vector<32x256xf32>
    %221 = arith.addf %215, %220 : vector<32x256xf32>
    %c2_231 = arith.constant 2 : index
    %c0_232 = arith.constant 0 : index
    %c0_233 = arith.constant 0 : index
    %222 = vector.load %arg4[%c2_231, %c0_232, %c0_233] : memref<3x32x32xf32, #tpu.memory_space<vmem>>, vector<1x32x32xf32>
    %223 = vector.shape_cast %222 : vector<1x32x32xf32> to vector<32x32xf32>
    %c6_234 = arith.constant 6 : index
    %c0_235 = arith.constant 0 : index
    %c0_236 = arith.constant 0 : index
    %224 = vector.load %arg7[%c6_234, %c0_235, %c0_236] : memref<8x32x256xf32, #tpu.memory_space<vmem>>, vector<1x32x256xf32>
    %225 = vector.shape_cast %224 : vector<1x32x256xf32> to vector<32x256xf32>
    %cst_237 = arith.constant dense<0.000000e+00> : vector<32x256xf32>
    %226 = tpu.matmul %223, %225, %cst_237 {dimension_numbers = #tpu.dot_dimension_numbers<[1], [0], [0], [1], [0, 0, 1, 1], [], []>} : vector<32x32xf32>, vector<32x256xf32>, vector<32x256xf32> -> vector<32x256xf32>
    %227 = arith.addf %221, %226 : vector<32x256xf32>
    %c0_238 = arith.constant 0 : index
    %c0_239 = arith.constant 0 : index
    %228 = vector.load %arg5[%c0_238, %c0_239] : memref<32x1xf32, #tpu.memory_space<vmem>>, vector<32x1xf32>
    %229 = vector.broadcast %228 : vector<32x1xf32> to vector<32x256xf32>
    %230 = arith.addf %227, %229 : vector<32x256xf32>
    %c5_240 = arith.constant 5 : index
    %c0_241 = arith.constant 0 : index
    %c0_242 = arith.constant 0 : index
    %231 = vector.load %arg6[%c5_240, %c0_241, %c0_242] : memref<8x32x256xf32, #tpu.memory_space<vmem>>, vector<1x32x256xf32>
    %232 = vector.shape_cast %231 : vector<1x32x256xf32> to vector<32x256xf32>
    %233 = vector.shape_cast %230 : vector<32x256xf32> to vector<1x32x256xf32>
    tpu.vector_store %arg6[%c5_240, %c0_241, %c0_242], %233 {strides = array<i32>} : memref<8x32x256xf32, #tpu.memory_space<vmem>>, vector<1x32x256xf32>,
    %c0_243 = arith.constant 0 : index
    %c0_244 = arith.constant 0 : index
    %c0_245 = arith.constant 0 : index
    %234 = vector.load %arg4[%c0_243, %c0_244, %c0_245] : memref<3x32x32xf32, #tpu.memory_space<vmem>>, vector<1x32x32xf32>
    %235 = vector.shape_cast %234 : vector<1x32x32xf32> to vector<32x32xf32>
    %c5_246 = arith.constant 5 : index
    %c0_247 = arith.constant 0 : index
    %c0_248 = arith.constant 0 : index
    %236 = vector.load %arg7[%c5_246, %c0_247, %c0_248] : memref<8x32x256xf32, #tpu.memory_space<vmem>>, vector<1x32x256xf32>
    %237 = vector.shape_cast %236 : vector<1x32x256xf32> to vector<32x256xf32>
    %cst_249 = arith.constant dense<0.000000e+00> : vector<32x256xf32>
    %238 = tpu.matmul %235, %237, %cst_249 {dimension_numbers = #tpu.dot_dimension_numbers<[1], [0], [0], [1], [0, 0, 1, 1], [], []>} : vector<32x32xf32>, vector<32x256xf32>, vector<32x256xf32> -> vector<32x256xf32>
    %c1_250 = arith.constant 1 : index
    %c0_251 = arith.constant 0 : index
    %c0_252 = arith.constant 0 : index
    %239 = vector.load %arg4[%c1_250, %c0_251, %c0_252] : memref<3x32x32xf32, #tpu.memory_space<vmem>>, vector<1x32x32xf32>
    %240 = vector.shape_cast %239 : vector<1x32x32xf32> to vector<32x32xf32>
    %c6_253 = arith.constant 6 : index
    %c0_254 = arith.constant 0 : index
    %c0_255 = arith.constant 0 : index
    %241 = vector.load %arg7[%c6_253, %c0_254, %c0_255] : memref<8x32x256xf32, #tpu.memory_space<vmem>>, vector<1x32x256xf32>
    %242 = vector.shape_cast %241 : vector<1x32x256xf32> to vector<32x256xf32>
    %cst_256 = arith.constant dense<0.000000e+00> : vector<32x256xf32>
    %243 = tpu.matmul %240, %242, %cst_256 {dimension_numbers = #tpu.dot_dimension_numbers<[1], [0], [0], [1], [0, 0, 1, 1], [], []>} : vector<32x32xf32>, vector<32x256xf32>, vector<32x256xf32> -> vector<32x256xf32>
    %244 = arith.addf %238, %243 : vector<32x256xf32>
    %c2_257 = arith.constant 2 : index
    %c0_258 = arith.constant 0 : index
    %c0_259 = arith.constant 0 : index
    %245 = vector.load %arg4[%c2_257, %c0_258, %c0_259] : memref<3x32x32xf32, #tpu.memory_space<vmem>>, vector<1x32x32xf32>
    %246 = vector.shape_cast %245 : vector<1x32x32xf32> to vector<32x32xf32>
    %c7_260 = arith.constant 7 : index
    %c0_261 = arith.constant 0 : index
    %c0_262 = arith.constant 0 : index
    %247 = vector.load %arg7[%c7_260, %c0_261, %c0_262] : memref<8x32x256xf32, #tpu.memory_space<vmem>>, vector<1x32x256xf32>
    %248 = vector.shape_cast %247 : vector<1x32x256xf32> to vector<32x256xf32>
    %cst_263 = arith.constant dense<0.000000e+00> : vector<32x256xf32>
    %249 = tpu.matmul %246, %248, %cst_263 {dimension_numbers = #tpu.dot_dimension_numbers<[1], [0], [0], [1], [0, 0, 1, 1], [], []>} : vector<32x32xf32>, vector<32x256xf32>, vector<32x256xf32> -> vector<32x256xf32>
    %250 = arith.addf %244, %249 : vector<32x256xf32>
    %c0_264 = arith.constant 0 : index
    %c0_265 = arith.constant 0 : index
    %251 = vector.load %arg5[%c0_264, %c0_265] : memref<32x1xf32, #tpu.memory_space<vmem>>, vector<32x1xf32>
    %252 = vector.broadcast %251 : vector<32x1xf32> to vector<32x256xf32>
    %253 = arith.addf %250, %252 : vector<32x256xf32>
    %c6_266 = arith.constant 6 : index
    %c0_267 = arith.constant 0 : index
    %c0_268 = arith.constant 0 : index
    %254 = vector.load %arg6[%c6_266, %c0_267, %c0_268] : memref<8x32x256xf32, #tpu.memory_space<vmem>>, vector<1x32x256xf32>
    %255 = vector.shape_cast %254 : vector<1x32x256xf32> to vector<32x256xf32>
    %256 = vector.shape_cast %253 : vector<32x256xf32> to vector<1x32x256xf32>
    tpu.vector_store %arg6[%c6_266, %c0_267, %c0_268], %256 {strides = array<i32>} : memref<8x32x256xf32, #tpu.memory_space<vmem>>, vector<1x32x256xf32>,
    %c0_269 = arith.constant 0 : index
    %c0_270 = arith.constant 0 : index
    %c0_271 = arith.constant 0 : index
    %257 = vector.load %arg4[%c0_269, %c0_270, %c0_271] : memref<3x32x32xf32, #tpu.memory_space<vmem>>, vector<1x32x32xf32>
    %258 = vector.shape_cast %257 : vector<1x32x32xf32> to vector<32x32xf32>
    %c6_272 = arith.constant 6 : index
    %c0_273 = arith.constant 0 : index
    %c0_274 = arith.constant 0 : index
    %259 = vector.load %arg7[%c6_272, %c0_273, %c0_274] : memref<8x32x256xf32, #tpu.memory_space<vmem>>, vector<1x32x256xf32>
    %260 = vector.shape_cast %259 : vector<1x32x256xf32> to vector<32x256xf32>
    %cst_275 = arith.constant dense<0.000000e+00> : vector<32x256xf32>
    %261 = tpu.matmul %258, %260, %cst_275 {dimension_numbers = #tpu.dot_dimension_numbers<[1], [0], [0], [1], [0, 0, 1, 1], [], []>} : vector<32x32xf32>, vector<32x256xf32>, vector<32x256xf32> -> vector<32x256xf32>
    %c1_276 = arith.constant 1 : index
    %c0_277 = arith.constant 0 : index
    %c0_278 = arith.constant 0 : index
    %262 = vector.load %arg4[%c1_276, %c0_277, %c0_278] : memref<3x32x32xf32, #tpu.memory_space<vmem>>, vector<1x32x32xf32>
    %263 = vector.shape_cast %262 : vector<1x32x32xf32> to vector<32x32xf32>
    %c7_279 = arith.constant 7 : index
    %c0_280 = arith.constant 0 : index
    %c0_281 = arith.constant 0 : index
    %264 = vector.load %arg7[%c7_279, %c0_280, %c0_281] : memref<8x32x256xf32, #tpu.memory_space<vmem>>, vector<1x32x256xf32>
    %265 = vector.shape_cast %264 : vector<1x32x256xf32> to vector<32x256xf32>
    %cst_282 = arith.constant dense<0.000000e+00> : vector<32x256xf32>
    %266 = tpu.matmul %263, %265, %cst_282 {dimension_numbers = #tpu.dot_dimension_numbers<[1], [0], [0], [1], [0, 0, 1, 1], [], []>} : vector<32x32xf32>, vector<32x256xf32>, vector<32x256xf32> -> vector<32x256xf32>
    %267 = arith.addf %261, %266 : vector<32x256xf32>
    %c2_283 = arith.constant 2 : index
    %c0_284 = arith.constant 0 : index
    %c0_285 = arith.constant 0 : index
    %268 = vector.load %arg4[%c2_283, %c0_284, %c0_285] : memref<3x32x32xf32, #tpu.memory_space<vmem>>, vector<1x32x32xf32>
    %269 = vector.shape_cast %268 : vector<1x32x32xf32> to vector<32x32xf32>
    %c0_286 = arith.constant 0 : index
    %c0_287 = arith.constant 0 : index
    %c0_288 = arith.constant 0 : index
    %270 = vector.load %arg7[%c0_286, %c0_287, %c0_288] : memref<8x32x256xf32, #tpu.memory_space<vmem>>, vector<1x32x256xf32>
    %271 = vector.shape_cast %270 : vector<1x32x256xf32> to vector<32x256xf32>
    %cst_289 = arith.constant dense<0.000000e+00> : vector<32x256xf32>
    %272 = tpu.matmul %269, %271, %cst_289 {dimension_numbers = #tpu.dot_dimension_numbers<[1], [0], [0], [1], [0, 0, 1, 1], [], []>} : vector<32x32xf32>, vector<32x256xf32>, vector<32x256xf32> -> vector<32x256xf32>
    %273 = arith.addf %267, %272 : vector<32x256xf32>
    %c0_290 = arith.constant 0 : index
    %c0_291 = arith.constant 0 : index
    %274 = vector.load %arg5[%c0_290, %c0_291] : memref<32x1xf32, #tpu.memory_space<vmem>>, vector<32x1xf32>
    %275 = vector.broadcast %274 : vector<32x1xf32> to vector<32x256xf32>
    %276 = arith.addf %273, %275 : vector<32x256xf32>
    %c7_292 = arith.constant 7 : index
    %c0_293 = arith.constant 0 : index
    %c0_294 = arith.constant 0 : index
    %277 = vector.load %arg6[%c7_292, %c0_293, %c0_294] : memref<8x32x256xf32, #tpu.memory_space<vmem>>, vector<1x32x256xf32>
    %278 = vector.shape_cast %277 : vector<1x32x256xf32> to vector<32x256xf32>
    %279 = vector.shape_cast %276 : vector<32x256xf32> to vector<1x32x256xf32>
    tpu.vector_store %arg6[%c7_292, %c0_293, %c0_294], %279 {strides = array<i32>} : memref<8x32x256xf32, #tpu.memory_space<vmem>>, vector<1x32x256xf32>,
    return
  }
  func.func @transform_0(%arg0: i32) -> (i32, i32, i32) {
    %c0_i32 = arith.constant 0 : i32
    %c0_i32_0 = arith.constant 0 : i32
    %c0_i32_1 = arith.constant 0 : i32
    return %c0_i32, %c0_i32_0, %arg0 : i32, i32, i32
  }
  func.func @transform_1(%arg0: i32) -> (i32, i32) {
    %c0_i32 = arith.constant 0 : i32
    %c0_i32_0 = arith.constant 0 : i32
    %c0_i32_1 = arith.constant 0 : i32
    return %c0_i32, %c0_i32_0 : i32, i32
  }
  func.func @transform_2(%arg0: i32) -> (i32, i32) {
    %c0_i32 = arith.constant 0 : i32
    %c0_i32_0 = arith.constant 0 : i32
    %c0_i32_1 = arith.constant 0 : i32
    return %c0_i32, %c0_i32_0 : i32, i32
  }
  func.func @transform_3(%arg0: i32) -> (i32, i32, i32) {
    %c0_i32 = arith.constant 0 : i32
    %c0_i32_0 = arith.constant 0 : i32
    %c0_i32_1 = arith.constant 0 : i32
    %c0_i32_2 = arith.constant 0 : i32
    return %c0_i32, %c0_i32_0, %c0_i32_1 : i32, i32, i32
  }
  func.func @transform_4(%arg0: i32) -> (i32, i32) {
    %c0_i32 = arith.constant 0 : i32
    %c0_i32_0 = arith.constant 0 : i32
    %c0_i32_1 = arith.constant 0 : i32
    return %c0_i32, %c0_i32_0 : i32, i32
  }
  func.func @transform_5(%arg0: i32) -> (i32, i32, i32) {
    %c0_i32 = arith.constant 0 : i32
    %c0_i32_0 = arith.constant 0 : i32
    %c0_i32_1 = arith.constant 0 : i32
    return %c0_i32, %c0_i32_0, %arg0 : i32, i32, i32
  }
}

</mosaic_0001>

<llo_original>
// kernel: tpu_custom_call.1
$region0: #{tpu_custom_call.1}
  #allocation0 [shape = 'u32[]', space=smem, size = 0x4, offset = 0x4, fixed_abs, tag = 'smem constant byte address 0x4 - core index']
  #allocation1 [shape = 'u32[144,128]{1,0:T(1,128)}', space=vmem, size = 0x12000, scoped, tag = 'internal scratch']
  #allocation2 [shape = 'f32[8,32,256]{2,1,0:T(8,128)}', space=vmem, size = 0x40000, scoped, tag = 'scratch operand']
  %s0 = inlined_call_operand.hbm [shape: f32[8,4,256], index: 0, kind: input, shape index: {}]
  %s1 = inlined_call_operand.vmem [shape: f32[32,4], index: 1, kind: input, shape index: {}]
  %s2 = inlined_call_operand.vmem [shape: f32[32,1], index: 2, kind: input, shape index: {}]
  %s3 = inlined_call_operand.vmem [shape: f32[3,32,32], index: 3, kind: input, shape index: {}]
  %s4 = inlined_call_operand.vmem [shape: f32[32,1], index: 4, kind: input, shape index: {}]
  %s5 = inlined_call_operand.hbm [shape: f32[8,32,256], index: 5, kind: output, shape index: {}]
  %s6 = sld [smem:[#allocation0]]
  $region34: #{tpu_custom_call.1} parent=0
    _
  %s8 = ssub.s32 1, %s6
  %s9 = scalar_select 0, %s8, %s6
  $region1: #{tpu_custom_call.1} parent=0
    #allocation3 [shape = 'u8[32768]{0}', space=vmem, size = 0x8000, scoped, tag = 'input window, operand 0, single buffered']
    #allocation4 [shape = 's32[1]{0}', space=sflag, size = 0x4, scoped, tag = 'scoped memory for tpu_custom_call.1']
    #allocation5 [shape = 's32[1]{0}', space=sflag, size = 0x4, scoped, tag = 'scoped memory for tpu_custom_call.1']
    #allocation6 [shape = 'u8[262144]{0}', space=vmem, size = 0x40000, scoped, tag = 'output window, operand 0, single buffered']
    %10 = vsyncpa [#allocation4], 0
    %11 = vsyncpa [#allocation5], 0
    // Predicated region
    $region2: #{tpu_custom_call.1} parent=1 // pred_check
      _
    $region3: #{tpu_custom_call.1} parent=1 // pred_check_branch
      %13 = sbr.rel (0) target = $region5
    $region4: #{tpu_custom_call.1} parent=1 // pred_region
      %s15 = ssub.s32 1024, 1024
      %16 = vsyncadd [#allocation4], %s15
      %s17 = sshll.u32 [#allocation3], 4
      %s18 = int_to_ptr.vmem [resolvable:$true] %s17
      %23 = dma.hbm_to_vmem [thread:$0]  %s0, 1024, %s18, [#allocation4], 128, 128, 8
    $region5: #{tpu_custom_call.1} parent=1 // pred_fallthru
      _
    // Predicated region
    $region6: #{tpu_custom_call.1} parent=1 // pred_check
      _
    $region7: #{tpu_custom_call.1} parent=1 // pred_check_branch
      %25 = sbr.rel (0) target = $region9
    $region8: #{tpu_custom_call.1} parent=1 // pred_region
      _
    $region9: #{tpu_custom_call.1} parent=1 // pred_fallthru
      _
    // Predicated region
    $region10: #{tpu_custom_call.1} parent=1 // pred_check
      _
    $region11: #{tpu_custom_call.1} parent=1 // pred_check_branch
      %27 = sbr.rel (0) target = $region13
    $region12: #{tpu_custom_call.1} parent=1 // pred_region
      _
    $region13: #{tpu_custom_call.1} parent=1 // pred_fallthru
      _
    // Predicated region
    $region14: #{tpu_custom_call.1} parent=1 // pred_check
      _
    $region15: #{tpu_custom_call.1} parent=1 // pred_check_branch
      %29 = sbr.rel (0) target = $region17
    $region16: #{tpu_custom_call.1} parent=1 // pred_region
      _
    $region17: #{tpu_custom_call.1} parent=1 // pred_fallthru
      _
    // Predicated region
    $region18: #{tpu_custom_call.1} parent=1 // pred_check
      _
    $region19: #{tpu_custom_call.1} parent=1 // pred_check_branch
      %31 = sbr.rel (0) target = $region21
    $region20: #{tpu_custom_call.1} parent=1 // pred_region
      _
    $region21: #{tpu_custom_call.1} parent=1 // pred_fallthru
      _
    // Predicated region
    $region22: #{tpu_custom_call.1} parent=1 // pred_check
      _
    $region23: #{tpu_custom_call.1} parent=1 // pred_check_branch
      %33 = sbr.rel (0) target = $region25
    $region24: #{tpu_custom_call.1} parent=1 // pred_region
      %34 = dma.done [#allocation4], 1024
    $region25: #{tpu_custom_call.1} parent=1 // pred_fallthru
      _
    %v35 = vld [vmem:[%s1] sm:$0xff]
    %v36 = vld [vmem:[%s1 + $0x8] sm:$0xff]
    %v37 = vld [vmem:[%s1 + $0x10] sm:$0xff]
    %v38 = vld [vmem:[%s1 + $0x18] sm:$0xff]
    %v39 = vld [vmem:[#allocation3] sm:$0xff]
    %v40 = vld [vmem:[%s2] sm:$0xff]
    %v41 = vld [vmem:[%s2 + $0x8] sm:$0xff]
    %v42 = vld [vmem:[%s2 + $0x10] sm:$0xff]
    %v43 = vld [vmem:[%s2 + $0x18] sm:$0xff]
    %45 = vset.pattern.permute.xlu0 0
    %46 = vperm.xlu0 %45, %v40
    %v47 = vpop.permute.xlu0 %46
    %50 = vset.pattern.permute.xlu0 0
    %51 = vperm.xlu0 %50, %v41
    %v52 = vpop.permute.xlu0 %51
    %55 = vset.pattern.permute.xlu0 0
    %56 = vperm.xlu0 %55, %v42
    %v57 = vpop.permute.xlu0 %56
    %60 = vset.pattern.permute.xlu0 0
    %61 = vperm.xlu0 %60, %v43
    %v62 = vpop.permute.xlu0 %61
    %v65 = vcombine.high %v39, %v39
    %vm66 = vcmask 31744
    %v68 = vsel %vm66, %v35, 0
    %v71 = vsel %vm66, %v36, 0
    %v74 = vsel %vm66, %v37, 0
    %v77 = vsel %vm66, %v38, 0
    %vm79 = vcmask 1043456
    %v80 = vsel %vm79, %v39, 0
    %v82 = vsel %vm79, %v65, 0
    %84 = vmatprep.subr.mxu0 0.0
    %85 = vmatpush1.msra.mxu0 0.0
    %86 = vmatprep.subr.mxu0 0.0
    %87 = vmatpush1.msra.mxu0 0.0
    %88 = vmatprep.subr.mxu0 0.0
    %89 = vmatpush1.msra.mxu0 0.0
    %90 = vmatprep.subr.mxu0 0.0
    %91 = vmatpush1.msra.mxu0 0.0
    %92 = vmatprep.subr.mxu0 0.0
    %93 = vmatpush1.msra.mxu0 0.0
    %94 = vmatprep.subr.mxu0 0.0
    %95 = vmatpush1.msra.mxu0 0.0
    %96 = vmatprep.subr.mxu0 0.0
    %97 = vmatpush1.msra.mxu0 0.0
    %98 = vmatprep.subr.mxu0 0.0
    %99 = vmatpush1.msra.mxu0 0.0
    %100 = vmatprep.subr.mxu0 0.0
    %101 = vmatpush1.msra.mxu0 0.0
    %102 = vmatprep.subr.mxu0 0.0
    %103 = vmatpush1.msra.mxu0 0.0
    %104 = vmatprep.subr.mxu0 0.0
    %105 = vmatpush1.msra.mxu0 0.0
    %106 = vmatprep.subr.mxu0 0.0
    %107 = vmatpush1.msra.mxu0 0.0
    %108 = vmatprep.subr.mxu0 0.0
    %109 = vmatpush1.msra.mxu0 0.0
    %110 = vmatprep.subr.mxu0 0.0
    %111 = vmatpush1.msra.mxu0 0.0
    %112 = vmatprep.subr.mxu0 0.0
    %113 = vmatpush1.msra.mxu0 0.0
    %114 = vmatprep.subr.mxu0 %v82
    %115 = vmatpush1.msra.mxu0 %v80
    %116 = vmatprep.subr.mxu0 0.0
    %117 = vmatpush2.msra.mxu0 0.0
    %118 = vmatprep.subr.mxu0 0.0
    %119 = vmatpush2.msra.mxu0 0.0
    %120 = vmatprep.subr.mxu0 0.0
    %121 = vmatpush2.msra.mxu0 0.0
    %122 = vmatprep.subr.mxu0 0.0
    %123 = vmatpush2.msra.mxu0 0.0
    %124 = vmatprep.subr.mxu0 0.0
    %125 = vmatpush2.msra.mxu0 0.0
    %126 = vmatprep.subr.mxu0 0.0
    %127 = vmatpush2.msra.mxu0 0.0
    %128 = vmatprep.subr.mxu0 0.0
    %129 = vmatpush2.msra.mxu0 0.0
    %130 = vmatprep.subr.mxu0 0.0
    %131 = vmatpush2.msra.mxu0 0.0
    %132 = vmatprep.subr.mxu0 0.0
    %133 = vmatpush2.msra.mxu0 0.0
    %134 = vmatprep.subr.mxu0 0.0
    %135 = vmatpush2.msra.mxu0 0.0
    %136 = vmatprep.subr.mxu0 0.0
    %137 = vmatpush2.msra.mxu0 0.0
    %138 = vmatprep.subr.mxu0 0.0
    %139 = vmatpush2.msra.mxu0 0.0
    %140 = vmatprep.subr.mxu0 0.0
    %141 = vmatpush2.msra.mxu0 0.0
    %142 = vmatprep.subr.mxu0 0.0
    %143 = vmatpush2.msra.mxu0 0.0
    %144 = vmatprep.subr.mxu0 0.0
    %145 = vmatpush2.msra.mxu0 0.0
    %146 = vmatprep.subr.mxu0 0.0
    %147 = vmatpush2.msra.mxu0 0.0
    %148 = vmatprep.mubr.f32.mxu0 0.0
    %149 = vmatmul.mubr.f32.gmra.mxu0 %v68
    %v150 = vpop.f32.mrf.mxu0
    %v151 = vadd.f32 %v47, %v150
    %v152 = vpop.f32.mrf.mxu0
    %v153 = vadd.f32 %v47, %v152
    %154 = vmatprep.mubr.f32.mxu0 0.0
    %155 = vmatmul.mubr.f32.gmra.mxu0 %v71
    %v156 = vpop.f32.mrf.mxu0
    %v157 = vadd.f32 %v52, %v156
    %v158 = vpop.f32.mrf.mxu0
    %v159 = vadd.f32 %v52, %v158
    %160 = vmatprep.mubr.f32.mxu0 0.0
    %161 = vmatmul.mubr.f32.gmra.mxu0 %v74
    %v162 = vpop.f32.mrf.mxu0
    %v163 = vadd.f32 %v57, %v162
    %v164 = vpop.f32.mrf.mxu0
    %v165 = vadd.f32 %v57, %v164
    %166 = vmatprep.mubr.f32.mxu0 0.0
    %167 = vmatmul.mubr.f32.gmra.mxu0 %v77
    %v168 = vpop.f32.mrf.mxu0
    %v169 = vadd.f32 %v62, %v168
    %v170 = vpop.f32.mrf.mxu0
    %v171 = vadd.f32 %v62, %v170
    %172 = vdwg.mxu0
    %v173 = vmax.f32 %v151, 0.0
    %v174 = vmax.f32 %v153, 0.0
    %v175 = vmax.f32 %v157, 0.0
    %v176 = vmax.f32 %v159, 0.0
    %v177 = vmax.f32 %v163, 0.0
    %v178 = vmax.f32 %v165, 0.0
    %v179 = vmax.f32 %v169, 0.0
    %v180 = vmax.f32 %v171, 0.0
    %181 = vst [vmem:[#allocation2] sm:$0xff] %v173
    %182 = vst [vmem:[#allocation2 + $0x8] sm:$0xff] %v174
    %183 = vst [vmem:[#allocation2 + $0x10] sm:$0xff] %v175
    %184 = vst [vmem:[#allocation2 + $0x18] sm:$0xff] %v176
    %185 = vst [vmem:[#allocation2 + $0x20] sm:$0xff] %v177
    %186 = vst [vmem:[#allocation2 + $0x28] sm:$0xff] %v178
    %187 = vst [vmem:[#allocation2 + $0x30] sm:$0xff] %v179
    %188 = vst [vmem:[#allocation2 + $0x38] sm:$0xff] %v180
    %v189 = vld [vmem:[%s1] sm:$0xff]
    %v190 = vld [vmem:[%s1 + $0x8] sm:$0xff]
    %v191 = vld [vmem:[%s1 + $0x10] sm:$0xff]
    %v192 = vld [vmem:[%s1 + $0x18] sm:$0xff]
    %s193 = scalar_lea.vmem [#allocation3], 8
    %v194 = vld [vmem:[%s193] sm:$0xff]
    %v195 = vld [vmem:[%s2] sm:$0xff]
    %v196 = vld [vmem:[%s2 + $0x8] sm:$0xff]
    %v197 = vld [vmem:[%s2 + $0x10] sm:$0xff]
    %v198 = vld [vmem:[%s2 + $0x18] sm:$0xff]
    %200 = vset.pattern.permute.xlu0 0
    %201 = vperm.xlu0 %200, %v195
    %v202 = vpop.permute.xlu0 %201
    %205 = vset.pattern.permute.xlu0 0
    %206 = vperm.xlu0 %205, %v196
    %v207 = vpop.permute.xlu0 %206
    %210 = vset.pattern.permute.xlu0 0
    %211 = vperm.xlu0 %210, %v197
    %v212 = vpop.permute.xlu0 %211
    %215 = vset.pattern.permute.xlu0 0
    %216 = vperm.xlu0 %215, %v198
    %v217 = vpop.permute.xlu0 %216
    %v220 = vcombine.high %v194, %v194
    %v222 = vsel %vm66, %v189, 0
    %v225 = vsel %vm66, %v190, 0
    %v228 = vsel %vm66, %v191, 0
    %v231 = vsel %vm66, %v192, 0
    %v233 = vsel %vm79, %v194, 0
    %v235 = vsel %vm79, %v220, 0
    %237 = vmatprep.subr.mxu0 0.0
    %238 = vmatpush1.msra.mxu0 0.0
    %239 = vmatprep.subr.mxu0 0.0
    %240 = vmatpush1.msra.mxu0 0.0
    %241 = vmatprep.subr.mxu0 0.0
    %242 = vmatpush1.msra.mxu0 0.0
    %243 = vmatprep.subr.mxu0 0.0
    %244 = vmatpush1.msra.mxu0 0.0
    %245 = vmatprep.subr.mxu0 0.0
    %246 = vmatpush1.msra.mxu0 0.0
    %247 = vmatprep.subr.mxu0 0.0
    %248 = vmatpush1.msra.mxu0 0.0
    %249 = vmatprep.subr.mxu0 0.0
    %250 = vmatpush1.msra.mxu0 0.0
    %251 = vmatprep.subr.mxu0 0.0
    %252 = vmatpush1.msra.mxu0 0.0
    %253 = vmatprep.subr.mxu0 0.0
    %254 = vmatpush1.msra.mxu0 0.0
    %255 = vmatprep.subr.mxu0 0.0
    %256 = vmatpush1.msra.mxu0 0.0
    %257 = vmatprep.subr.mxu0 0.0
    %258 = vmatpush1.msra.mxu0 0.0
    %259 = vmatprep.subr.mxu0 0.0
    %260 = vmatpush1.msra.mxu0 0.0
    %261 = vmatprep.subr.mxu0 0.0
    %262 = vmatpush1.msra.mxu0 0.0
    %263 = vmatprep.subr.mxu0 0.0
    %264 = vmatpush1.msra.mxu0 0.0
    %265 = vmatprep.subr.mxu0 0.0
    %266 = vmatpush1.msra.mxu0 0.0
    %267 = vmatprep.subr.mxu0 %v235
    %268 = vmatpush1.msra.mxu0 %v233
    %269 = vmatprep.subr.mxu0 0.0
    %270 = vmatpush2.msra.mxu0 0.0
    %271 = vmatprep.subr.mxu0 0.0
    %272 = vmatpush2.msra.mxu0 0.0
    %273 = vmatprep.subr.mxu0 0.0
    %274 = vmatpush2.msra.mxu0 0.0
    %275 = vmatprep.subr.mxu0 0.0
    %276 = vmatpush2.msra.mxu0 0.0
    %277 = vmatprep.subr.mxu0 0.0
    %278 = vmatpush2.msra.mxu0 0.0
    %279 = vmatprep.subr.mxu0 0.0
    %280 = vmatpush2.msra.mxu0 0.0
    %281 = vmatprep.subr.mxu0 0.0
    %282 = vmatpush2.msra.mxu0 0.0
    %283 = vmatprep.subr.mxu0 0.0
    %284 = vmatpush2.msra.mxu0 0.0
    %285 = vmatprep.subr.mxu0 0.0
    %286 = vmatpush2.msra.mxu0 0.0
    %287 = vmatprep.subr.mxu0 0.0
    %288 = vmatpush2.msra.mxu0 0.0
    %289 = vmatprep.subr.mxu0 0.0
    %290 = vmatpush2.msra.mxu0 0.0
    %291 = vmatprep.subr.mxu0 0.0
    %292 = vmatpush2.msra.mxu0 0.0
    %293 = vmatprep.subr.mxu0 0.0
    %294 = vmatpush2.msra.mxu0 0.0
    %295 = vmatprep.subr.mxu0 0.0
    %296 = vmatpush2.msra.mxu0 0.0
    %297 = vmatprep.subr.mxu0 0.0
    %298 = vmatpush2.msra.mxu0 0.0
    %299 = vmatprep.subr.mxu0 0.0
    %300 = vmatpush2.msra.mxu0 0.0
    %301 = vmatprep.mubr.f32.mxu0 0.0
    %302 = vmatmul.mubr.f32.gmra.mxu0 %v222
    %v303 = vpop.f32.mrf.mxu0
    %v304 = vadd.f32 %v202, %v303
    %v305 = vpop.f32.mrf.mxu0
    %v306 = vadd.f32 %v202, %v305
    %307 = vmatprep.mubr.f32.mxu0 0.0
    %308 = vmatmul.mubr.f32.gmra.mxu0 %v225
    %v309 = vpop.f32.mrf.mxu0
    %v310 = vadd.f32 %v207, %v309
    %v311 = vpop.f32.mrf.mxu0
    %v312 = vadd.f32 %v207, %v311
    %313 = vmatprep.mubr.f32.mxu0 0.0
    %314 = vmatmul.mubr.f32.gmra.mxu0 %v228
    %v315 = vpop.f32.mrf.mxu0
    %v316 = vadd.f32 %v212, %v315
    %v317 = vpop.f32.mrf.mxu0
    %v318 = vadd.f32 %v212, %v317
    %319 = vmatprep.mubr.f32.mxu0 0.0
    %320 = vmatmul.mubr.f32.gmra.mxu0 %v231
    %v321 = vpop.f32.mrf.mxu0
    %v322 = vadd.f32 %v217, %v321
    %v323 = vpop.f32.mrf.mxu0
    %v324 = vadd.f32 %v217, %v323
    %325 = vdwg.mxu0
    %v326 = vmax.f32 %v304, 0.0
    %v327 = vmax.f32 %v306, 0.0
    %v328 = vmax.f32 %v310, 0.0
    %v329 = vmax.f32 %v312, 0.0
    %v330 = vmax.f32 %v316, 0.0
    %v331 = vmax.f32 %v318, 0.0
    %v332 = vmax.f32 %v322, 0.0
    %v333 = vmax.f32 %v324, 0.0
    %s334 = scalar_lea.vmem [#allocation2], 64
    %335 = vst [vmem:[%s334] sm:$0xff] %v326
    %336 = vst [vmem:[%s334 + $0x8] sm:$0xff] %v327
    %337 = vst [vmem:[%s334 + $0x10] sm:$0xff] %v328
    %338 = vst [vmem:[%s334 + $0x18] sm:$0xff] %v329
    %339 = vst [vmem:[%s334 + $0x20] sm:$0xff] %v330
    %340 = vst [vmem:[%s334 + $0x28] sm:$0xff] %v331
    %341 = vst [vmem:[%s334 + $0x30] sm:$0xff] %v332
    %342 = vst [vmem:[%s334 + $0x38] sm:$0xff] %v333
    %v343 = vld [vmem:[%s1] sm:$0xff]
    %v344 = vld [vmem:[%s1 + $0x8] sm:$0xff]
    %v345 = vld [vmem:[%s1 + $0x10] sm:$0xff]
    %v346 = vld [vmem:[%s1 + $0x18] sm:$0xff]
    %s347 = scalar_lea.vmem [#allocation3], 16
    %v348 = vld [vmem:[%s347] sm:$0xff]
    %v349 = vld [vmem:[%s2] sm:$0xff]
    %v350 = vld [vmem:[%s2 + $0x8] sm:$0xff]
    %v351 = vld [vmem:[%s2 + $0x10] sm:$0xff]
    %v352 = vld [vmem:[%s2 + $0x18] sm:$0xff]
    %354 = vset.pattern.permute.xlu0 0
    %355 = vperm.xlu0 %354, %v349
    %v356 = vpop.permute.xlu0 %355
    %359 = vset.pattern.permute.xlu0 0
    %360 = vperm.xlu0 %359, %v350
    %v361 = vpop.permute.xlu0 %360
    %364 = vset.pattern.permute.xlu0 0
    %365 = vperm.xlu0 %364, %v351
    %v366 = vpop.permute.xlu0 %365
    %369 = vset.pattern.permute.xlu0 0
    %370 = vperm.xlu0 %369, %v352
    %v371 = vpop.permute.xlu0 %370
    %v374 = vcombine.high %v348, %v348
    %v376 = vsel %vm66, %v343, 0
    %v379 = vsel %vm66, %v344, 0
    %v382 = vsel %vm66, %v345, 0
    %v385 = vsel %vm66, %v346, 0
    %v387 = vsel %vm79, %v348, 0
    %v389 = vsel %vm79, %v374, 0
    %391 = vmatprep.subr.mxu0 0.0
    %392 = vmatpush1.msra.mxu0 0.0
    %393 = vmatprep.subr.mxu0 0.0
    %394 = vmatpush1.msra.mxu0 0.0
    %395 = vmatprep.subr.mxu0 0.0
    %396 = vmatpush1.msra.mxu0 0.0
    %397 = vmatprep.subr.mxu0 0.0
    %398 = vmatpush1.msra.mxu0 0.0
    %399 = vmatprep.subr.mxu0 0.0
    %400 = vmatpush1.msra.mxu0 0.0
    %401 = vmatprep.subr.mxu0 0.0
    %402 = vmatpush1.msra.mxu0 0.0
    %403 = vmatprep.subr.mxu0 0.0
    %404 = vmatpush1.msra.mxu0 0.0
    %405 = vmatprep.subr.mxu0 0.0
    %406 = vmatpush1.msra.mxu0 0.0
    %407 = vmatprep.subr.mxu0 0.0
    %408 = vmatpush1.msra.mxu0 0.0
    %409 = vmatprep.subr.mxu0 0.0
    %410 = vmatpush1.msra.mxu0 0.0
    %411 = vmatprep.subr.mxu0 0.0
    %412 = vmatpush1.msra.mxu0 0.0
    %413 = vmatprep.subr.mxu0 0.0
    %414 = vmatpush1.msra.mxu0 0.0
    %415 = vmatprep.subr.mxu0 0.0
    %416 = vmatpush1.msra.mxu0 0.0
    %417 = vmatprep.subr.mxu0 0.0
    %418 = vmatpush1.msra.mxu0 0.0
    %419 = vmatprep.subr.mxu0 0.0
    %420 = vmatpush1.msra.mxu0 0.0
    %421 = vmatprep.subr.mxu0 %v389
    %422 = vmatpush1.msra.mxu0 %v387
    %423 = vmatprep.subr.mxu0 0.0
    %424 = vmatpush2.msra.mxu0 0.0
    %425 = vmatprep.subr.mxu0 0.0
    %426 = vmatpush2.msra.mxu0 0.0
    %427 = vmatprep.subr.mxu0 0.0
    %428 = vmatpush2.msra.mxu0 0.0
    %429 = vmatprep.subr.mxu0 0.0
    %430 = vmatpush2.msra.mxu0 0.0
    %431 = vmatprep.subr.mxu0 0.0
    %432 = vmatpush2.msra.mxu0 0.0
    %433 = vmatprep.subr.mxu0 0.0
    %434 = vmatpush2.msra.mxu0 0.0
    %435 = vmatprep.subr.mxu0 0.0
    %436 = vmatpush2.msra.mxu0 0.0
    %437 = vmatprep.subr.mxu0 0.0
    %438 = vmatpush2.msra.mxu0 0.0
    %439 = vmatprep.subr.mxu0 0.0
    %440 = vmatpush2.msra.mxu0 0.0
    %441 = vmatprep.subr.mxu0 0.0
    %442 = vmatpush2.msra.mxu0 0.0
    %443 = vmatprep.subr.mxu0 0.0
    %444 = vmatpush2.msra.mxu0 0.0
    %445 = vmatprep.subr.mxu0 0.0
    %446 = vmatpush2.msra.mxu0 0.0
    %447 = vmatprep.subr.mxu0 0.0
    %448 = vmatpush2.msra.mxu0 0.0
    %449 = vmatprep.subr.mxu0 0.0
    %450 = vmatpush2.msra.mxu0 0.0
    %451 = vmatprep.subr.mxu0 0.0
    %452 = vmatpush2.msra.mxu0 0.0
    %453 = vmatprep.subr.mxu0 0.0
    %454 = vmatpush2.msra.mxu0 0.0
    %455 = vmatprep.mubr.f32.mxu0 0.0
    %456 = vmatmul.mubr.f32.gmra.mxu0 %v376
    %v457 = vpop.f32.mrf.mxu0
    %v458 = vadd.f32 %v356, %v457
    %v459 = vpop.f32.mrf.mxu0
    %v460 = vadd.f32 %v356, %v459
    %461 = vmatprep.mubr.f32.mxu0 0.0
    %462 = vmatmul.mubr.f32.gmra.mxu0 %v379
    %v463 = vpop.f32.mrf.mxu0
    %v464 = vadd.f32 %v361, %v463
    %v465 = vpop.f32.mrf.mxu0
    %v466 = vadd.f32 %v361, %v465
    %467 = vmatprep.mubr.f32.mxu0 0.0
    %468 = vmatmul.mubr.f32.gmra.mxu0 %v382
    %v469 = vpop.f32.mrf.mxu0
    %v470 = vadd.f32 %v366, %v469
    %v471 = vpop.f32.mrf.mxu0
    %v472 = vadd.f32 %v366, %v471
    %473 = vmatprep.mubr.f32.mxu0 0.0
    %474 = vmatmul.mubr.f32.gmra.mxu0 %v385
    %v475 = vpop.f32.mrf.mxu0
    %v476 = vadd.f32 %v371, %v475
    %v477 = vpop.f32.mrf.mxu0
    %v478 = vadd.f32 %v371, %v477
    %479 = vdwg.mxu0
    %v480 = vmax.f32 %v458, 0.0
    %v481 = vmax.f32 %v460, 0.0
    %v482 = vmax.f32 %v464, 0.0
    %v483 = vmax.f32 %v466, 0.0
    %v484 = vmax.f32 %v470, 0.0
    %v485 = vmax.f32 %v472, 0.0
    %v486 = vmax.f32 %v476, 0.0
    %v487 = vmax.f32 %v478, 0.0
    %s488 = scalar_lea.vmem [#allocation2], 128
    %489 = vst [vmem:[%s488] sm:$0xff] %v480
    %490 = vst [vmem:[%s488 + $0x8] sm:$0xff] %v481
    %491 = vst [vmem:[%s488 + $0x10] sm:$0xff] %v482
    %492 = vst [vmem:[%s488 + $0x18] sm:$0xff] %v483
    %493 = vst [vmem:[%s488 + $0x20] sm:$0xff] %v484
    %494 = vst [vmem:[%s488 + $0x28] sm:$0xff] %v485
    %495 = vst [vmem:[%s488 + $0x30] sm:$0xff] %v486
    %496 = vst [vmem:[%s488 + $0x38] sm:$0xff] %v487
    %v497 = vld [vmem:[%s1] sm:$0xff]
    %v498 = vld [vmem:[%s1 + $0x8] sm:$0xff]
    %v499 = vld [vmem:[%s1 + $0x10] sm:$0xff]
    %v500 = vld [vmem:[%s1 + $0x18] sm:$0xff]
    %s501 = scalar_lea.vmem [#allocation3], 24
    %v502 = vld [vmem:[%s501] sm:$0xff]
    %v503 = vld [vmem:[%s2] sm:$0xff]
    %v504 = vld [vmem:[%s2 + $0x8] sm:$0xff]
    %v505 = vld [vmem:[%s2 + $0x10] sm:$0xff]
    %v506 = vld [vmem:[%s2 + $0x18] sm:$0xff]
    %508 = vset.pattern.permute.xlu0 0
    %509 = vperm.xlu0 %508, %v503
    %v510 = vpop.permute.xlu0 %509
    %513 = vset.pattern.permute.xlu0 0
    %514 = vperm.xlu0 %513, %v504
    %v515 = vpop.permute.xlu0 %514
    %518 = vset.pattern.permute.xlu0 0
    %519 = vperm.xlu0 %518, %v505
    %v520 = vpop.permute.xlu0 %519
    %523 = vset.pattern.permute.xlu0 0
    %524 = vperm.xlu0 %523, %v506
    %v525 = vpop.permute.xlu0 %524
    %v528 = vcombine.high %v502, %v502
    %v530 = vsel %vm66, %v497, 0
    %v533 = vsel %vm66, %v498, 0
    %v536 = vsel %vm66, %v499, 0
    %v539 = vsel %vm66, %v500, 0
    %v541 = vsel %vm79, %v502, 0
    %v543 = vsel %vm79, %v528, 0
    %545 = vmatprep.subr.mxu0 0.0
    %546 = vmatpush1.msra.mxu0 0.0
    %547 = vmatprep.subr.mxu0 0.0
    %548 = vmatpush1.msra.mxu0 0.0
    %549 = vmatprep.subr.mxu0 0.0
    %550 = vmatpush1.msra.mxu0 0.0
    %551 = vmatprep.subr.mxu0 0.0
    %552 = vmatpush1.msra.mxu0 0.0
    %553 = vmatprep.subr.mxu0 0.0
    %554 = vmatpush1.msra.mxu0 0.0
    %555 = vmatprep.subr.mxu0 0.0
    %556 = vmatpush1.msra.mxu0 0.0
    %557 = vmatprep.subr.mxu0 0.0
    %558 = vmatpush1.msra.mxu0 0.0
    %559 = vmatprep.subr.mxu0 0.0
    %560 = vmatpush1.msra.mxu0 0.0
    %561 = vmatprep.subr.mxu0 0.0
    %562 = vmatpush1.msra.mxu0 0.0
    %563 = vmatprep.subr.mxu0 0.0
    %564 = vmatpush1.msra.mxu0 0.0
    %565 = vmatprep.subr.mxu0 0.0
    %566 = vmatpush1.msra.mxu0 0.0
    %567 = vmatprep.subr.mxu0 0.0
    %568 = vmatpush1.msra.mxu0 0.0
    %569 = vmatprep.subr.mxu0 0.0
    %570 = vmatpush1.msra.mxu0 0.0
    %571 = vmatprep.subr.mxu0 0.0
    %572 = vmatpush1.msra.mxu0 0.0
    %573 = vmatprep.subr.mxu0 0.0
    %574 = vmatpush1.msra.mxu0 0.0
    %575 = vmatprep.subr.mxu0 %v543
    %576 = vmatpush1.msra.mxu0 %v541
    %577 = vmatprep.subr.mxu0 0.0
    %578 = vmatpush2.msra.mxu0 0.0
    %579 = vmatprep.subr.mxu0 0.0
    %580 = vmatpush2.msra.mxu0 0.0
    %581 = vmatprep.subr.mxu0 0.0
    %582 = vmatpush2.msra.mxu0 0.0
    %583 = vmatprep.subr.mxu0 0.0
    %584 = vmatpush2.msra.mxu0 0.0
    %585 = vmatprep.subr.mxu0 0.0
    %586 = vmatpush2.msra.mxu0 0.0
    %587 = vmatprep.subr.mxu0 0.0
    %588 = vmatpush2.msra.mxu0 0.0
    %589 = vmatprep.subr.mxu0 0.0
    %590 = vmatpush2.msra.mxu0 0.0
    %591 = vmatprep.subr.mxu0 0.0
    %592 = vmatpush2.msra.mxu0 0.0
    %593 = vmatprep.subr.mxu0 0.0
    %594 = vmatpush2.msra.mxu0 0.0
    %595 = vmatprep.subr.mxu0 0.0
    %596 = vmatpush2.msra.mxu0 0.0
    %597 = vmatprep.subr.mxu0 0.0
    %598 = vmatpush2.msra.mxu0 0.0
    %599 = vmatprep.subr.mxu0 0.0
    %600 = vmatpush2.msra.mxu0 0.0
    %601 = vmatprep.subr.mxu0 0.0
    %602 = vmatpush2.msra.mxu0 0.0
    %603 = vmatprep.subr.mxu0 0.0
    %604 = vmatpush2.msra.mxu0 0.0
    %605 = vmatprep.subr.mxu0 0.0
    %606 = vmatpush2.msra.mxu0 0.0
    %607 = vmatprep.subr.mxu0 0.0
    %608 = vmatpush2.msra.mxu0 0.0
    %609 = vmatprep.mubr.f32.mxu0 0.0
    %610 = vmatmul.mubr.f32.gmra.mxu0 %v530
    %v611 = vpop.f32.mrf.mxu0
    %v612 = vadd.f32 %v510, %v611
    %v613 = vpop.f32.mrf.mxu0
    %v614 = vadd.f32 %v510, %v613
    %615 = vmatprep.mubr.f32.mxu0 0.0
    %616 = vmatmul.mubr.f32.gmra.mxu0 %v533
    %v617 = vpop.f32.mrf.mxu0
    %v618 = vadd.f32 %v515, %v617
    %v619 = vpop.f32.mrf.mxu0
    %v620 = vadd.f32 %v515, %v619
    %621 = vmatprep.mubr.f32.mxu0 0.0
    %622 = vmatmul.mubr.f32.gmra.mxu0 %v536
    %v623 = vpop.f32.mrf.mxu0
    %v624 = vadd.f32 %v520, %v623
    %v625 = vpop.f32.mrf.mxu0
    %v626 = vadd.f32 %v520, %v625
    %627 = vmatprep.mubr.f32.mxu0 0.0
    %628 = vmatmul.mubr.f32.gmra.mxu0 %v539
    %v629 = vpop.f32.mrf.mxu0
    %v630 = vadd.f32 %v525, %v629
    %v631 = vpop.f32.mrf.mxu0
    %v632 = vadd.f32 %v525, %v631
    %633 = vdwg.mxu0
    %v634 = vmax.f32 %v612, 0.0
    %v635 = vmax.f32 %v614, 0.0
    %v636 = vmax.f32 %v618, 0.0
    %v637 = vmax.f32 %v620, 0.0
    %v638 = vmax.f32 %v624, 0.0
    %v639 = vmax.f32 %v626, 0.0
    %v640 = vmax.f32 %v630, 0.0
    %v641 = vmax.f32 %v632, 0.0
    %s642 = scalar_lea.vmem [#allocation2], 192
    %643 = vst [vmem:[%s642] sm:$0xff] %v634
    %644 = vst [vmem:[%s642 + $0x8] sm:$0xff] %v635
    %645 = vst [vmem:[%s642 + $0x10] sm:$0xff] %v636
    %646 = vst [vmem:[%s642 + $0x18] sm:$0xff] %v637
    %647 = vst [vmem:[%s642 + $0x20] sm:$0xff] %v638
    %648 = vst [vmem:[%s642 + $0x28] sm:$0xff] %v639
    %649 = vst [vmem:[%s642 + $0x30] sm:$0xff] %v640
    %650 = vst [vmem:[%s642 + $0x38] sm:$0xff] %v641
    %v651 = vld [vmem:[%s1] sm:$0xff]
    %v652 = vld [vmem:[%s1 + $0x8] sm:$0xff]
    %v653 = vld [vmem:[%s1 + $0x10] sm:$0xff]
    %v654 = vld [vmem:[%s1 + $0x18] sm:$0xff]
    %s655 = scalar_lea.vmem [#allocation3], 32
    %v656 = vld [vmem:[%s655] sm:$0xff]
    %v657 = vld [vmem:[%s2] sm:$0xff]
    %v658 = vld [vmem:[%s2 + $0x8] sm:$0xff]
    %v659 = vld [vmem:[%s2 + $0x10] sm:$0xff]
    %v660 = vld [vmem:[%s2 + $0x18] sm:$0xff]
    %662 = vset.pattern.permute.xlu0 0
    %663 = vperm.xlu0 %662, %v657
    %v664 = vpop.permute.xlu0 %663
    %667 = vset.pattern.permute.xlu0 0
    %668 = vperm.xlu0 %667, %v658
    %v669 = vpop.permute.xlu0 %668
    %672 = vset.pattern.permute.xlu0 0
    %673 = vperm.xlu0 %672, %v659
    %v674 = vpop.permute.xlu0 %673
    %677 = vset.pattern.permute.xlu0 0
    %678 = vperm.xlu0 %677, %v660
    %v679 = vpop.permute.xlu0 %678
    %v682 = vcombine.high %v656, %v656
    %v684 = vsel %vm66, %v651, 0
    %v687 = vsel %vm66, %v652, 0
    %v690 = vsel %vm66, %v653, 0
    %v693 = vsel %vm66, %v654, 0
    %v695 = vsel %vm79, %v656, 0
    %v697 = vsel %vm79, %v682, 0
    %699 = vmatprep.subr.mxu0 0.0
    %700 = vmatpush1.msra.mxu0 0.0
    %701 = vmatprep.subr.mxu0 0.0
    %702 = vmatpush1.msra.mxu0 0.0
    %703 = vmatprep.subr.mxu0 0.0
    %704 = vmatpush1.msra.mxu0 0.0
    %705 = vmatprep.subr.mxu0 0.0
    %706 = vmatpush1.msra.mxu0 0.0
    %707 = vmatprep.subr.mxu0 0.0
    %708 = vmatpush1.msra.mxu0 0.0
    %709 = vmatprep.subr.mxu0 0.0
    %710 = vmatpush1.msra.mxu0 0.0
    %711 = vmatprep.subr.mxu0 0.0
    %712 = vmatpush1.msra.mxu0 0.0
    %713 = vmatprep.subr.mxu0 0.0
    %714 = vmatpush1.msra.mxu0 0.0
    %715 = vmatprep.subr.mxu0 0.0
    %716 = vmatpush1.msra.mxu0 0.0
    %717 = vmatprep.subr.mxu0 0.0
    %718 = vmatpush1.msra.mxu0 0.0
    %719 = vmatprep.subr.mxu0 0.0
    %720 = vmatpush1.msra.mxu0 0.0
    %721 = vmatprep.subr.mxu0 0.0
    %722 = vmatpush1.msra.mxu0 0.0
    %723 = vmatprep.subr.mxu0 0.0
    %724 = vmatpush1.msra.mxu0 0.0
    %725 = vmatprep.subr.mxu0 0.0
    %726 = vmatpush1.msra.mxu0 0.0
    %727 = vmatprep.subr.mxu0 0.0
    %728 = vmatpush1.msra.mxu0 0.0
    %729 = vmatprep.subr.mxu0 %v697
    %730 = vmatpush1.msra.mxu0 %v695
    %731 = vmatprep.subr.mxu0 0.0
    %732 = vmatpush2.msra.mxu0 0.0
    %733 = vmatprep.subr.mxu0 0.0
    %734 = vmatpush2.msra.mxu0 0.0
    %735 = vmatprep.subr.mxu0 0.0
    %736 = vmatpush2.msra.mxu0 0.0
    %737 = vmatprep.subr.mxu0 0.0
    %738 = vmatpush2.msra.mxu0 0.0
    %739 = vmatprep.subr.mxu0 0.0
    %740 = vmatpush2.msra.mxu0 0.0
    %741 = vmatprep.subr.mxu0 0.0
    %742 = vmatpush2.msra.mxu0 0.0
    %743 = vmatprep.subr.mxu0 0.0
    %744 = vmatpush2.msra.mxu0 0.0
    %745 = vmatprep.subr.mxu0 0.0
    %746 = vmatpush2.msra.mxu0 0.0
    %747 = vmatprep.subr.mxu0 0.0
    %748 = vmatpush2.msra.mxu0 0.0
    %749 = vmatprep.subr.mxu0 0.0
    %750 = vmatpush2.msra.mxu0 0.0
    %751 = vmatprep.subr.mxu0 0.0
    %752 = vmatpush2.msra.mxu0 0.0
    %753 = vmatprep.subr.mxu0 0.0
    %754 = vmatpush2.msra.mxu0 0.0
    %755 = vmatprep.subr.mxu0 0.0
    %756 = vmatpush2.msra.mxu0 0.0
    %757 = vmatprep.subr.mxu0 0.0
    %758 = vmatpush2.msra.mxu0 0.0
    %759 = vmatprep.subr.mxu0 0.0
    %760 = vmatpush2.msra.mxu0 0.0
    %761 = vmatprep.subr.mxu0 0.0
    %762 = vmatpush2.msra.mxu0 0.0
    %763 = vmatprep.mubr.f32.mxu0 0.0
    %764 = vmatmul.mubr.f32.gmra.mxu0 %v684
    %v765 = vpop.f32.mrf.mxu0
    %v766 = vadd.f32 %v664, %v765
    %v767 = vpop.f32.mrf.mxu0
    %v768 = vadd.f32 %v664, %v767
    %769 = vmatprep.mubr.f32.mxu0 0.0
    %770 = vmatmul.mubr.f32.gmra.mxu0 %v687
    %v771 = vpop.f32.mrf.mxu0
    %v772 = vadd.f32 %v669, %v771
    %v773 = vpop.f32.mrf.mxu0
    %v774 = vadd.f32 %v669, %v773
    %775 = vmatprep.mubr.f32.mxu0 0.0
    %776 = vmatmul.mubr.f32.gmra.mxu0 %v690
    %v777 = vpop.f32.mrf.mxu0
    %v778 = vadd.f32 %v674, %v777
    %v779 = vpop.f32.mrf.mxu0
    %v780 = vadd.f32 %v674, %v779
    %781 = vmatprep.mubr.f32.mxu0 0.0
    %782 = vmatmul.mubr.f32.gmra.mxu0 %v693
    %v783 = vpop.f32.mrf.mxu0
    %v784 = vadd.f32 %v679, %v783
    %v785 = vpop.f32.mrf.mxu0
    %v786 = vadd.f32 %v679, %v785
    %787 = vdwg.mxu0
    %v788 = vmax.f32 %v766, 0.0
    %v789 = vmax.f32 %v768, 0.0
    %v790 = vmax.f32 %v772, 0.0
    %v791 = vmax.f32 %v774, 0.0
    %v792 = vmax.f32 %v778, 0.0
    %v793 = vmax.f32 %v780, 0.0
    %v794 = vmax.f32 %v784, 0.0
    %v795 = vmax.f32 %v786, 0.0
    %s796 = scalar_lea.vmem [#allocation2], 256
    %797 = vst [vmem:[%s796] sm:$0xff] %v788
    %798 = vst [vmem:[%s796 + $0x8] sm:$0xff] %v789
    %799 = vst [vmem:[%s796 + $0x10] sm:$0xff] %v790
    %800 = vst [vmem:[%s796 + $0x18] sm:$0xff] %v791
    %801 = vst [vmem:[%s796 + $0x20] sm:$0xff] %v792
    %802 = vst [vmem:[%s796 + $0x28] sm:$0xff] %v793
    %803 = vst [vmem:[%s796 + $0x30] sm:$0xff] %v794
    %804 = vst [vmem:[%s796 + $0x38] sm:$0xff] %v795
    %v805 = vld [vmem:[%s1] sm:$0xff]
    %v806 = vld [vmem:[%s1 + $0x8] sm:$0xff]
    %v807 = vld [vmem:[%s1 + $0x10] sm:$0xff]
    %v808 = vld [vmem:[%s1 + $0x18] sm:$0xff]
    %s809 = scalar_lea.vmem [#allocation3], 40
    %v810 = vld [vmem:[%s809] sm:$0xff]
    %v811 = vld [vmem:[%s2] sm:$0xff]
    %v812 = vld [vmem:[%s2 + $0x8] sm:$0xff]
    %v813 = vld [vmem:[%s2 + $0x10] sm:$0xff]
    %v814 = vld [vmem:[%s2 + $0x18] sm:$0xff]
    %816 = vset.pattern.permute.xlu0 0
    %817 = vperm.xlu0 %816, %v811
    %v818 = vpop.permute.xlu0 %817
    %821 = vset.pattern.permute.xlu0 0
    %822 = vperm.xlu0 %821, %v812
    %v823 = vpop.permute.xlu0 %822
    %826 = vset.pattern.permute.xlu0 0
    %827 = vperm.xlu0 %826, %v813
    %v828 = vpop.permute.xlu0 %827
    %831 = vset.pattern.permute.xlu0 0
    %832 = vperm.xlu0 %831, %v814
    %v833 = vpop.permute.xlu0 %832
    %v836 = vcombine.high %v810, %v810
    %v838 = vsel %vm66, %v805, 0
    %v841 = vsel %vm66, %v806, 0
    %v844 = vsel %vm66, %v807, 0
    %v847 = vsel %vm66, %v808, 0
    %v849 = vsel %vm79, %v810, 0
    %v851 = vsel %vm79, %v836, 0
    %853 = vmatprep.subr.mxu0 0.0
    %854 = vmatpush1.msra.mxu0 0.0
    %855 = vmatprep.subr.mxu0 0.0
    %856 = vmatpush1.msra.mxu0 0.0
    %857 = vmatprep.subr.mxu0 0.0
    %858 = vmatpush1.msra.mxu0 0.0
    %859 = vmatprep.subr.mxu0 0.0
    %860 = vmatpush1.msra.mxu0 0.0
    %861 = vmatprep.subr.mxu0 0.0
    %862 = vmatpush1.msra.mxu0 0.0
    %863 = vmatprep.subr.mxu0 0.0
    %864 = vmatpush1.msra.mxu0 0.0
    %865 = vmatprep.subr.mxu0 0.0
    %866 = vmatpush1.msra.mxu0 0.0
    %867 = vmatprep.subr.mxu0 0.0
    %868 = vmatpush1.msra.mxu0 0.0
    %869 = vmatprep.subr.mxu0 0.0
    %870 = vmatpush1.msra.mxu0 0.0
    %871 = vmatprep.subr.mxu0 0.0
    %872 = vmatpush1.msra.mxu0 0.0
    %873 = vmatprep.subr.mxu0 0.0
    %874 = vmatpush1.msra.mxu0 0.0
    %875 = vmatprep.subr.mxu0 0.0
    %876 = vmatpush1.msra.mxu0 0.0
    %877 = vmatprep.subr.mxu0 0.0
    %878 = vmatpush1.msra.mxu0 0.0
    %879 = vmatprep.subr.mxu0 0.0
    %880 = vmatpush1.msra.mxu0 0.0
    %881 = vmatprep.subr.mxu0 0.0
    %882 = vmatpush1.msra.mxu0 0.0
    %883 = vmatprep.subr.mxu0 %v851
    %884 = vmatpush1.msra.mxu0 %v849
    %885 = vmatprep.subr.mxu0 0.0
    %886 = vmatpush2.msra.mxu0 0.0
    %887 = vmatprep.subr.mxu0 0.0
    %888 = vmatpush2.msra.mxu0 0.0
    %889 = vmatprep.subr.mxu0 0.0
    %890 = vmatpush2.msra.mxu0 0.0
    %891 = vmatprep.subr.mxu0 0.0
    %892 = vmatpush2.msra.mxu0 0.0
    %893 = vmatprep.subr.mxu0 0.0
    %894 = vmatpush2.msra.mxu0 0.0
    %895 = vmatprep.subr.mxu0 0.0
    %896 = vmatpush2.msra.mxu0 0.0
    %897 = vmatprep.subr.mxu0 0.0
    %898 = vmatpush2.msra.mxu0 0.0
    %899 = vmatprep.subr.mxu0 0.0
    %900 = vmatpush2.msra.mxu0 0.0
    %901 = vmatprep.subr.mxu0 0.0
    %902 = vmatpush2.msra.mxu0 0.0
    %903 = vmatprep.subr.mxu0 0.0
    %904 = vmatpush2.msra.mxu0 0.0
    %905 = vmatprep.subr.mxu0 0.0
    %906 = vmatpush2.msra.mxu0 0.0
    %907 = vmatprep.subr.mxu0 0.0
    %908 = vmatpush2.msra.mxu0 0.0
    %909 = vmatprep.subr.mxu0 0.0
    %910 = vmatpush2.msra.mxu0 0.0
    %911 = vmatprep.subr.mxu0 0.0
    %912 = vmatpush2.msra.mxu0 0.0
    %913 = vmatprep.subr.mxu0 0.0
    %914 = vmatpush2.msra.mxu0 0.0
    %915 = vmatprep.subr.mxu0 0.0
    %916 = vmatpush2.msra.mxu0 0.0
    %917 = vmatprep.mubr.f32.mxu0 0.0
    %918 = vmatmul.mubr.f32.gmra.mxu0 %v838
    %v919 = vpop.f32.mrf.mxu0
    %v920 = vadd.f32 %v818, %v919
    %v921 = vpop.f32.mrf.mxu0
    %v922 = vadd.f32 %v818, %v921
    %923 = vmatprep.mubr.f32.mxu0 0.0
    %924 = vmatmul.mubr.f32.gmra.mxu0 %v841
    %v925 = vpop.f32.mrf.mxu0
    %v926 = vadd.f32 %v823, %v925
    %v927 = vpop.f32.mrf.mxu0
    %v928 = vadd.f32 %v823, %v927
    %929 = vmatprep.mubr.f32.mxu0 0.0
    %930 = vmatmul.mubr.f32.gmra.mxu0 %v844
    %v931 = vpop.f32.mrf.mxu0
    %v932 = vadd.f32 %v828, %v931
    %v933 = vpop.f32.mrf.mxu0
    %v934 = vadd.f32 %v828, %v933
    %935 = vmatprep.mubr.f32.mxu0 0.0
    %936 = vmatmul.mubr.f32.gmra.mxu0 %v847
    %v937 = vpop.f32.mrf.mxu0
    %v938 = vadd.f32 %v833, %v937
    %v939 = vpop.f32.mrf.mxu0
    %v940 = vadd.f32 %v833, %v939
    %941 = vdwg.mxu0
    %v942 = vmax.f32 %v920, 0.0
    %v943 = vmax.f32 %v922, 0.0
    %v944 = vmax.f32 %v926, 0.0
    %v945 = vmax.f32 %v928, 0.0
    %v946 = vmax.f32 %v932, 0.0
    %v947 = vmax.f32 %v934, 0.0
    %v948 = vmax.f32 %v938, 0.0
    %v949 = vmax.f32 %v940, 0.0
    %s950 = scalar_lea.vmem [#allocation2], 320
    %951 = vst [vmem:[%s950] sm:$0xff] %v942
    %952 = vst [vmem:[%s950 + $0x8] sm:$0xff] %v943
    %953 = vst [vmem:[%s950 + $0x10] sm:$0xff] %v944
    %954 = vst [vmem:[%s950 + $0x18] sm:$0xff] %v945
    %955 = vst [vmem:[%s950 + $0x20] sm:$0xff] %v946
    %956 = vst [vmem:[%s950 + $0x28] sm:$0xff] %v947
    %957 = vst [vmem:[%s950 + $0x30] sm:$0xff] %v948
    %958 = vst [vmem:[%s950 + $0x38] sm:$0xff] %v949
    %v959 = vld [vmem:[%s1] sm:$0xff]
    %v960 = vld [vmem:[%s1 + $0x8] sm:$0xff]
    %v961 = vld [vmem:[%s1 + $0x10] sm:$0xff]
    %v962 = vld [vmem:[%s1 + $0x18] sm:$0xff]
    %s963 = scalar_lea.vmem [#allocation3], 48
    %v964 = vld [vmem:[%s963] sm:$0xff]
    %v965 = vld [vmem:[%s2] sm:$0xff]
    %v966 = vld [vmem:[%s2 + $0x8] sm:$0xff]
    %v967 = vld [vmem:[%s2 + $0x10] sm:$0xff]
    %v968 = vld [vmem:[%s2 + $0x18] sm:$0xff]
    %970 = vset.pattern.permute.xlu0 0
    %971 = vperm.xlu0 %970, %v965
    %v972 = vpop.permute.xlu0 %971
    %975 = vset.pattern.permute.xlu0 0
    %976 = vperm.xlu0 %975, %v966
    %v977 = vpop.permute.xlu0 %976
    %980 = vset.pattern.permute.xlu0 0
    %981 = vperm.xlu0 %980, %v967
    %v982 = vpop.permute.xlu0 %981
    %985 = vset.pattern.permute.xlu0 0
    %986 = vperm.xlu0 %985, %v968
    %v987 = vpop.permute.xlu0 %986
    %v990 = vcombine.high %v964, %v964
    %v992 = vsel %vm66, %v959, 0
    %v995 = vsel %vm66, %v960, 0
    %v998 = vsel %vm66, %v961, 0
    %v1001 = vsel %vm66, %v962, 0
    %v1003 = vsel %vm79, %v964, 0
    %v1005 = vsel %vm79, %v990, 0
    %1007 = vmatprep.subr.mxu0 0.0
    %1008 = vmatpush1.msra.mxu0 0.0
    %1009 = vmatprep.subr.mxu0 0.0
    %1010 = vmatpush1.msra.mxu0 0.0
    %1011 = vmatprep.subr.mxu0 0.0
    %1012 = vmatpush1.msra.mxu0 0.0
    %1013 = vmatprep.subr.mxu0 0.0
    %1014 = vmatpush1.msra.mxu0 0.0
    %1015 = vmatprep.subr.mxu0 0.0
    %1016 = vmatpush1.msra.mxu0 0.0
    %1017 = vmatprep.subr.mxu0 0.0
    %1018 = vmatpush1.msra.mxu0 0.0
    %1019 = vmatprep.subr.mxu0 0.0
    %1020 = vmatpush1.msra.mxu0 0.0
    %1021 = vmatprep.subr.mxu0 0.0
    %1022 = vmatpush1.msra.mxu0 0.0
    %1023 = vmatprep.subr.mxu0 0.0
    %1024 = vmatpush1.msra.mxu0 0.0
    %1025 = vmatprep.subr.mxu0 0.0
    %1026 = vmatpush1.msra.mxu0 0.0
    %1027 = vmatprep.subr.mxu0 0.0
    %1028 = vmatpush1.msra.mxu0 0.0
    %1029 = vmatprep.subr.mxu0 0.0
    %1030 = vmatpush1.msra.mxu0 0.0
    %1031 = vmatprep.subr.mxu0 0.0
    %1032 = vmatpush1.msra.mxu0 0.0
    %1033 = vmatprep.subr.mxu0 0.0
    %1034 = vmatpush1.msra.mxu0 0.0
    %1035 = vmatprep.subr.mxu0 0.0
    %1036 = vmatpush1.msra.mxu0 0.0
    %1037 = vmatprep.subr.mxu0 %v1005
    %1038 = vmatpush1.msra.mxu0 %v1003
    %1039 = vmatprep.subr.mxu0 0.0
    %1040 = vmatpush2.msra.mxu0 0.0
    %1041 = vmatprep.subr.mxu0 0.0
    %1042 = vmatpush2.msra.mxu0 0.0
    %1043 = vmatprep.subr.mxu0 0.0
    %1044 = vmatpush2.msra.mxu0 0.0
    %1045 = vmatprep.subr.mxu0 0.0
    %1046 = vmatpush2.msra.mxu0 0.0
    %1047 = vmatprep.subr.mxu0 0.0
    %1048 = vmatpush2.msra.mxu0 0.0
    %1049 = vmatprep.subr.mxu0 0.0
    %1050 = vmatpush2.msra.mxu0 0.0
    %1051 = vmatprep.subr.mxu0 0.0
    %1052 = vmatpush2.msra.mxu0 0.0
    %1053 = vmatprep.subr.mxu0 0.0
    %1054 = vmatpush2.msra.mxu0 0.0
    %1055 = vmatprep.subr.mxu0 0.0
    %1056 = vmatpush2.msra.mxu0 0.0
    %1057 = vmatprep.subr.mxu0 0.0
    %1058 = vmatpush2.msra.mxu0 0.0
    %1059 = vmatprep.subr.mxu0 0.0
    %1060 = vmatpush2.msra.mxu0 0.0
    %1061 = vmatprep.subr.mxu0 0.0
    %1062 = vmatpush2.msra.mxu0 0.0
    %1063 = vmatprep.subr.mxu0 0.0
    %1064 = vmatpush2.msra.mxu0 0.0
    %1065 = vmatprep.subr.mxu0 0.0
    %1066 = vmatpush2.msra.mxu0 0.0
    %1067 = vmatprep.subr.mxu0 0.0
    %1068 = vmatpush2.msra.mxu0 0.0
    %1069 = vmatprep.subr.mxu0 0.0
    %1070 = vmatpush2.msra.mxu0 0.0
    %1071 = vmatprep.mubr.f32.mxu0 0.0
    %1072 = vmatmul.mubr.f32.gmra.mxu0 %v992
    %v1073 = vpop.f32.mrf.mxu0
    %v1074 = vadd.f32 %v972, %v1073
    %v1075 = vpop.f32.mrf.mxu0
    %v1076 = vadd.f32 %v972, %v1075
    %1077 = vmatprep.mubr.f32.mxu0 0.0
    %1078 = vmatmul.mubr.f32.gmra.mxu0 %v995
    %v1079 = vpop.f32.mrf.mxu0
    %v1080 = vadd.f32 %v977, %v1079
    %v1081 = vpop.f32.mrf.mxu0
    %v1082 = vadd.f32 %v977, %v1081
    %1083 = vmatprep.mubr.f32.mxu0 0.0
    %1084 = vmatmul.mubr.f32.gmra.mxu0 %v998
    %v1085 = vpop.f32.mrf.mxu0
    %v1086 = vadd.f32 %v982, %v1085
    %v1087 = vpop.f32.mrf.mxu0
    %v1088 = vadd.f32 %v982, %v1087
    %1089 = vmatprep.mubr.f32.mxu0 0.0
    %1090 = vmatmul.mubr.f32.gmra.mxu0 %v1001
    %v1091 = vpop.f32.mrf.mxu0
    %v1092 = vadd.f32 %v987, %v1091
    %v1093 = vpop.f32.mrf.mxu0
    %v1094 = vadd.f32 %v987, %v1093
    %1095 = vdwg.mxu0
    %v1096 = vmax.f32 %v1074, 0.0
    %v1097 = vmax.f32 %v1076, 0.0
    %v1098 = vmax.f32 %v1080, 0.0
    %v1099 = vmax.f32 %v1082, 0.0
    %v1100 = vmax.f32 %v1086, 0.0
    %v1101 = vmax.f32 %v1088, 0.0
    %v1102 = vmax.f32 %v1092, 0.0
    %v1103 = vmax.f32 %v1094, 0.0
    %s1104 = scalar_lea.vmem [#allocation2], 384
    %1105 = vst [vmem:[%s1104] sm:$0xff] %v1096
    %1106 = vst [vmem:[%s1104 + $0x8] sm:$0xff] %v1097
    %1107 = vst [vmem:[%s1104 + $0x10] sm:$0xff] %v1098
    %1108 = vst [vmem:[%s1104 + $0x18] sm:$0xff] %v1099
    %1109 = vst [vmem:[%s1104 + $0x20] sm:$0xff] %v1100
    %1110 = vst [vmem:[%s1104 + $0x28] sm:$0xff] %v1101
    %1111 = vst [vmem:[%s1104 + $0x30] sm:$0xff] %v1102
    %1112 = vst [vmem:[%s1104 + $0x38] sm:$0xff] %v1103
    %v1113 = vld [vmem:[%s1] sm:$0xff]
    %v1114 = vld [vmem:[%s1 + $0x8] sm:$0xff]
    %v1115 = vld [vmem:[%s1 + $0x10] sm:$0xff]
    %v1116 = vld [vmem:[%s1 + $0x18] sm:$0xff]
    %s1117 = scalar_lea.vmem [#allocation3], 56
    %v1118 = vld [vmem:[%s1117] sm:$0xff]
    %v1119 = vld [vmem:[%s2] sm:$0xff]
    %v1120 = vld [vmem:[%s2 + $0x8] sm:$0xff]
    %v1121 = vld [vmem:[%s2 + $0x10] sm:$0xff]
    %v1122 = vld [vmem:[%s2 + $0x18] sm:$0xff]
    %1124 = vset.pattern.permute.xlu0 0
    %1125 = vperm.xlu0 %1124, %v1119
    %v1126 = vpop.permute.xlu0 %1125
    %1129 = vset.pattern.permute.xlu0 0
    %1130 = vperm.xlu0 %1129, %v1120
    %v1131 = vpop.permute.xlu0 %1130
    %1134 = vset.pattern.permute.xlu0 0
    %1135 = vperm.xlu0 %1134, %v1121
    %v1136 = vpop.permute.xlu0 %1135
    %1139 = vset.pattern.permute.xlu0 0
    %1140 = vperm.xlu0 %1139, %v1122
    %v1141 = vpop.permute.xlu0 %1140
    %v1144 = vcombine.high %v1118, %v1118
    %v1146 = vsel %vm66, %v1113, 0
    %v1149 = vsel %vm66, %v1114, 0
    %v1152 = vsel %vm66, %v1115, 0
    %v1155 = vsel %vm66, %v1116, 0
    %v1157 = vsel %vm79, %v1118, 0
    %v1159 = vsel %vm79, %v1144, 0
    %1161 = vmatprep.subr.mxu0 0.0
    %1162 = vmatpush1.msra.mxu0 0.0
    %1163 = vmatprep.subr.mxu0 0.0
    %1164 = vmatpush1.msra.mxu0 0.0
    %1165 = vmatprep.subr.mxu0 0.0
    %1166 = vmatpush1.msra.mxu0 0.0
    %1167 = vmatprep.subr.mxu0 0.0
    %1168 = vmatpush1.msra.mxu0 0.0
    %1169 = vmatprep.subr.mxu0 0.0
    %1170 = vmatpush1.msra.mxu0 0.0
    %1171 = vmatprep.subr.mxu0 0.0
    %1172 = vmatpush1.msra.mxu0 0.0
    %1173 = vmatprep.subr.mxu0 0.0
    %1174 = vmatpush1.msra.mxu0 0.0
    %1175 = vmatprep.subr.mxu0 0.0
    %1176 = vmatpush1.msra.mxu0 0.0
    %1177 = vmatprep.subr.mxu0 0.0
    %1178 = vmatpush1.msra.mxu0 0.0
    %1179 = vmatprep.subr.mxu0 0.0
    %1180 = vmatpush1.msra.mxu0 0.0
    %1181 = vmatprep.subr.mxu0 0.0
    %1182 = vmatpush1.msra.mxu0 0.0
    %1183 = vmatprep.subr.mxu0 0.0
    %1184 = vmatpush1.msra.mxu0 0.0
    %1185 = vmatprep.subr.mxu0 0.0
    %1186 = vmatpush1.msra.mxu0 0.0
    %1187 = vmatprep.subr.mxu0 0.0
    %1188 = vmatpush1.msra.mxu0 0.0
    %1189 = vmatprep.subr.mxu0 0.0
    %1190 = vmatpush1.msra.mxu0 0.0
    %1191 = vmatprep.subr.mxu0 %v1159
    %1192 = vmatpush1.msra.mxu0 %v1157
    %1193 = vmatprep.subr.mxu0 0.0
    %1194 = vmatpush2.msra.mxu0 0.0
    %1195 = vmatprep.subr.mxu0 0.0
    %1196 = vmatpush2.msra.mxu0 0.0
    %1197 = vmatprep.subr.mxu0 0.0
    %1198 = vmatpush2.msra.mxu0 0.0
    %1199 = vmatprep.subr.mxu0 0.0
    %1200 = vmatpush2.msra.mxu0 0.0
    %1201 = vmatprep.subr.mxu0 0.0
    %1202 = vmatpush2.msra.mxu0 0.0
    %1203 = vmatprep.subr.mxu0 0.0
    %1204 = vmatpush2.msra.mxu0 0.0
    %1205 = vmatprep.subr.mxu0 0.0
    %1206 = vmatpush2.msra.mxu0 0.0
    %1207 = vmatprep.subr.mxu0 0.0
    %1208 = vmatpush2.msra.mxu0 0.0
    %1209 = vmatprep.subr.mxu0 0.0
    %1210 = vmatpush2.msra.mxu0 0.0
    %1211 = vmatprep.subr.mxu0 0.0
    %1212 = vmatpush2.msra.mxu0 0.0
    %1213 = vmatprep.subr.mxu0 0.0
    %1214 = vmatpush2.msra.mxu0 0.0
    %1215 = vmatprep.subr.mxu0 0.0
    %1216 = vmatpush2.msra.mxu0 0.0
    %1217 = vmatprep.subr.mxu0 0.0
    %1218 = vmatpush2.msra.mxu0 0.0
    %1219 = vmatprep.subr.mxu0 0.0
    %1220 = vmatpush2.msra.mxu0 0.0
    %1221 = vmatprep.subr.mxu0 0.0
    %1222 = vmatpush2.msra.mxu0 0.0
    %1223 = vmatprep.subr.mxu0 0.0
    %1224 = vmatpush2.msra.mxu0 0.0
    %1225 = vmatprep.mubr.f32.mxu0 0.0
    %1226 = vmatmul.mubr.f32.gmra.mxu0 %v1146
    %v1227 = vpop.f32.mrf.mxu0
    %v1228 = vadd.f32 %v1126, %v1227
    %v1229 = vpop.f32.mrf.mxu0
    %v1230 = vadd.f32 %v1126, %v1229
    %1231 = vmatprep.mubr.f32.mxu0 0.0
    %1232 = vmatmul.mubr.f32.gmra.mxu0 %v1149
    %v1233 = vpop.f32.mrf.mxu0
    %v1234 = vadd.f32 %v1131, %v1233
    %v1235 = vpop.f32.mrf.mxu0
    %v1236 = vadd.f32 %v1131, %v1235
    %1237 = vmatprep.mubr.f32.mxu0 0.0
    %1238 = vmatmul.mubr.f32.gmra.mxu0 %v1152
    %v1239 = vpop.f32.mrf.mxu0
    %v1240 = vadd.f32 %v1136, %v1239
    %v1241 = vpop.f32.mrf.mxu0
    %v1242 = vadd.f32 %v1136, %v1241
    %1243 = vmatprep.mubr.f32.mxu0 0.0
    %1244 = vmatmul.mubr.f32.gmra.mxu0 %v1155
    %v1245 = vpop.f32.mrf.mxu0
    %v1246 = vadd.f32 %v1141, %v1245
    %v1247 = vpop.f32.mrf.mxu0
    %v1248 = vadd.f32 %v1141, %v1247
    %1249 = vdwg.mxu0
    %v1250 = vmax.f32 %v1228, 0.0
    %v1251 = vmax.f32 %v1230, 0.0
    %v1252 = vmax.f32 %v1234, 0.0
    %v1253 = vmax.f32 %v1236, 0.0
    %v1254 = vmax.f32 %v1240, 0.0
    %v1255 = vmax.f32 %v1242, 0.0
    %v1256 = vmax.f32 %v1246, 0.0
    %v1257 = vmax.f32 %v1248, 0.0
    %s1258 = scalar_lea.vmem [#allocation2], 448
    %1259 = vst [vmem:[%s1258] sm:$0xff] %v1250
    %1260 = vst [vmem:[%s1258 + $0x8] sm:$0xff] %v1251
    %1261 = vst [vmem:[%s1258 + $0x10] sm:$0xff] %v1252
    %1262 = vst [vmem:[%s1258 + $0x18] sm:$0xff] %v1253
    %1263 = vst [vmem:[%s1258 + $0x20] sm:$0xff] %v1254
    %1264 = vst [vmem:[%s1258 + $0x28] sm:$0xff] %v1255
    %1265 = vst [vmem:[%s1258 + $0x30] sm:$0xff] %v1256
    %1266 = vst [vmem:[%s1258 + $0x38] sm:$0xff] %v1257
    %v1267 = vld [vmem:[%s3] sm:$0xff]
    %v1268 = vld [vmem:[%s3 + $0x8] sm:$0xff]
    %v1269 = vld [vmem:[%s3 + $0x10] sm:$0xff]
    %v1270 = vld [vmem:[%s3 + $0x18] sm:$0xff]
    %v1271 = vld [vmem:[%s1258] sm:$0xff]
    %v1272 = vld [vmem:[%s1258 + $0x8] sm:$0xff]
    %v1273 = vld [vmem:[%s1258 + $0x10] sm:$0xff]
    %v1274 = vld [vmem:[%s1258 + $0x18] sm:$0xff]
    %v1275 = vld [vmem:[%s1258 + $0x20] sm:$0xff]
    %v1276 = vld [vmem:[%s1258 + $0x28] sm:$0xff]
    %v1277 = vld [vmem:[%s1258 + $0x30] sm:$0xff]
    %v1278 = vld [vmem:[%s1258 + $0x38] sm:$0xff]
    %s1279 = scalar_lea.vmem %s3, 32
    %v1280 = vld [vmem:[%s1279] sm:$0xff]
    %v1281 = vld [vmem:[%s1279 + $0x8] sm:$0xff]
    %v1282 = vld [vmem:[%s1279 + $0x10] sm:$0xff]
    %v1283 = vld [vmem:[%s1279 + $0x18] sm:$0xff]
    %v1284 = vld [vmem:[#allocation2] sm:$0xff]
    %v1285 = vld [vmem:[#allocation2 + $0x8] sm:$0xff]
    %v1286 = vld [vmem:[#allocation2 + $0x10] sm:$0xff]
    %v1287 = vld [vmem:[#allocation2 + $0x18] sm:$0xff]
    %v1288 = vld [vmem:[#allocation2 + $0x20] sm:$0xff]
    %v1289 = vld [vmem:[#allocation2 + $0x28] sm:$0xff]
    %v1290 = vld [vmem:[#allocation2 + $0x30] sm:$0xff]
    %v1291 = vld [vmem:[#allocation2 + $0x38] sm:$0xff]
    %vm1292 = vcmask 261120
    %v1294 = vsel %vm1292, %v1280, 0
    %v1297 = vsel %vm1292, %v1281, 0
    %v1300 = vsel %vm1292, %v1282, 0
    %v1303 = vsel %vm1292, %v1283, 0
    %1305 = vmatprep.subr.mxu0 0.0
    %1306 = vmatpush1.msra.mxu0 0.0
    %1307 = vmatprep.subr.mxu0 0.0
    %1308 = vmatpush1.msra.mxu0 0.0
    %1309 = vmatprep.subr.mxu0 0.0
    %1310 = vmatpush1.msra.mxu0 0.0
    %1311 = vmatprep.subr.mxu0 0.0
    %1312 = vmatpush1.msra.mxu0 0.0
    %1313 = vmatprep.subr.mxu0 0.0
    %1314 = vmatpush1.msra.mxu0 0.0
    %1315 = vmatprep.subr.mxu0 0.0
    %1316 = vmatpush1.msra.mxu0 0.0
    %1317 = vmatprep.subr.mxu0 0.0
    %1318 = vmatpush1.msra.mxu0 0.0
    %1319 = vmatprep.subr.mxu0 0.0
    %1320 = vmatpush1.msra.mxu0 0.0
    %1321 = vmatprep.subr.mxu0 0.0
    %1322 = vmatpush1.msra.mxu0 0.0
    %1323 = vmatprep.subr.mxu0 0.0
    %1324 = vmatpush1.msra.mxu0 0.0
    %1325 = vmatprep.subr.mxu0 0.0
    %1326 = vmatpush1.msra.mxu0 0.0
    %1327 = vmatprep.subr.mxu0 0.0
    %1328 = vmatpush1.msra.mxu0 0.0
    %1329 = vmatprep.subr.mxu0 %v1291
    %1330 = vmatpush1.msra.mxu0 %v1290
    %1331 = vmatprep.subr.mxu0 %v1289
    %1332 = vmatpush1.msra.mxu0 %v1288
    %1333 = vmatprep.subr.mxu0 %v1287
    %1334 = vmatpush1.msra.mxu0 %v1286
    %1335 = vmatprep.subr.mxu0 %v1285
    %1336 = vmatpush1.msra.mxu0 %v1284
    %1337 = vmatprep.subr.mxu0 0.0
    %1338 = vmatpush2.msra.mxu0 0.0
    %1339 = vmatprep.subr.mxu0 0.0
    %1340 = vmatpush2.msra.mxu0 0.0
    %1341 = vmatprep.subr.mxu0 0.0
    %1342 = vmatpush2.msra.mxu0 0.0
    %1343 = vmatprep.subr.mxu0 0.0
    %1344 = vmatpush2.msra.mxu0 0.0
    %1345 = vmatprep.subr.mxu0 0.0
    %1346 = vmatpush2.msra.mxu0 0.0
    %1347 = vmatprep.subr.mxu0 0.0
    %1348 = vmatpush2.msra.mxu0 0.0
    %1349 = vmatprep.subr.mxu0 0.0
    %1350 = vmatpush2.msra.mxu0 0.0
    %1351 = vmatprep.subr.mxu0 0.0
    %1352 = vmatpush2.msra.mxu0 0.0
    %1353 = vmatprep.subr.mxu0 0.0
    %1354 = vmatpush2.msra.mxu0 0.0
    %1355 = vmatprep.subr.mxu0 0.0
    %1356 = vmatpush2.msra.mxu0 0.0
    %1357 = vmatprep.subr.mxu0 0.0
    %1358 = vmatpush2.msra.mxu0 0.0
    %1359 = vmatprep.subr.mxu0 0.0
    %1360 = vmatpush2.msra.mxu0 0.0
    %1361 = vmatprep.subr.mxu0 0.0
    %1362 = vmatpush2.msra.mxu0 0.0
    %1363 = vmatprep.subr.mxu0 0.0
    %1364 = vmatpush2.msra.mxu0 0.0
    %1365 = vmatprep.subr.mxu0 0.0
    %1366 = vmatpush2.msra.mxu0 0.0
    %1367 = vmatprep.subr.mxu0 0.0
    %1368 = vmatpush2.msra.mxu0 0.0
    %1369 = vmatprep.mubr.f32.mxu0 0.0
    %1370 = vmatmul.mubr.f32.gmra.mxu0 %v1294
    %v1371 = vpop.f32.mrf.mxu0
    %v1372 = vadd.f32 0.0, %v1371
    %v1373 = vpop.f32.mrf.mxu0
    %v1374 = vadd.f32 0.0, %v1373
    %1375 = vmatprep.mubr.f32.mxu0 0.0
    %1376 = vmatmul.mubr.f32.gmra.mxu0 %v1297
    %v1377 = vpop.f32.mrf.mxu0
    %v1378 = vadd.f32 0.0, %v1377
    %v1379 = vpop.f32.mrf.mxu0
    %v1380 = vadd.f32 0.0, %v1379
    %1381 = vmatprep.mubr.f32.mxu0 0.0
    %1382 = vmatmul.mubr.f32.gmra.mxu0 %v1300
    %v1383 = vpop.f32.mrf.mxu0
    %v1384 = vadd.f32 0.0, %v1383
    %v1385 = vpop.f32.mrf.mxu0
    %v1386 = vadd.f32 0.0, %v1385
    %1387 = vmatprep.mubr.f32.mxu0 0.0
    %1388 = vmatmul.mubr.f32.gmra.mxu0 %v1303
    %v1389 = vpop.f32.mrf.mxu0
    %v1390 = vadd.f32 0.0, %v1389
    %v1391 = vpop.f32.mrf.mxu0
    %v1392 = vadd.f32 0.0, %v1391
    %1393 = vdwg.mxu0
    %v1395 = vsel %vm1292, %v1267, 0
    %v1398 = vsel %vm1292, %v1268, 0
    %v1401 = vsel %vm1292, %v1269, 0
    %v1404 = vsel %vm1292, %v1270, 0
    %1406 = vmatprep.subr.mxu0 0.0
    %1407 = vmatpush1.msra.mxu0 0.0
    %1408 = vmatprep.subr.mxu0 0.0
    %1409 = vmatpush1.msra.mxu0 0.0
    %1410 = vmatprep.subr.mxu0 0.0
    %1411 = vmatpush1.msra.mxu0 0.0
    %1412 = vmatprep.subr.mxu0 0.0
    %1413 = vmatpush1.msra.mxu0 0.0
    %1414 = vmatprep.subr.mxu0 0.0
    %1415 = vmatpush1.msra.mxu0 0.0
    %1416 = vmatprep.subr.mxu0 0.0
    %1417 = vmatpush1.msra.mxu0 0.0
    %1418 = vmatprep.subr.mxu0 0.0
    %1419 = vmatpush1.msra.mxu0 0.0
    %1420 = vmatprep.subr.mxu0 0.0
    %1421 = vmatpush1.msra.mxu0 0.0
    %1422 = vmatprep.subr.mxu0 0.0
    %1423 = vmatpush1.msra.mxu0 0.0
    %1424 = vmatprep.subr.mxu0 0.0
    %1425 = vmatpush1.msra.mxu0 0.0
    %1426 = vmatprep.subr.mxu0 0.0
    %1427 = vmatpush1.msra.mxu0 0.0
    %1428 = vmatprep.subr.mxu0 0.0
    %1429 = vmatpush1.msra.mxu0 0.0
    %1430 = vmatprep.subr.mxu0 %v1278
    %1431 = vmatpush1.msra.mxu0 %v1277
    %1432 = vmatprep.subr.mxu0 %v1276
    %1433 = vmatpush1.msra.mxu0 %v1275
    %1434 = vmatprep.subr.mxu0 %v1274
    %1435 = vmatpush1.msra.mxu0 %v1273
    %1436 = vmatprep.subr.mxu0 %v1272
    %1437 = vmatpush1.msra.mxu0 %v1271
    %1438 = vmatprep.subr.mxu0 0.0
    %1439 = vmatpush2.msra.mxu0 0.0
    %1440 = vmatprep.subr.mxu0 0.0
    %1441 = vmatpush2.msra.mxu0 0.0
    %1442 = vmatprep.subr.mxu0 0.0
    %1443 = vmatpush2.msra.mxu0 0.0
    %1444 = vmatprep.subr.mxu0 0.0
    %1445 = vmatpush2.msra.mxu0 0.0
    %1446 = vmatprep.subr.mxu0 0.0
    %1447 = vmatpush2.msra.mxu0 0.0
    %1448 = vmatprep.subr.mxu0 0.0
    %1449 = vmatpush2.msra.mxu0 0.0
    %1450 = vmatprep.subr.mxu0 0.0
    %1451 = vmatpush2.msra.mxu0 0.0
    %1452 = vmatprep.subr.mxu0 0.0
    %1453 = vmatpush2.msra.mxu0 0.0
    %1454 = vmatprep.subr.mxu0 0.0
    %1455 = vmatpush2.msra.mxu0 0.0
    %1456 = vmatprep.subr.mxu0 0.0
    %1457 = vmatpush2.msra.mxu0 0.0
    %1458 = vmatprep.subr.mxu0 0.0
    %1459 = vmatpush2.msra.mxu0 0.0
    %1460 = vmatprep.subr.mxu0 0.0
    %1461 = vmatpush2.msra.mxu0 0.0
    %1462 = vmatprep.subr.mxu0 0.0
    %1463 = vmatpush2.msra.mxu0 0.0
    %1464 = vmatprep.subr.mxu0 0.0
    %1465 = vmatpush2.msra.mxu0 0.0
    %1466 = vmatprep.subr.mxu0 0.0
    %1467 = vmatpush2.msra.mxu0 0.0
    %1468 = vmatprep.subr.mxu0 0.0
    %1469 = vmatpush2.msra.mxu0 0.0
    %1470 = vmatprep.mubr.f32.mxu0 0.0
    %1471 = vmatmul.mubr.f32.gmra.mxu0 %v1395
    %v1472 = vpop.f32.mrf.mxu0
    %v1473 = vadd.f32 %v1372, %v1472
    %v1474 = vpop.f32.mrf.mxu0
    %v1475 = vadd.f32 %v1374, %v1474
    %1476 = vmatprep.mubr.f32.mxu0 0.0
    %1477 = vmatmul.mubr.f32.gmra.mxu0 %v1398
    %v1478 = vpop.f32.mrf.mxu0
    %v1479 = vadd.f32 %v1378, %v1478
    %v1480 = vpop.f32.mrf.mxu0
    %v1481 = vadd.f32 %v1380, %v1480
    %1482 = vmatprep.mubr.f32.mxu0 0.0
    %1483 = vmatmul.mubr.f32.gmra.mxu0 %v1401
    %v1484 = vpop.f32.mrf.mxu0
    %v1485 = vadd.f32 %v1384, %v1484
    %v1486 = vpop.f32.mrf.mxu0
    %v1487 = vadd.f32 %v1386, %v1486
    %1488 = vmatprep.mubr.f32.mxu0 0.0
    %1489 = vmatmul.mubr.f32.gmra.mxu0 %v1404
    %v1490 = vpop.f32.mrf.mxu0
    %v1491 = vadd.f32 %v1390, %v1490
    %v1492 = vpop.f32.mrf.mxu0
    %v1493 = vadd.f32 %v1392, %v1492
    %1494 = vdwg.mxu0
    %s1495 = scalar_lea.vmem %s3, 64
    %v1496 = vld [vmem:[%s1495] sm:$0xff]
    %v1497 = vld [vmem:[%s1495 + $0x8] sm:$0xff]
    %v1498 = vld [vmem:[%s1495 + $0x10] sm:$0xff]
    %v1499 = vld [vmem:[%s1495 + $0x18] sm:$0xff]
    %v1500 = vld [vmem:[%s334] sm:$0xff]
    %v1501 = vld [vmem:[%s334 + $0x8] sm:$0xff]
    %v1502 = vld [vmem:[%s334 + $0x10] sm:$0xff]
    %v1503 = vld [vmem:[%s334 + $0x18] sm:$0xff]
    %v1504 = vld [vmem:[%s334 + $0x20] sm:$0xff]
    %v1505 = vld [vmem:[%s334 + $0x28] sm:$0xff]
    %v1506 = vld [vmem:[%s334 + $0x30] sm:$0xff]
    %v1507 = vld [vmem:[%s334 + $0x38] sm:$0xff]
    %v1509 = vsel %vm1292, %v1496, 0
    %v1512 = vsel %vm1292, %v1497, 0
    %v1515 = vsel %vm1292, %v1498, 0
    %v1518 = vsel %vm1292, %v1499, 0
    %1520 = vmatprep.subr.mxu0 0.0
    %1521 = vmatpush1.msra.mxu0 0.0
    %1522 = vmatprep.subr.mxu0 0.0
    %1523 = vmatpush1.msra.mxu0 0.0
    %1524 = vmatprep.subr.mxu0 0.0
    %1525 = vmatpush1.msra.mxu0 0.0
    %1526 = vmatprep.subr.mxu0 0.0
    %1527 = vmatpush1.msra.mxu0 0.0
    %1528 = vmatprep.subr.mxu0 0.0
    %1529 = vmatpush1.msra.mxu0 0.0
    %1530 = vmatprep.subr.mxu0 0.0
    %1531 = vmatpush1.msra.mxu0 0.0
    %1532 = vmatprep.subr.mxu0 0.0
    %1533 = vmatpush1.msra.mxu0 0.0
    %1534 = vmatprep.subr.mxu0 0.0
    %1535 = vmatpush1.msra.mxu0 0.0
    %1536 = vmatprep.subr.mxu0 0.0
    %1537 = vmatpush1.msra.mxu0 0.0
    %1538 = vmatprep.subr.mxu0 0.0
    %1539 = vmatpush1.msra.mxu0 0.0
    %1540 = vmatprep.subr.mxu0 0.0
    %1541 = vmatpush1.msra.mxu0 0.0
    %1542 = vmatprep.subr.mxu0 0.0
    %1543 = vmatpush1.msra.mxu0 0.0
    %1544 = vmatprep.subr.mxu0 %v1507
    %1545 = vmatpush1.msra.mxu0 %v1506
    %1546 = vmatprep.subr.mxu0 %v1505
    %1547 = vmatpush1.msra.mxu0 %v1504
    %1548 = vmatprep.subr.mxu0 %v1503
    %1549 = vmatpush1.msra.mxu0 %v1502
    %1550 = vmatprep.subr.mxu0 %v1501
    %1551 = vmatpush1.msra.mxu0 %v1500
    %1552 = vmatprep.subr.mxu0 0.0
    %1553 = vmatpush2.msra.mxu0 0.0
    %1554 = vmatprep.subr.mxu0 0.0
    %1555 = vmatpush2.msra.mxu0 0.0
    %1556 = vmatprep.subr.mxu0 0.0
    %1557 = vmatpush2.msra.mxu0 0.0
    %1558 = vmatprep.subr.mxu0 0.0
    %1559 = vmatpush2.msra.mxu0 0.0
    %1560 = vmatprep.subr.mxu0 0.0
    %1561 = vmatpush2.msra.mxu0 0.0
    %1562 = vmatprep.subr.mxu0 0.0
    %1563 = vmatpush2.msra.mxu0 0.0
    %1564 = vmatprep.subr.mxu0 0.0
    %1565 = vmatpush2.msra.mxu0 0.0
    %1566 = vmatprep.subr.mxu0 0.0
    %1567 = vmatpush2.msra.mxu0 0.0
    %1568 = vmatprep.subr.mxu0 0.0
    %1569 = vmatpush2.msra.mxu0 0.0
    %1570 = vmatprep.subr.mxu0 0.0
    %1571 = vmatpush2.msra.mxu0 0.0
    %1572 = vmatprep.subr.mxu0 0.0
    %1573 = vmatpush2.msra.mxu0 0.0
    %1574 = vmatprep.subr.mxu0 0.0
    %1575 = vmatpush2.msra.mxu0 0.0
    %1576 = vmatprep.subr.mxu0 0.0
    %1577 = vmatpush2.msra.mxu0 0.0
    %1578 = vmatprep.subr.mxu0 0.0
    %1579 = vmatpush2.msra.mxu0 0.0
    %1580 = vmatprep.subr.mxu0 0.0
    %1581 = vmatpush2.msra.mxu0 0.0
    %1582 = vmatprep.subr.mxu0 0.0
    %1583 = vmatpush2.msra.mxu0 0.0
    %1584 = vmatprep.mubr.f32.mxu0 0.0
    %1585 = vmatmul.mubr.f32.gmra.mxu0 %v1509
    %v1586 = vpop.f32.mrf.mxu0
    %v1587 = vadd.f32 0.0, %v1586
    %v1588 = vpop.f32.mrf.mxu0
    %v1589 = vadd.f32 0.0, %v1588
    %1590 = vmatprep.mubr.f32.mxu0 0.0
    %1591 = vmatmul.mubr.f32.gmra.mxu0 %v1512
    %v1592 = vpop.f32.mrf.mxu0
    %v1593 = vadd.f32 0.0, %v1592
    %v1594 = vpop.f32.mrf.mxu0
    %v1595 = vadd.f32 0.0, %v1594
    %1596 = vmatprep.mubr.f32.mxu0 0.0
    %1597 = vmatmul.mubr.f32.gmra.mxu0 %v1515
    %v1598 = vpop.f32.mrf.mxu0
    %v1599 = vadd.f32 0.0, %v1598
    %v1600 = vpop.f32.mrf.mxu0
    %v1601 = vadd.f32 0.0, %v1600
    %1602 = vmatprep.mubr.f32.mxu0 0.0
    %1603 = vmatmul.mubr.f32.gmra.mxu0 %v1518
    %v1604 = vpop.f32.mrf.mxu0
    %v1605 = vadd.f32 0.0, %v1604
    %v1606 = vpop.f32.mrf.mxu0
    %v1607 = vadd.f32 0.0, %v1606
    %1608 = vdwg.mxu0
    %v1609 = vadd.f32 %v1473, %v1587
    %v1610 = vadd.f32 %v1475, %v1589
    %v1611 = vadd.f32 %v1479, %v1593
    %v1612 = vadd.f32 %v1481, %v1595
    %v1613 = vadd.f32 %v1485, %v1599
    %v1614 = vadd.f32 %v1487, %v1601
    %v1615 = vadd.f32 %v1491, %v1605
    %v1616 = vadd.f32 %v1493, %v1607
    %v1617 = vld [vmem:[%s4] sm:$0xff]
    %v1618 = vld [vmem:[%s4 + $0x8] sm:$0xff]
    %v1619 = vld [vmem:[%s4 + $0x10] sm:$0xff]
    %v1620 = vld [vmem:[%s4 + $0x18] sm:$0xff]
    %1622 = vset.pattern.permute.xlu0 0
    %1623 = vperm.xlu0 %1622, %v1617
    %v1624 = vpop.permute.xlu0 %1623
    %1627 = vset.pattern.permute.xlu0 0
    %1628 = vperm.xlu0 %1627, %v1618
    %v1629 = vpop.permute.xlu0 %1628
    %1632 = vset.pattern.permute.xlu0 0
    %1633 = vperm.xlu0 %1632, %v1619
    %v1634 = vpop.permute.xlu0 %1633
    %1637 = vset.pattern.permute.xlu0 0
    %1638 = vperm.xlu0 %1637, %v1620
    %v1639 = vpop.permute.xlu0 %1638
    %v1641 = vadd.f32 %v1609, %v1624
    %v1642 = vadd.f32 %v1610, %v1624
    %v1643 = vadd.f32 %v1611, %v1629
    %v1644 = vadd.f32 %v1612, %v1629
    %v1645 = vadd.f32 %v1613, %v1634
    %v1646 = vadd.f32 %v1614, %v1634
    %v1647 = vadd.f32 %v1615, %v1639
    %v1648 = vadd.f32 %v1616, %v1639
    %1649 = vst [vmem:[#allocation6] sm:$0xff] %v1641
    %1650 = vst [vmem:[#allocation6 + $0x8] sm:$0xff] %v1642
    %1651 = vst [vmem:[#allocation6 + $0x10] sm:$0xff] %v1643
    %1652 = vst [vmem:[#allocation6 + $0x18] sm:$0xff] %v1644
    %1653 = vst [vmem:[#allocation6 + $0x20] sm:$0xff] %v1645
    %1654 = vst [vmem:[#allocation6 + $0x28] sm:$0xff] %v1646
    %1655 = vst [vmem:[#allocation6 + $0x30] sm:$0xff] %v1647
    %1656 = vst [vmem:[#allocation6 + $0x38] sm:$0xff] %v1648
    %v1657 = vld [vmem:[%s3] sm:$0xff]
    %v1658 = vld [vmem:[%s3 + $0x8] sm:$0xff]
    %v1659 = vld [vmem:[%s3 + $0x10] sm:$0xff]
    %v1660 = vld [vmem:[%s3 + $0x18] sm:$0xff]
    %v1661 = vld [vmem:[#allocation2] sm:$0xff]
    %v1662 = vld [vmem:[#allocation2 + $0x8] sm:$0xff]
    %v1663 = vld [vmem:[#allocation2 + $0x10] sm:$0xff]
    %v1664 = vld [vmem:[#allocation2 + $0x18] sm:$0xff]
    %v1665 = vld [vmem:[#allocation2 + $0x20] sm:$0xff]
    %v1666 = vld [vmem:[#allocation2 + $0x28] sm:$0xff]
    %v1667 = vld [vmem:[#allocation2 + $0x30] sm:$0xff]
    %v1668 = vld [vmem:[#allocation2 + $0x38] sm:$0xff]
    %v1669 = vld [vmem:[%s1279] sm:$0xff]
    %v1670 = vld [vmem:[%s1279 + $0x8] sm:$0xff]
    %v1671 = vld [vmem:[%s1279 + $0x10] sm:$0xff]
    %v1672 = vld [vmem:[%s1279 + $0x18] sm:$0xff]
    %v1673 = vld [vmem:[%s334] sm:$0xff]
    %v1674 = vld [vmem:[%s334 + $0x8] sm:$0xff]
    %v1675 = vld [vmem:[%s334 + $0x10] sm:$0xff]
    %v1676 = vld [vmem:[%s334 + $0x18] sm:$0xff]
    %v1677 = vld [vmem:[%s334 + $0x20] sm:$0xff]
    %v1678 = vld [vmem:[%s334 + $0x28] sm:$0xff]
    %v1679 = vld [vmem:[%s334 + $0x30] sm:$0xff]
    %v1680 = vld [vmem:[%s334 + $0x38] sm:$0xff]
    %v1682 = vsel %vm1292, %v1669, 0
    %v1685 = vsel %vm1292, %v1670, 0
    %v1688 = vsel %vm1292, %v1671, 0
    %v1691 = vsel %vm1292, %v1672, 0
    %1693 = vmatprep.subr.mxu0 0.0
    %1694 = vmatpush1.msra.mxu0 0.0
    %1695 = vmatprep.subr.mxu0 0.0
    %1696 = vmatpush1.msra.mxu0 0.0
    %1697 = vmatprep.subr.mxu0 0.0
    %1698 = vmatpush1.msra.mxu0 0.0
    %1699 = vmatprep.subr.mxu0 0.0
    %1700 = vmatpush1.msra.mxu0 0.0
    %1701 = vmatprep.subr.mxu0 0.0
    %1702 = vmatpush1.msra.mxu0 0.0
    %1703 = vmatprep.subr.mxu0 0.0
    %1704 = vmatpush1.msra.mxu0 0.0
    %1705 = vmatprep.subr.mxu0 0.0
    %1706 = vmatpush1.msra.mxu0 0.0
    %1707 = vmatprep.subr.mxu0 0.0
    %1708 = vmatpush1.msra.mxu0 0.0
    %1709 = vmatprep.subr.mxu0 0.0
    %1710 = vmatpush1.msra.mxu0 0.0
    %1711 = vmatprep.subr.mxu0 0.0
    %1712 = vmatpush1.msra.mxu0 0.0
    %1713 = vmatprep.subr.mxu0 0.0
    %1714 = vmatpush1.msra.mxu0 0.0
    %1715 = vmatprep.subr.mxu0 0.0
    %1716 = vmatpush1.msra.mxu0 0.0
    %1717 = vmatprep.subr.mxu0 %v1680
    %1718 = vmatpush1.msra.mxu0 %v1679
    %1719 = vmatprep.subr.mxu0 %v1678
    %1720 = vmatpush1.msra.mxu0 %v1677
    %1721 = vmatprep.subr.mxu0 %v1676
    %1722 = vmatpush1.msra.mxu0 %v1675
    %1723 = vmatprep.subr.mxu0 %v1674
    %1724 = vmatpush1.msra.mxu0 %v1673
    %1725 = vmatprep.subr.mxu0 0.0
    %1726 = vmatpush2.msra.mxu0 0.0
    %1727 = vmatprep.subr.mxu0 0.0
    %1728 = vmatpush2.msra.mxu0 0.0
    %1729 = vmatprep.subr.mxu0 0.0
    %1730 = vmatpush2.msra.mxu0 0.0
    %1731 = vmatprep.subr.mxu0 0.0
    %1732 = vmatpush2.msra.mxu0 0.0
    %1733 = vmatprep.subr.mxu0 0.0
    %1734 = vmatpush2.msra.mxu0 0.0
    %1735 = vmatprep.subr.mxu0 0.0
    %1736 = vmatpush2.msra.mxu0 0.0
    %1737 = vmatprep.subr.mxu0 0.0
    %1738 = vmatpush2.msra.mxu0 0.0
    %1739 = vmatprep.subr.mxu0 0.0
    %1740 = vmatpush2.msra.mxu0 0.0
    %1741 = vmatprep.subr.mxu0 0.0
    %1742 = vmatpush2.msra.mxu0 0.0
    %1743 = vmatprep.subr.mxu0 0.0
    %1744 = vmatpush2.msra.mxu0 0.0
    %1745 = vmatprep.subr.mxu0 0.0
    %1746 = vmatpush2.msra.mxu0 0.0
    %1747 = vmatprep.subr.mxu0 0.0
    %1748 = vmatpush2.msra.mxu0 0.0
    %1749 = vmatprep.subr.mxu0 0.0
    %1750 = vmatpush2.msra.mxu0 0.0
    %1751 = vmatprep.subr.mxu0 0.0
    %1752 = vmatpush2.msra.mxu0 0.0
    %1753 = vmatprep.subr.mxu0 0.0
    %1754 = vmatpush2.msra.mxu0 0.0
    %1755 = vmatprep.subr.mxu0 0.0
    %1756 = vmatpush2.msra.mxu0 0.0
    %1757 = vmatprep.mubr.f32.mxu0 0.0
    %1758 = vmatmul.mubr.f32.gmra.mxu0 %v1682
    %v1759 = vpop.f32.mrf.mxu0
    %v1760 = vadd.f32 0.0, %v1759
    %v1761 = vpop.f32.mrf.mxu0
    %v1762 = vadd.f32 0.0, %v1761
    %1763 = vmatprep.mubr.f32.mxu0 0.0
    %1764 = vmatmul.mubr.f32.gmra.mxu0 %v1685
    %v1765 = vpop.f32.mrf.mxu0
    %v1766 = vadd.f32 0.0, %v1765
    %v1767 = vpop.f32.mrf.mxu0
    %v1768 = vadd.f32 0.0, %v1767
    %1769 = vmatprep.mubr.f32.mxu0 0.0
    %1770 = vmatmul.mubr.f32.gmra.mxu0 %v1688
    %v1771 = vpop.f32.mrf.mxu0
    %v1772 = vadd.f32 0.0, %v1771
    %v1773 = vpop.f32.mrf.mxu0
    %v1774 = vadd.f32 0.0, %v1773
    %1775 = vmatprep.mubr.f32.mxu0 0.0
    %1776 = vmatmul.mubr.f32.gmra.mxu0 %v1691
    %v1777 = vpop.f32.mrf.mxu0
    %v1778 = vadd.f32 0.0, %v1777
    %v1779 = vpop.f32.mrf.mxu0
    %v1780 = vadd.f32 0.0, %v1779
    %1781 = vdwg.mxu0
    %v1783 = vsel %vm1292, %v1657, 0
    %v1786 = vsel %vm1292, %v1658, 0
    %v1789 = vsel %vm1292, %v1659, 0
    %v1792 = vsel %vm1292, %v1660, 0
    %1794 = vmatprep.subr.mxu0 0.0
    %1795 = vmatpush1.msra.mxu0 0.0
    %1796 = vmatprep.subr.mxu0 0.0
    %1797 = vmatpush1.msra.mxu0 0.0
    %1798 = vmatprep.subr.mxu0 0.0
    %1799 = vmatpush1.msra.mxu0 0.0
    %1800 = vmatprep.subr.mxu0 0.0
    %1801 = vmatpush1.msra.mxu0 0.0
    %1802 = vmatprep.subr.mxu0 0.0
    %1803 = vmatpush1.msra.mxu0 0.0
    %1804 = vmatprep.subr.mxu0 0.0
    %1805 = vmatpush1.msra.mxu0 0.0
    %1806 = vmatprep.subr.mxu0 0.0
    %1807 = vmatpush1.msra.mxu0 0.0
    %1808 = vmatprep.subr.mxu0 0.0
    %1809 = vmatpush1.msra.mxu0 0.0
    %1810 = vmatprep.subr.mxu0 0.0
    %1811 = vmatpush1.msra.mxu0 0.0
    %1812 = vmatprep.subr.mxu0 0.0
    %1813 = vmatpush1.msra.mxu0 0.0
    %1814 = vmatprep.subr.mxu0 0.0
    %1815 = vmatpush1.msra.mxu0 0.0
    %1816 = vmatprep.subr.mxu0 0.0
    %1817 = vmatpush1.msra.mxu0 0.0
    %1818 = vmatprep.subr.mxu0 %v1668
    %1819 = vmatpush1.msra.mxu0 %v1667
    %1820 = vmatprep.subr.mxu0 %v1666
    %1821 = vmatpush1.msra.mxu0 %v1665
    %1822 = vmatprep.subr.mxu0 %v1664
    %1823 = vmatpush1.msra.mxu0 %v1663
    %1824 = vmatprep.subr.mxu0 %v1662
    %1825 = vmatpush1.msra.mxu0 %v1661
    %1826 = vmatprep.subr.mxu0 0.0
    %1827 = vmatpush2.msra.mxu0 0.0
    %1828 = vmatprep.subr.mxu0 0.0
    %1829 = vmatpush2.msra.mxu0 0.0
    %1830 = vmatprep.subr.mxu0 0.0
    %1831 = vmatpush2.msra.mxu0 0.0
    %1832 = vmatprep.subr.mxu0 0.0
    %1833 = vmatpush2.msra.mxu0 0.0
    %1834 = vmatprep.subr.mxu0 0.0
    %1835 = vmatpush2.msra.mxu0 0.0
    %1836 = vmatprep.subr.mxu0 0.0
    %1837 = vmatpush2.msra.mxu0 0.0
    %1838 = vmatprep.subr.mxu0 0.0
    %1839 = vmatpush2.msra.mxu0 0.0
    %1840 = vmatprep.subr.mxu0 0.0
    %1841 = vmatpush2.msra.mxu0 0.0
    %1842 = vmatprep.subr.mxu0 0.0
    %1843 = vmatpush2.msra.mxu0 0.0
    %1844 = vmatprep.subr.mxu0 0.0
    %1845 = vmatpush2.msra.mxu0 0.0
    %1846 = vmatprep.subr.mxu0 0.0
    %1847 = vmatpush2.msra.mxu0 0.0
    %1848 = vmatprep.subr.mxu0 0.0
    %1849 = vmatpush2.msra.mxu0 0.0
    %1850 = vmatprep.subr.mxu0 0.0
    %1851 = vmatpush2.msra.mxu0 0.0
    %1852 = vmatprep.subr.mxu0 0.0
    %1853 = vmatpush2.msra.mxu0 0.0
    %1854 = vmatprep.subr.mxu0 0.0
    %1855 = vmatpush2.msra.mxu0 0.0
    %1856 = vmatprep.subr.mxu0 0.0
    %1857 = vmatpush2.msra.mxu0 0.0
    %1858 = vmatprep.mubr.f32.mxu0 0.0
    %1859 = vmatmul.mubr.f32.gmra.mxu0 %v1783
    %v1860 = vpop.f32.mrf.mxu0
    %v1861 = vadd.f32 %v1760, %v1860
    %v1862 = vpop.f32.mrf.mxu0
    %v1863 = vadd.f32 %v1762, %v1862
    %1864 = vmatprep.mubr.f32.mxu0 0.0
    %1865 = vmatmul.mubr.f32.gmra.mxu0 %v1786
    %v1866 = vpop.f32.mrf.mxu0
    %v1867 = vadd.f32 %v1766, %v1866
    %v1868 = vpop.f32.mrf.mxu0
    %v1869 = vadd.f32 %v1768, %v1868
    %1870 = vmatprep.mubr.f32.mxu0 0.0
    %1871 = vmatmul.mubr.f32.gmra.mxu0 %v1789
    %v1872 = vpop.f32.mrf.mxu0
    %v1873 = vadd.f32 %v1772, %v1872
    %v1874 = vpop.f32.mrf.mxu0
    %v1875 = vadd.f32 %v1774, %v1874
    %1876 = vmatprep.mubr.f32.mxu0 0.0
    %1877 = vmatmul.mubr.f32.gmra.mxu0 %v1792
    %v1878 = vpop.f32.mrf.mxu0
    %v1879 = vadd.f32 %v1778, %v1878
    %v1880 = vpop.f32.mrf.mxu0
    %v1881 = vadd.f32 %v1780, %v1880
    %1882 = vdwg.mxu0
    %v1883 = vld [vmem:[%s1495] sm:$0xff]
    %v1884 = vld [vmem:[%s1495 + $0x8] sm:$0xff]
    %v1885 = vld [vmem:[%s1495 + $0x10] sm:$0xff]
    %v1886 = vld [vmem:[%s1495 + $0x18] sm:$0xff]
    %v1887 = vld [vmem:[%s488] sm:$0xff]
    %v1888 = vld [vmem:[%s488 + $0x8] sm:$0xff]
    %v1889 = vld [vmem:[%s488 + $0x10] sm:$0xff]
    %v1890 = vld [vmem:[%s488 + $0x18] sm:$0xff]
    %v1891 = vld [vmem:[%s488 + $0x20] sm:$0xff]
    %v1892 = vld [vmem:[%s488 + $0x28] sm:$0xff]
    %v1893 = vld [vmem:[%s488 + $0x30] sm:$0xff]
    %v1894 = vld [vmem:[%s488 + $0x38] sm:$0xff]
    %v1896 = vsel %vm1292, %v1883, 0
    %v1899 = vsel %vm1292, %v1884, 0
    %v1902 = vsel %vm1292, %v1885, 0
    %v1905 = vsel %vm1292, %v1886, 0
    %1907 = vmatprep.subr.mxu0 0.0
    %1908 = vmatpush1.msra.mxu0 0.0
    %1909 = vmatprep.subr.mxu0 0.0
    %1910 = vmatpush1.msra.mxu0 0.0
    %1911 = vmatprep.subr.mxu0 0.0
    %1912 = vmatpush1.msra.mxu0 0.0
    %1913 = vmatprep.subr.mxu0 0.0
    %1914 = vmatpush1.msra.mxu0 0.0
    %1915 = vmatprep.subr.mxu0 0.0
    %1916 = vmatpush1.msra.mxu0 0.0
    %1917 = vmatprep.subr.mxu0 0.0
    %1918 = vmatpush1.msra.mxu0 0.0
    %1919 = vmatprep.subr.mxu0 0.0
    %1920 = vmatpush1.msra.mxu0 0.0
    %1921 = vmatprep.subr.mxu0 0.0
    %1922 = vmatpush1.msra.mxu0 0.0
    %1923 = vmatprep.subr.mxu0 0.0
    %1924 = vmatpush1.msra.mxu0 0.0
    %1925 = vmatprep.subr.mxu0 0.0
    %1926 = vmatpush1.msra.mxu0 0.0
    %1927 = vmatprep.subr.mxu0 0.0
    %1928 = vmatpush1.msra.mxu0 0.0
    %1929 = vmatprep.subr.mxu0 0.0
    %1930 = vmatpush1.msra.mxu0 0.0
    %1931 = vmatprep.subr.mxu0 %v1894
    %1932 = vmatpush1.msra.mxu0 %v1893
    %1933 = vmatprep.subr.mxu0 %v1892
    %1934 = vmatpush1.msra.mxu0 %v1891
    %1935 = vmatprep.subr.mxu0 %v1890
    %1936 = vmatpush1.msra.mxu0 %v1889
    %1937 = vmatprep.subr.mxu0 %v1888
    %1938 = vmatpush1.msra.mxu0 %v1887
    %1939 = vmatprep.subr.mxu0 0.0
    %1940 = vmatpush2.msra.mxu0 0.0
    %1941 = vmatprep.subr.mxu0 0.0
    %1942 = vmatpush2.msra.mxu0 0.0
    %1943 = vmatprep.subr.mxu0 0.0
    %1944 = vmatpush2.msra.mxu0 0.0
    %1945 = vmatprep.subr.mxu0 0.0
    %1946 = vmatpush2.msra.mxu0 0.0
    %1947 = vmatprep.subr.mxu0 0.0
    %1948 = vmatpush2.msra.mxu0 0.0
    %1949 = vmatprep.subr.mxu0 0.0
    %1950 = vmatpush2.msra.mxu0 0.0
    %1951 = vmatprep.subr.mxu0 0.0
    %1952 = vmatpush2.msra.mxu0 0.0
    %1953 = vmatprep.subr.mxu0 0.0
    %1954 = vmatpush2.msra.mxu0 0.0
    %1955 = vmatprep.subr.mxu0 0.0
    %1956 = vmatpush2.msra.mxu0 0.0
    %1957 = vmatprep.subr.mxu0 0.0
    %1958 = vmatpush2.msra.mxu0 0.0
    %1959 = vmatprep.subr.mxu0 0.0
    %1960 = vmatpush2.msra.mxu0 0.0
    %1961 = vmatprep.subr.mxu0 0.0
    %1962 = vmatpush2.msra.mxu0 0.0
    %1963 = vmatprep.subr.mxu0 0.0
    %1964 = vmatpush2.msra.mxu0 0.0
    %1965 = vmatprep.subr.mxu0 0.0
    %1966 = vmatpush2.msra.mxu0 0.0
    %1967 = vmatprep.subr.mxu0 0.0
    %1968 = vmatpush2.msra.mxu0 0.0
    %1969 = vmatprep.subr.mxu0 0.0
    %1970 = vmatpush2.msra.mxu0 0.0
    %1971 = vmatprep.mubr.f32.mxu0 0.0
    %1972 = vmatmul.mubr.f32.gmra.mxu0 %v1896
    %v1973 = vpop.f32.mrf.mxu0
    %v1974 = vadd.f32 0.0, %v1973
    %v1975 = vpop.f32.mrf.mxu0
    %v1976 = vadd.f32 0.0, %v1975
    %1977 = vmatprep.mubr.f32.mxu0 0.0
    %1978 = vmatmul.mubr.f32.gmra.mxu0 %v1899
    %v1979 = vpop.f32.mrf.mxu0
    %v1980 = vadd.f32 0.0, %v1979
    %v1981 = vpop.f32.mrf.mxu0
    %v1982 = vadd.f32 0.0, %v1981
    %1983 = vmatprep.mubr.f32.mxu0 0.0
    %1984 = vmatmul.mubr.f32.gmra.mxu0 %v1902
    %v1985 = vpop.f32.mrf.mxu0
    %v1986 = vadd.f32 0.0, %v1985
    %v1987 = vpop.f32.mrf.mxu0
    %v1988 = vadd.f32 0.0, %v1987
    %1989 = vmatprep.mubr.f32.mxu0 0.0
    %1990 = vmatmul.mubr.f32.gmra.mxu0 %v1905
    %v1991 = vpop.f32.mrf.mxu0
    %v1992 = vadd.f32 0.0, %v1991
    %v1993 = vpop.f32.mrf.mxu0
    %v1994 = vadd.f32 0.0, %v1993
    %1995 = vdwg.mxu0
    %v1996 = vadd.f32 %v1861, %v1974
    %v1997 = vadd.f32 %v1863, %v1976
    %v1998 = vadd.f32 %v1867, %v1980
    %v1999 = vadd.f32 %v1869, %v1982
    %v2000 = vadd.f32 %v1873, %v1986
    %v2001 = vadd.f32 %v1875, %v1988
    %v2002 = vadd.f32 %v1879, %v1992
    %v2003 = vadd.f32 %v1881, %v1994
    %v2004 = vld [vmem:[%s4] sm:$0xff]
    %v2005 = vld [vmem:[%s4 + $0x8] sm:$0xff]
    %v2006 = vld [vmem:[%s4 + $0x10] sm:$0xff]
    %v2007 = vld [vmem:[%s4 + $0x18] sm:$0xff]
    %2009 = vset.pattern.permute.xlu0 0
    %2010 = vperm.xlu0 %2009, %v2004
    %v2011 = vpop.permute.xlu0 %2010
    %2014 = vset.pattern.permute.xlu0 0
    %2015 = vperm.xlu0 %2014, %v2005
    %v2016 = vpop.permute.xlu0 %2015
    %2019 = vset.pattern.permute.xlu0 0
    %2020 = vperm.xlu0 %2019, %v2006
    %v2021 = vpop.permute.xlu0 %2020
    %2024 = vset.pattern.permute.xlu0 0
    %2025 = vperm.xlu0 %2024, %v2007
    %v2026 = vpop.permute.xlu0 %2025
    %v2028 = vadd.f32 %v1996, %v2011
    %v2029 = vadd.f32 %v1997, %v2011
    %v2030 = vadd.f32 %v1998, %v2016
    %v2031 = vadd.f32 %v1999, %v2016
    %v2032 = vadd.f32 %v2000, %v2021
    %v2033 = vadd.f32 %v2001, %v2021
    %v2034 = vadd.f32 %v2002, %v2026
    %v2035 = vadd.f32 %v2003, %v2026
    %s2036 = scalar_lea.vmem [#allocation6], 64
    %2037 = vst [vmem:[%s2036] sm:$0xff] %v2028
    %2038 = vst [vmem:[%s2036 + $0x8] sm:$0xff] %v2029
    %2039 = vst [vmem:[%s2036 + $0x10] sm:$0xff] %v2030
    %2040 = vst [vmem:[%s2036 + $0x18] sm:$0xff] %v2031
    %2041 = vst [vmem:[%s2036 + $0x20] sm:$0xff] %v2032
    %2042 = vst [vmem:[%s2036 + $0x28] sm:$0xff] %v2033
    %2043 = vst [vmem:[%s2036 + $0x30] sm:$0xff] %v2034
    %2044 = vst [vmem:[%s2036 + $0x38] sm:$0xff] %v2035
    %v2045 = vld [vmem:[%s3] sm:$0xff]
    %v2046 = vld [vmem:[%s3 + $0x8] sm:$0xff]
    %v2047 = vld [vmem:[%s3 + $0x10] sm:$0xff]
    %v2048 = vld [vmem:[%s3 + $0x18] sm:$0xff]
    %v2049 = vld [vmem:[%s334] sm:$0xff]
    %v2050 = vld [vmem:[%s334 + $0x8] sm:$0xff]
    %v2051 = vld [vmem:[%s334 + $0x10] sm:$0xff]
    %v2052 = vld [vmem:[%s334 + $0x18] sm:$0xff]
    %v2053 = vld [vmem:[%s334 + $0x20] sm:$0xff]
    %v2054 = vld [vmem:[%s334 + $0x28] sm:$0xff]
    %v2055 = vld [vmem:[%s334 + $0x30] sm:$0xff]
    %v2056 = vld [vmem:[%s334 + $0x38] sm:$0xff]
    %v2057 = vld [vmem:[%s1279] sm:$0xff]
    %v2058 = vld [vmem:[%s1279 + $0x8] sm:$0xff]
    %v2059 = vld [vmem:[%s1279 + $0x10] sm:$0xff]
    %v2060 = vld [vmem:[%s1279 + $0x18] sm:$0xff]
    %v2061 = vld [vmem:[%s488] sm:$0xff]
    %v2062 = vld [vmem:[%s488 + $0x8] sm:$0xff]
    %v2063 = vld [vmem:[%s488 + $0x10] sm:$0xff]
    %v2064 = vld [vmem:[%s488 + $0x18] sm:$0xff]
    %v2065 = vld [vmem:[%s488 + $0x20] sm:$0xff]
    %v2066 = vld [vmem:[%s488 + $0x28] sm:$0xff]
    %v2067 = vld [vmem:[%s488 + $0x30] sm:$0xff]
    %v2068 = vld [vmem:[%s488 + $0x38] sm:$0xff]
    %v2070 = vsel %vm1292, %v2057, 0
    %v2073 = vsel %vm1292, %v2058, 0
    %v2076 = vsel %vm1292, %v2059, 0
    %v2079 = vsel %vm1292, %v2060, 0
    %2081 = vmatprep.subr.mxu0 0.0
    %2082 = vmatpush1.msra.mxu0 0.0
    %2083 = vmatprep.subr.mxu0 0.0
    %2084 = vmatpush1.msra.mxu0 0.0
    %2085 = vmatprep.subr.mxu0 0.0
    %2086 = vmatpush1.msra.mxu0 0.0
    %2087 = vmatprep.subr.mxu0 0.0
    %2088 = vmatpush1.msra.mxu0 0.0
    %2089 = vmatprep.subr.mxu0 0.0
    %2090 = vmatpush1.msra.mxu0 0.0
    %2091 = vmatprep.subr.mxu0 0.0
    %2092 = vmatpush1.msra.mxu0 0.0
    %2093 = vmatprep.subr.mxu0 0.0
    %2094 = vmatpush1.msra.mxu0 0.0
    %2095 = vmatprep.subr.mxu0 0.0
    %2096 = vmatpush1.msra.mxu0 0.0
    %2097 = vmatprep.subr.mxu0 0.0
    %2098 = vmatpush1.msra.mxu0 0.0
    %2099 = vmatprep.subr.mxu0 0.0
    %2100 = vmatpush1.msra.mxu0 0.0
    %2101 = vmatprep.subr.mxu0 0.0
    %2102 = vmatpush1.msra.mxu0 0.0
    %2103 = vmatprep.subr.mxu0 0.0
    %2104 = vmatpush1.msra.mxu0 0.0
    %2105 = vmatprep.subr.mxu0 %v2068
    %2106 = vmatpush1.msra.mxu0 %v2067
    %2107 = vmatprep.subr.mxu0 %v2066
    %2108 = vmatpush1.msra.mxu0 %v2065
    %2109 = vmatprep.subr.mxu0 %v2064
    %2110 = vmatpush1.msra.mxu0 %v2063
    %2111 = vmatprep.subr.mxu0 %v2062
    %2112 = vmatpush1.msra.mxu0 %v2061
    %2113 = vmatprep.subr.mxu0 0.0
    %2114 = vmatpush2.msra.mxu0 0.0
    %2115 = vmatprep.subr.mxu0 0.0
    %2116 = vmatpush2.msra.mxu0 0.0
    %2117 = vmatprep.subr.mxu0 0.0
    %2118 = vmatpush2.msra.mxu0 0.0
    %2119 = vmatprep.subr.mxu0 0.0
    %2120 = vmatpush2.msra.mxu0 0.0
    %2121 = vmatprep.subr.mxu0 0.0
    %2122 = vmatpush2.msra.mxu0 0.0
    %2123 = vmatprep.subr.mxu0 0.0
    %2124 = vmatpush2.msra.mxu0 0.0
    %2125 = vmatprep.subr.mxu0 0.0
    %2126 = vmatpush2.msra.mxu0 0.0
    %2127 = vmatprep.subr.mxu0 0.0
    %2128 = vmatpush2.msra.mxu0 0.0
    %2129 = vmatprep.subr.mxu0 0.0
    %2130 = vmatpush2.msra.mxu0 0.0
    %2131 = vmatprep.subr.mxu0 0.0
    %2132 = vmatpush2.msra.mxu0 0.0
    %2133 = vmatprep.subr.mxu0 0.0
    %2134 = vmatpush2.msra.mxu0 0.0
    %2135 = vmatprep.subr.mxu0 0.0
    %2136 = vmatpush2.msra.mxu0 0.0
    %2137 = vmatprep.subr.mxu0 0.0
    %2138 = vmatpush2.msra.mxu0 0.0
    %2139 = vmatprep.subr.mxu0 0.0
    %2140 = vmatpush2.msra.mxu0 0.0
    %2141 = vmatprep.subr.mxu0 0.0
    %2142 = vmatpush2.msra.mxu0 0.0
    %2143 = vmatprep.subr.mxu0 0.0
    %2144 = vmatpush2.msra.mxu0 0.0
    %2145 = vmatprep.mubr.f32.mxu0 0.0
    %2146 = vmatmul.mubr.f32.gmra.mxu0 %v2070
    %v2147 = vpop.f32.mrf.mxu0
    %v2148 = vadd.f32 0.0, %v2147
    %v2149 = vpop.f32.mrf.mxu0
    %v2150 = vadd.f32 0.0, %v2149
    %2151 = vmatprep.mubr.f32.mxu0 0.0
    %2152 = vmatmul.mubr.f32.gmra.mxu0 %v2073
    %v2153 = vpop.f32.mrf.mxu0
    %v2154 = vadd.f32 0.0, %v2153
    %v2155 = vpop.f32.mrf.mxu0
    %v2156 = vadd.f32 0.0, %v2155
    %2157 = vmatprep.mubr.f32.mxu0 0.0
    %2158 = vmatmul.mubr.f32.gmra.mxu0 %v2076
    %v2159 = vpop.f32.mrf.mxu0
    %v2160 = vadd.f32 0.0, %v2159
    %v2161 = vpop.f32.mrf.mxu0
    %v2162 = vadd.f32 0.0, %v2161
    %2163 = vmatprep.mubr.f32.mxu0 0.0
    %2164 = vmatmul.mubr.f32.gmra.mxu0 %v2079
    %v2165 = vpop.f32.mrf.mxu0
    %v2166 = vadd.f32 0.0, %v2165
    %v2167 = vpop.f32.mrf.mxu0
    %v2168 = vadd.f32 0.0, %v2167
    %2169 = vdwg.mxu0
    %v2171 = vsel %vm1292, %v2045, 0
    %v2174 = vsel %vm1292, %v2046, 0
    %v2177 = vsel %vm1292, %v2047, 0
    %v2180 = vsel %vm1292, %v2048, 0
    %2182 = vmatprep.subr.mxu0 0.0
    %2183 = vmatpush1.msra.mxu0 0.0
    %2184 = vmatprep.subr.mxu0 0.0
    %2185 = vmatpush1.msra.mxu0 0.0
    %2186 = vmatprep.subr.mxu0 0.0
    %2187 = vmatpush1.msra.mxu0 0.0
    %2188 = vmatprep.subr.mxu0 0.0
    %2189 = vmatpush1.msra.mxu0 0.0
    %2190 = vmatprep.subr.mxu0 0.0
    %2191 = vmatpush1.msra.mxu0 0.0
    %2192 = vmatprep.subr.mxu0 0.0
    %2193 = vmatpush1.msra.mxu0 0.0
    %2194 = vmatprep.subr.mxu0 0.0
    %2195 = vmatpush1.msra.mxu0 0.0
    %2196 = vmatprep.subr.mxu0 0.0
    %2197 = vmatpush1.msra.mxu0 0.0
    %2198 = vmatprep.subr.mxu0 0.0
    %2199 = vmatpush1.msra.mxu0 0.0
    %2200 = vmatprep.subr.mxu0 0.0
    %2201 = vmatpush1.msra.mxu0 0.0
    %2202 = vmatprep.subr.mxu0 0.0
    %2203 = vmatpush1.msra.mxu0 0.0
    %2204 = vmatprep.subr.mxu0 0.0
    %2205 = vmatpush1.msra.mxu0 0.0
    %2206 = vmatprep.subr.mxu0 %v2056
    %2207 = vmatpush1.msra.mxu0 %v2055
    %2208 = vmatprep.subr.mxu0 %v2054
    %2209 = vmatpush1.msra.mxu0 %v2053
    %2210 = vmatprep.subr.mxu0 %v2052
    %2211 = vmatpush1.msra.mxu0 %v2051
    %2212 = vmatprep.subr.mxu0 %v2050
    %2213 = vmatpush1.msra.mxu0 %v2049
    %2214 = vmatprep.subr.mxu0 0.0
    %2215 = vmatpush2.msra.mxu0 0.0
    %2216 = vmatprep.subr.mxu0 0.0
    %2217 = vmatpush2.msra.mxu0 0.0
    %2218 = vmatprep.subr.mxu0 0.0
    %2219 = vmatpush2.msra.mxu0 0.0
    %2220 = vmatprep.subr.mxu0 0.0
    %2221 = vmatpush2.msra.mxu0 0.0
    %2222 = vmatprep.subr.mxu0 0.0
    %2223 = vmatpush2.msra.mxu0 0.0
    %2224 = vmatprep.subr.mxu0 0.0
    %2225 = vmatpush2.msra.mxu0 0.0
    %2226 = vmatprep.subr.mxu0 0.0
    %2227 = vmatpush2.msra.mxu0 0.0
    %2228 = vmatprep.subr.mxu0 0.0
    %2229 = vmatpush2.msra.mxu0 0.0
    %2230 = vmatprep.subr.mxu0 0.0
    %2231 = vmatpush2.msra.mxu0 0.0
    %2232 = vmatprep.subr.mxu0 0.0
    %2233 = vmatpush2.msra.mxu0 0.0
    %2234 = vmatprep.subr.mxu0 0.0
    %2235 = vmatpush2.msra.mxu0 0.0
    %2236 = vmatprep.subr.mxu0 0.0
    %2237 = vmatpush2.msra.mxu0 0.0
    %2238 = vmatprep.subr.mxu0 0.0
    %2239 = vmatpush2.msra.mxu0 0.0
    %2240 = vmatprep.subr.mxu0 0.0
    %2241 = vmatpush2.msra.mxu0 0.0
    %2242 = vmatprep.subr.mxu0 0.0
    %2243 = vmatpush2.msra.mxu0 0.0
    %2244 = vmatprep.subr.mxu0 0.0
    %2245 = vmatpush2.msra.mxu0 0.0
    %2246 = vmatprep.mubr.f32.mxu0 0.0
    %2247 = vmatmul.mubr.f32.gmra.mxu0 %v2171
    %v2248 = vpop.f32.mrf.mxu0
    %v2249 = vadd.f32 %v2148, %v2248
    %v2250 = vpop.f32.mrf.mxu0
    %v2251 = vadd.f32 %v2150, %v2250
    %2252 = vmatprep.mubr.f32.mxu0 0.0
    %2253 = vmatmul.mubr.f32.gmra.mxu0 %v2174
    %v2254 = vpop.f32.mrf.mxu0
    %v2255 = vadd.f32 %v2154, %v2254
    %v2256 = vpop.f32.mrf.mxu0
    %v2257 = vadd.f32 %v2156, %v2256
    %2258 = vmatprep.mubr.f32.mxu0 0.0
    %2259 = vmatmul.mubr.f32.gmra.mxu0 %v2177
    %v2260 = vpop.f32.mrf.mxu0
    %v2261 = vadd.f32 %v2160, %v2260
    %v2262 = vpop.f32.mrf.mxu0
    %v2263 = vadd.f32 %v2162, %v2262
    %2264 = vmatprep.mubr.f32.mxu0 0.0
    %2265 = vmatmul.mubr.f32.gmra.mxu0 %v2180
    %v2266 = vpop.f32.mrf.mxu0
    %v2267 = vadd.f32 %v2166, %v2266
    %v2268 = vpop.f32.mrf.mxu0
    %v2269 = vadd.f32 %v2168, %v2268
    %2270 = vdwg.mxu0
    %v2271 = vld [vmem:[%s1495] sm:$0xff]
    %v2272 = vld [vmem:[%s1495 + $0x8] sm:$0xff]
    %v2273 = vld [vmem:[%s1495 + $0x10] sm:$0xff]
    %v2274 = vld [vmem:[%s1495 + $0x18] sm:$0xff]
    %v2275 = vld [vmem:[%s642] sm:$0xff]
    %v2276 = vld [vmem:[%s642 + $0x8] sm:$0xff]
    %v2277 = vld [vmem:[%s642 + $0x10] sm:$0xff]
    %v2278 = vld [vmem:[%s642 + $0x18] sm:$0xff]
    %v2279 = vld [vmem:[%s642 + $0x20] sm:$0xff]
    %v2280 = vld [vmem:[%s642 + $0x28] sm:$0xff]
    %v2281 = vld [vmem:[%s642 + $0x30] sm:$0xff]
    %v2282 = vld [vmem:[%s642 + $0x38] sm:$0xff]
    %v2284 = vsel %vm1292, %v2271, 0
    %v2287 = vsel %vm1292, %v2272, 0
    %v2290 = vsel %vm1292, %v2273, 0
    %v2293 = vsel %vm1292, %v2274, 0
    %2295 = vmatprep.subr.mxu0 0.0
    %2296 = vmatpush1.msra.mxu0 0.0
    %2297 = vmatprep.subr.mxu0 0.0
    %2298 = vmatpush1.msra.mxu0 0.0
    %2299 = vmatprep.subr.mxu0 0.0
    %2300 = vmatpush1.msra.mxu0 0.0
    %2301 = vmatprep.subr.mxu0 0.0
    %2302 = vmatpush1.msra.mxu0 0.0
    %2303 = vmatprep.subr.mxu0 0.0
    %2304 = vmatpush1.msra.mxu0 0.0
    %2305 = vmatprep.subr.mxu0 0.0
    %2306 = vmatpush1.msra.mxu0 0.0
    %2307 = vmatprep.subr.mxu0 0.0
    %2308 = vmatpush1.msra.mxu0 0.0
    %2309 = vmatprep.subr.mxu0 0.0
    %2310 = vmatpush1.msra.mxu0 0.0
    %2311 = vmatprep.subr.mxu0 0.0
    %2312 = vmatpush1.msra.mxu0 0.0
    %2313 = vmatprep.subr.mxu0 0.0
    %2314 = vmatpush1.msra.mxu0 0.0
    %2315 = vmatprep.subr.mxu0 0.0
    %2316 = vmatpush1.msra.mxu0 0.0
    %2317 = vmatprep.subr.mxu0 0.0
    %2318 = vmatpush1.msra.mxu0 0.0
    %2319 = vmatprep.subr.mxu0 %v2282
    %2320 = vmatpush1.msra.mxu0 %v2281
    %2321 = vmatprep.subr.mxu0 %v2280
    %2322 = vmatpush1.msra.mxu0 %v2279
    %2323 = vmatprep.subr.mxu0 %v2278
    %2324 = vmatpush1.msra.mxu0 %v2277
    %2325 = vmatprep.subr.mxu0 %v2276
    %2326 = vmatpush1.msra.mxu0 %v2275
    %2327 = vmatprep.subr.mxu0 0.0
    %2328 = vmatpush2.msra.mxu0 0.0
    %2329 = vmatprep.subr.mxu0 0.0
    %2330 = vmatpush2.msra.mxu0 0.0
    %2331 = vmatprep.subr.mxu0 0.0
    %2332 = vmatpush2.msra.mxu0 0.0
    %2333 = vmatprep.subr.mxu0 0.0
    %2334 = vmatpush2.msra.mxu0 0.0
    %2335 = vmatprep.subr.mxu0 0.0
    %2336 = vmatpush2.msra.mxu0 0.0
    %2337 = vmatprep.subr.mxu0 0.0
    %2338 = vmatpush2.msra.mxu0 0.0
    %2339 = vmatprep.subr.mxu0 0.0
    %2340 = vmatpush2.msra.mxu0 0.0
    %2341 = vmatprep.subr.mxu0 0.0
    %2342 = vmatpush2.msra.mxu0 0.0
    %2343 = vmatprep.subr.mxu0 0.0
    %2344 = vmatpush2.msra.mxu0 0.0
    %2345 = vmatprep.subr.mxu0 0.0
    %2346 = vmatpush2.msra.mxu0 0.0
    %2347 = vmatprep.subr.mxu0 0.0
    %2348 = vmatpush2.msra.mxu0 0.0
    %2349 = vmatprep.subr.mxu0 0.0
    %2350 = vmatpush2.msra.mxu0 0.0
    %2351 = vmatprep.subr.mxu0 0.0
    %2352 = vmatpush2.msra.mxu0 0.0
    %2353 = vmatprep.subr.mxu0 0.0
    %2354 = vmatpush2.msra.mxu0 0.0
    %2355 = vmatprep.subr.mxu0 0.0
    %2356 = vmatpush2.msra.mxu0 0.0
    %2357 = vmatprep.subr.mxu0 0.0
    %2358 = vmatpush2.msra.mxu0 0.0
    %2359 = vmatprep.mubr.f32.mxu0 0.0
    %2360 = vmatmul.mubr.f32.gmra.mxu0 %v2284
    %v2361 = vpop.f32.mrf.mxu0
    %v2362 = vadd.f32 0.0, %v2361
    %v2363 = vpop.f32.mrf.mxu0
    %v2364 = vadd.f32 0.0, %v2363
    %2365 = vmatprep.mubr.f32.mxu0 0.0
    %2366 = vmatmul.mubr.f32.gmra.mxu0 %v2287
    %v2367 = vpop.f32.mrf.mxu0
    %v2368 = vadd.f32 0.0, %v2367
    %v2369 = vpop.f32.mrf.mxu0
    %v2370 = vadd.f32 0.0, %v2369
    %2371 = vmatprep.mubr.f32.mxu0 0.0
    %2372 = vmatmul.mubr.f32.gmra.mxu0 %v2290
    %v2373 = vpop.f32.mrf.mxu0
    %v2374 = vadd.f32 0.0, %v2373
    %v2375 = vpop.f32.mrf.mxu0
    %v2376 = vadd.f32 0.0, %v2375
    %2377 = vmatprep.mubr.f32.mxu0 0.0
    %2378 = vmatmul.mubr.f32.gmra.mxu0 %v2293
    %v2379 = vpop.f32.mrf.mxu0
    %v2380 = vadd.f32 0.0, %v2379
    %v2381 = vpop.f32.mrf.mxu0
    %v2382 = vadd.f32 0.0, %v2381
    %2383 = vdwg.mxu0
    %v2384 = vadd.f32 %v2249, %v2362
    %v2385 = vadd.f32 %v2251, %v2364
    %v2386 = vadd.f32 %v2255, %v2368
    %v2387 = vadd.f32 %v2257, %v2370
    %v2388 = vadd.f32 %v2261, %v2374
    %v2389 = vadd.f32 %v2263, %v2376
    %v2390 = vadd.f32 %v2267, %v2380
    %v2391 = vadd.f32 %v2269, %v2382
    %v2392 = vld [vmem:[%s4] sm:$0xff]
    %v2393 = vld [vmem:[%s4 + $0x8] sm:$0xff]
    %v2394 = vld [vmem:[%s4 + $0x10] sm:$0xff]
    %v2395 = vld [vmem:[%s4 + $0x18] sm:$0xff]
    %2397 = vset.pattern.permute.xlu0 0
    %2398 = vperm.xlu0 %2397, %v2392
    %v2399 = vpop.permute.xlu0 %2398
    %2402 = vset.pattern.permute.xlu0 0
    %2403 = vperm.xlu0 %2402, %v2393
    %v2404 = vpop.permute.xlu0 %2403
    %2407 = vset.pattern.permute.xlu0 0
    %2408 = vperm.xlu0 %2407, %v2394
    %v2409 = vpop.permute.xlu0 %2408
    %2412 = vset.pattern.permute.xlu0 0
    %2413 = vperm.xlu0 %2412, %v2395
    %v2414 = vpop.permute.xlu0 %2413
    %v2416 = vadd.f32 %v2384, %v2399
    %v2417 = vadd.f32 %v2385, %v2399
    %v2418 = vadd.f32 %v2386, %v2404
    %v2419 = vadd.f32 %v2387, %v2404
    %v2420 = vadd.f32 %v2388, %v2409
    %v2421 = vadd.f32 %v2389, %v2409
    %v2422 = vadd.f32 %v2390, %v2414
    %v2423 = vadd.f32 %v2391, %v2414
    %s2424 = scalar_lea.vmem [#allocation6], 128
    %2425 = vst [vmem:[%s2424] sm:$0xff] %v2416
    %2426 = vst [vmem:[%s2424 + $0x8] sm:$0xff] %v2417
    %2427 = vst [vmem:[%s2424 + $0x10] sm:$0xff] %v2418
    %2428 = vst [vmem:[%s2424 + $0x18] sm:$0xff] %v2419
    %2429 = vst [vmem:[%s2424 + $0x20] sm:$0xff] %v2420
    %2430 = vst [vmem:[%s2424 + $0x28] sm:$0xff] %v2421
    %2431 = vst [vmem:[%s2424 + $0x30] sm:$0xff] %v2422
    %2432 = vst [vmem:[%s2424 + $0x38] sm:$0xff] %v2423
    %v2433 = vld [vmem:[%s3] sm:$0xff]
    %v2434 = vld [vmem:[%s3 + $0x8] sm:$0xff]
    %v2435 = vld [vmem:[%s3 + $0x10] sm:$0xff]
    %v2436 = vld [vmem:[%s3 + $0x18] sm:$0xff]
    %v2437 = vld [vmem:[%s488] sm:$0xff]
    %v2438 = vld [vmem:[%s488 + $0x8] sm:$0xff]
    %v2439 = vld [vmem:[%s488 + $0x10] sm:$0xff]
    %v2440 = vld [vmem:[%s488 + $0x18] sm:$0xff]
    %v2441 = vld [vmem:[%s488 + $0x20] sm:$0xff]
    %v2442 = vld [vmem:[%s488 + $0x28] sm:$0xff]
    %v2443 = vld [vmem:[%s488 + $0x30] sm:$0xff]
    %v2444 = vld [vmem:[%s488 + $0x38] sm:$0xff]
    %v2445 = vld [vmem:[%s1279] sm:$0xff]
    %v2446 = vld [vmem:[%s1279 + $0x8] sm:$0xff]
    %v2447 = vld [vmem:[%s1279 + $0x10] sm:$0xff]
    %v2448 = vld [vmem:[%s1279 + $0x18] sm:$0xff]
    %v2449 = vld [vmem:[%s642] sm:$0xff]
    %v2450 = vld [vmem:[%s642 + $0x8] sm:$0xff]
    %v2451 = vld [vmem:[%s642 + $0x10] sm:$0xff]
    %v2452 = vld [vmem:[%s642 + $0x18] sm:$0xff]
    %v2453 = vld [vmem:[%s642 + $0x20] sm:$0xff]
    %v2454 = vld [vmem:[%s642 + $0x28] sm:$0xff]
    %v2455 = vld [vmem:[%s642 + $0x30] sm:$0xff]
    %v2456 = vld [vmem:[%s642 + $0x38] sm:$0xff]
    %v2458 = vsel %vm1292, %v2445, 0
    %v2461 = vsel %vm1292, %v2446, 0
    %v2464 = vsel %vm1292, %v2447, 0
    %v2467 = vsel %vm1292, %v2448, 0
    %2469 = vmatprep.subr.mxu0 0.0
    %2470 = vmatpush1.msra.mxu0 0.0
    %2471 = vmatprep.subr.mxu0 0.0
    %2472 = vmatpush1.msra.mxu0 0.0
    %2473 = vmatprep.subr.mxu0 0.0
    %2474 = vmatpush1.msra.mxu0 0.0
    %2475 = vmatprep.subr.mxu0 0.0
    %2476 = vmatpush1.msra.mxu0 0.0
    %2477 = vmatprep.subr.mxu0 0.0
    %2478 = vmatpush1.msra.mxu0 0.0
    %2479 = vmatprep.subr.mxu0 0.0
    %2480 = vmatpush1.msra.mxu0 0.0
    %2481 = vmatprep.subr.mxu0 0.0
    %2482 = vmatpush1.msra.mxu0 0.0
    %2483 = vmatprep.subr.mxu0 0.0
    %2484 = vmatpush1.msra.mxu0 0.0
    %2485 = vmatprep.subr.mxu0 0.0
    %2486 = vmatpush1.msra.mxu0 0.0
    %2487 = vmatprep.subr.mxu0 0.0
    %2488 = vmatpush1.msra.mxu0 0.0
    %2489 = vmatprep.subr.mxu0 0.0
    %2490 = vmatpush1.msra.mxu0 0.0
    %2491 = vmatprep.subr.mxu0 0.0
    %2492 = vmatpush1.msra.mxu0 0.0
    %2493 = vmatprep.subr.mxu0 %v2456
    %2494 = vmatpush1.msra.mxu0 %v2455
    %2495 = vmatprep.subr.mxu0 %v2454
    %2496 = vmatpush1.msra.mxu0 %v2453
    %2497 = vmatprep.subr.mxu0 %v2452
    %2498 = vmatpush1.msra.mxu0 %v2451
    %2499 = vmatprep.subr.mxu0 %v2450
    %2500 = vmatpush1.msra.mxu0 %v2449
    %2501 = vmatprep.subr.mxu0 0.0
    %2502 = vmatpush2.msra.mxu0 0.0
    %2503 = vmatprep.subr.mxu0 0.0
    %2504 = vmatpush2.msra.mxu0 0.0
    %2505 = vmatprep.subr.mxu0 0.0
    %2506 = vmatpush2.msra.mxu0 0.0
    %2507 = vmatprep.subr.mxu0 0.0
    %2508 = vmatpush2.msra.mxu0 0.0
    %2509 = vmatprep.subr.mxu0 0.0
    %2510 = vmatpush2.msra.mxu0 0.0
    %2511 = vmatprep.subr.mxu0 0.0
    %2512 = vmatpush2.msra.mxu0 0.0
    %2513 = vmatprep.subr.mxu0 0.0
    %2514 = vmatpush2.msra.mxu0 0.0
    %2515 = vmatprep.subr.mxu0 0.0
    %2516 = vmatpush2.msra.mxu0 0.0
    %2517 = vmatprep.subr.mxu0 0.0
    %2518 = vmatpush2.msra.mxu0 0.0
    %2519 = vmatprep.subr.mxu0 0.0
    %2520 = vmatpush2.msra.mxu0 0.0
    %2521 = vmatprep.subr.mxu0 0.0
    %2522 = vmatpush2.msra.mxu0 0.0
    %2523 = vmatprep.subr.mxu0 0.0
    %2524 = vmatpush2.msra.mxu0 0.0
    %2525 = vmatprep.subr.mxu0 0.0
    %2526 = vmatpush2.msra.mxu0 0.0
    %2527 = vmatprep.subr.mxu0 0.0
    %2528 = vmatpush2.msra.mxu0 0.0
    %2529 = vmatprep.subr.mxu0 0.0
    %2530 = vmatpush2.msra.mxu0 0.0
    %2531 = vmatprep.subr.mxu0 0.0
    %2532 = vmatpush2.msra.mxu0 0.0
    %2533 = vmatprep.mubr.f32.mxu0 0.0
    %2534 = vmatmul.mubr.f32.gmra.mxu0 %v2458
    %v2535 = vpop.f32.mrf.mxu0
    %v2536 = vadd.f32 0.0, %v2535
    %v2537 = vpop.f32.mrf.mxu0
    %v2538 = vadd.f32 0.0, %v2537
    %2539 = vmatprep.mubr.f32.mxu0 0.0
    %2540 = vmatmul.mubr.f32.gmra.mxu0 %v2461
    %v2541 = vpop.f32.mrf.mxu0
    %v2542 = vadd.f32 0.0, %v2541
    %v2543 = vpop.f32.mrf.mxu0
    %v2544 = vadd.f32 0.0, %v2543
    %2545 = vmatprep.mubr.f32.mxu0 0.0
    %2546 = vmatmul.mubr.f32.gmra.mxu0 %v2464
    %v2547 = vpop.f32.mrf.mxu0
    %v2548 = vadd.f32 0.0, %v2547
    %v2549 = vpop.f32.mrf.mxu0
    %v2550 = vadd.f32 0.0, %v2549
    %2551 = vmatprep.mubr.f32.mxu0 0.0
    %2552 = vmatmul.mubr.f32.gmra.mxu0 %v2467
    %v2553 = vpop.f32.mrf.mxu0
    %v2554 = vadd.f32 0.0, %v2553
    %v2555 = vpop.f32.mrf.mxu0
    %v2556 = vadd.f32 0.0, %v2555
    %2557 = vdwg.mxu0
    %v2559 = vsel %vm1292, %v2433, 0
    %v2562 = vsel %vm1292, %v2434, 0
    %v2565 = vsel %vm1292, %v2435, 0
    %v2568 = vsel %vm1292, %v2436, 0
    %2570 = vmatprep.subr.mxu0 0.0
    %2571 = vmatpush1.msra.mxu0 0.0
    %2572 = vmatprep.subr.mxu0 0.0
    %2573 = vmatpush1.msra.mxu0 0.0
    %2574 = vmatprep.subr.mxu0 0.0
    %2575 = vmatpush1.msra.mxu0 0.0
    %2576 = vmatprep.subr.mxu0 0.0
    %2577 = vmatpush1.msra.mxu0 0.0
    %2578 = vmatprep.subr.mxu0 0.0
    %2579 = vmatpush1.msra.mxu0 0.0
    %2580 = vmatprep.subr.mxu0 0.0
    %2581 = vmatpush1.msra.mxu0 0.0
    %2582 = vmatprep.subr.mxu0 0.0
    %2583 = vmatpush1.msra.mxu0 0.0
    %2584 = vmatprep.subr.mxu0 0.0
    %2585 = vmatpush1.msra.mxu0 0.0
    %2586 = vmatprep.subr.mxu0 0.0
    %2587 = vmatpush1.msra.mxu0 0.0
    %2588 = vmatprep.subr.mxu0 0.0
    %2589 = vmatpush1.msra.mxu0 0.0
    %2590 = vmatprep.subr.mxu0 0.0
    %2591 = vmatpush1.msra.mxu0 0.0
    %2592 = vmatprep.subr.mxu0 0.0
    %2593 = vmatpush1.msra.mxu0 0.0
    %2594 = vmatprep.subr.mxu0 %v2444
    %2595 = vmatpush1.msra.mxu0 %v2443
    %2596 = vmatprep.subr.mxu0 %v2442
    %2597 = vmatpush1.msra.mxu0 %v2441
    %2598 = vmatprep.subr.mxu0 %v2440
    %2599 = vmatpush1.msra.mxu0 %v2439
    %2600 = vmatprep.subr.mxu0 %v2438
    %2601 = vmatpush1.msra.mxu0 %v2437
    %2602 = vmatprep.subr.mxu0 0.0
    %2603 = vmatpush2.msra.mxu0 0.0
    %2604 = vmatprep.subr.mxu0 0.0
    %2605 = vmatpush2.msra.mxu0 0.0
    %2606 = vmatprep.subr.mxu0 0.0
    %2607 = vmatpush2.msra.mxu0 0.0
    %2608 = vmatprep.subr.mxu0 0.0
    %2609 = vmatpush2.msra.mxu0 0.0
    %2610 = vmatprep.subr.mxu0 0.0
    %2611 = vmatpush2.msra.mxu0 0.0
    %2612 = vmatprep.subr.mxu0 0.0
    %2613 = vmatpush2.msra.mxu0 0.0
    %2614 = vmatprep.subr.mxu0 0.0
    %2615 = vmatpush2.msra.mxu0 0.0
    %2616 = vmatprep.subr.mxu0 0.0
    %2617 = vmatpush2.msra.mxu0 0.0
    %2618 = vmatprep.subr.mxu0 0.0
    %2619 = vmatpush2.msra.mxu0 0.0
    %2620 = vmatprep.subr.mxu0 0.0
    %2621 = vmatpush2.msra.mxu0 0.0
    %2622 = vmatprep.subr.mxu0 0.0
    %2623 = vmatpush2.msra.mxu0 0.0
    %2624 = vmatprep.subr.mxu0 0.0
    %2625 = vmatpush2.msra.mxu0 0.0
    %2626 = vmatprep.subr.mxu0 0.0
    %2627 = vmatpush2.msra.mxu0 0.0
    %2628 = vmatprep.subr.mxu0 0.0
    %2629 = vmatpush2.msra.mxu0 0.0
    %2630 = vmatprep.subr.mxu0 0.0
    %2631 = vmatpush2.msra.mxu0 0.0
    %2632 = vmatprep.subr.mxu0 0.0
    %2633 = vmatpush2.msra.mxu0 0.0
    %2634 = vmatprep.mubr.f32.mxu0 0.0
    %2635 = vmatmul.mubr.f32.gmra.mxu0 %v2559
    %v2636 = vpop.f32.mrf.mxu0
    %v2637 = vadd.f32 %v2536, %v2636
    %v2638 = vpop.f32.mrf.mxu0
    %v2639 = vadd.f32 %v2538, %v2638
    %2640 = vmatprep.mubr.f32.mxu0 0.0
    %2641 = vmatmul.mubr.f32.gmra.mxu0 %v2562
    %v2642 = vpop.f32.mrf.mxu0
    %v2643 = vadd.f32 %v2542, %v2642
    %v2644 = vpop.f32.mrf.mxu0
    %v2645 = vadd.f32 %v2544, %v2644
    %2646 = vmatprep.mubr.f32.mxu0 0.0
    %2647 = vmatmul.mubr.f32.gmra.mxu0 %v2565
    %v2648 = vpop.f32.mrf.mxu0
    %v2649 = vadd.f32 %v2548, %v2648
    %v2650 = vpop.f32.mrf.mxu0
    %v2651 = vadd.f32 %v2550, %v2650
    %2652 = vmatprep.mubr.f32.mxu0 0.0
    %2653 = vmatmul.mubr.f32.gmra.mxu0 %v2568
    %v2654 = vpop.f32.mrf.mxu0
    %v2655 = vadd.f32 %v2554, %v2654
    %v2656 = vpop.f32.mrf.mxu0
    %v2657 = vadd.f32 %v2556, %v2656
    %2658 = vdwg.mxu0
    %v2659 = vld [vmem:[%s1495] sm:$0xff]
    %v2660 = vld [vmem:[%s1495 + $0x8] sm:$0xff]
    %v2661 = vld [vmem:[%s1495 + $0x10] sm:$0xff]
    %v2662 = vld [vmem:[%s1495 + $0x18] sm:$0xff]
    %v2663 = vld [vmem:[%s796] sm:$0xff]
    %v2664 = vld [vmem:[%s796 + $0x8] sm:$0xff]
    %v2665 = vld [vmem:[%s796 + $0x10] sm:$0xff]
    %v2666 = vld [vmem:[%s796 + $0x18] sm:$0xff]
    %v2667 = vld [vmem:[%s796 + $0x20] sm:$0xff]
    %v2668 = vld [vmem:[%s796 + $0x28] sm:$0xff]
    %v2669 = vld [vmem:[%s796 + $0x30] sm:$0xff]
    %v2670 = vld [vmem:[%s796 + $0x38] sm:$0xff]
    %v2672 = vsel %vm1292, %v2659, 0
    %v2675 = vsel %vm1292, %v2660, 0
    %v2678 = vsel %vm1292, %v2661, 0
    %v2681 = vsel %vm1292, %v2662, 0
    %2683 = vmatprep.subr.mxu0 0.0
    %2684 = vmatpush1.msra.mxu0 0.0
    %2685 = vmatprep.subr.mxu0 0.0
    %2686 = vmatpush1.msra.mxu0 0.0
    %2687 = vmatprep.subr.mxu0 0.0
    %2688 = vmatpush1.msra.mxu0 0.0
    %2689 = vmatprep.subr.mxu0 0.0
    %2690 = vmatpush1.msra.mxu0 0.0
    %2691 = vmatprep.subr.mxu0 0.0
    %2692 = vmatpush1.msra.mxu0 0.0
    %2693 = vmatprep.subr.mxu0 0.0
    %2694 = vmatpush1.msra.mxu0 0.0
    %2695 = vmatprep.subr.mxu0 0.0
    %2696 = vmatpush1.msra.mxu0 0.0
    %2697 = vmatprep.subr.mxu0 0.0
    %2698 = vmatpush1.msra.mxu0 0.0
    %2699 = vmatprep.subr.mxu0 0.0
    %2700 = vmatpush1.msra.mxu0 0.0
    %2701 = vmatprep.subr.mxu0 0.0
    %2702 = vmatpush1.msra.mxu0 0.0
    %2703 = vmatprep.subr.mxu0 0.0
    %2704 = vmatpush1.msra.mxu0 0.0
    %2705 = vmatprep.subr.mxu0 0.0
    %2706 = vmatpush1.msra.mxu0 0.0
    %2707 = vmatprep.subr.mxu0 %v2670
    %2708 = vmatpush1.msra.mxu0 %v2669
    %2709 = vmatprep.subr.mxu0 %v2668
    %2710 = vmatpush1.msra.mxu0 %v2667
    %2711 = vmatprep.subr.mxu0 %v2666
    %2712 = vmatpush1.msra.mxu0 %v2665
    %2713 = vmatprep.subr.mxu0 %v2664
    %2714 = vmatpush1.msra.mxu0 %v2663
    %2715 = vmatprep.subr.mxu0 0.0
    %2716 = vmatpush2.msra.mxu0 0.0
    %2717 = vmatprep.subr.mxu0 0.0
    %2718 = vmatpush2.msra.mxu0 0.0
    %2719 = vmatprep.subr.mxu0 0.0
    %2720 = vmatpush2.msra.mxu0 0.0
    %2721 = vmatprep.subr.mxu0 0.0
    %2722 = vmatpush2.msra.mxu0 0.0
    %2723 = vmatprep.subr.mxu0 0.0
    %2724 = vmatpush2.msra.mxu0 0.0
    %2725 = vmatprep.subr.mxu0 0.0
    %2726 = vmatpush2.msra.mxu0 0.0
    %2727 = vmatprep.subr.mxu0 0.0
    %2728 = vmatpush2.msra.mxu0 0.0
    %2729 = vmatprep.subr.mxu0 0.0
    %2730 = vmatpush2.msra.mxu0 0.0
    %2731 = vmatprep.subr.mxu0 0.0
    %2732 = vmatpush2.msra.mxu0 0.0
    %2733 = vmatprep.subr.mxu0 0.0
    %2734 = vmatpush2.msra.mxu0 0.0
    %2735 = vmatprep.subr.mxu0 0.0
    %2736 = vmatpush2.msra.mxu0 0.0
    %2737 = vmatprep.subr.mxu0 0.0
    %2738 = vmatpush2.msra.mxu0 0.0
    %2739 = vmatprep.subr.mxu0 0.0
    %2740 = vmatpush2.msra.mxu0 0.0
    %2741 = vmatprep.subr.mxu0 0.0
    %2742 = vmatpush2.msra.mxu0 0.0
    %2743 = vmatprep.subr.mxu0 0.0
    %2744 = vmatpush2.msra.mxu0 0.0
    %2745 = vmatprep.subr.mxu0 0.0
    %2746 = vmatpush2.msra.mxu0 0.0
    %2747 = vmatprep.mubr.f32.mxu0 0.0
    %2748 = vmatmul.mubr.f32.gmra.mxu0 %v2672
    %v2749 = vpop.f32.mrf.mxu0
    %v2750 = vadd.f32 0.0, %v2749
    %v2751 = vpop.f32.mrf.mxu0
    %v2752 = vadd.f32 0.0, %v2751
    %2753 = vmatprep.mubr.f32.mxu0 0.0
    %2754 = vmatmul.mubr.f32.gmra.mxu0 %v2675
    %v2755 = vpop.f32.mrf.mxu0
    %v2756 = vadd.f32 0.0, %v2755
    %v2757 = vpop.f32.mrf.mxu0
    %v2758 = vadd.f32 0.0, %v2757
    %2759 = vmatprep.mubr.f32.mxu0 0.0
    %2760 = vmatmul.mubr.f32.gmra.mxu0 %v2678
    %v2761 = vpop.f32.mrf.mxu0
    %v2762 = vadd.f32 0.0, %v2761
    %v2763 = vpop.f32.mrf.mxu0
    %v2764 = vadd.f32 0.0, %v2763
    %2765 = vmatprep.mubr.f32.mxu0 0.0
    %2766 = vmatmul.mubr.f32.gmra.mxu0 %v2681
    %v2767 = vpop.f32.mrf.mxu0
    %v2768 = vadd.f32 0.0, %v2767
    %v2769 = vpop.f32.mrf.mxu0
    %v2770 = vadd.f32 0.0, %v2769
    %2771 = vdwg.mxu0
    %v2772 = vadd.f32 %v2637, %v2750
    %v2773 = vadd.f32 %v2639, %v2752
    %v2774 = vadd.f32 %v2643, %v2756
    %v2775 = vadd.f32 %v2645, %v2758
    %v2776 = vadd.f32 %v2649, %v2762
    %v2777 = vadd.f32 %v2651, %v2764
    %v2778 = vadd.f32 %v2655, %v2768
    %v2779 = vadd.f32 %v2657, %v2770
    %v2780 = vld [vmem:[%s4] sm:$0xff]
    %v2781 = vld [vmem:[%s4 + $0x8] sm:$0xff]
    %v2782 = vld [vmem:[%s4 + $0x10] sm:$0xff]
    %v2783 = vld [vmem:[%s4 + $0x18] sm:$0xff]
    %2785 = vset.pattern.permute.xlu0 0
    %2786 = vperm.xlu0 %2785, %v2780
    %v2787 = vpop.permute.xlu0 %2786
    %2790 = vset.pattern.permute.xlu0 0
    %2791 = vperm.xlu0 %2790, %v2781
    %v2792 = vpop.permute.xlu0 %2791
    %2795 = vset.pattern.permute.xlu0 0
    %2796 = vperm.xlu0 %2795, %v2782
    %v2797 = vpop.permute.xlu0 %2796
    %2800 = vset.pattern.permute.xlu0 0
    %2801 = vperm.xlu0 %2800, %v2783
    %v2802 = vpop.permute.xlu0 %2801
    %v2804 = vadd.f32 %v2772, %v2787
    %v2805 = vadd.f32 %v2773, %v2787
    %v2806 = vadd.f32 %v2774, %v2792
    %v2807 = vadd.f32 %v2775, %v2792
    %v2808 = vadd.f32 %v2776, %v2797
    %v2809 = vadd.f32 %v2777, %v2797
    %v2810 = vadd.f32 %v2778, %v2802
    %v2811 = vadd.f32 %v2779, %v2802
    %s2812 = scalar_lea.vmem [#allocation6], 192
    %2813 = vst [vmem:[%s2812] sm:$0xff] %v2804
    %2814 = vst [vmem:[%s2812 + $0x8] sm:$0xff] %v2805
    %2815 = vst [vmem:[%s2812 + $0x10] sm:$0xff] %v2806
    %2816 = vst [vmem:[%s2812 + $0x18] sm:$0xff] %v2807
    %2817 = vst [vmem:[%s2812 + $0x20] sm:$0xff] %v2808
    %2818 = vst [vmem:[%s2812 + $0x28] sm:$0xff] %v2809
    %2819 = vst [vmem:[%s2812 + $0x30] sm:$0xff] %v2810
    %2820 = vst [vmem:[%s2812 + $0x38] sm:$0xff] %v2811
    %v2821 = vld [vmem:[%s3] sm:$0xff]
    %v2822 = vld [vmem:[%s3 + $0x8] sm:$0xff]
    %v2823 = vld [vmem:[%s3 + $0x10] sm:$0xff]
    %v2824 = vld [vmem:[%s3 + $0x18] sm:$0xff]
    %v2825 = vld [vmem:[%s642] sm:$0xff]
    %v2826 = vld [vmem:[%s642 + $0x8] sm:$0xff]
    %v2827 = vld [vmem:[%s642 + $0x10] sm:$0xff]
    %v2828 = vld [vmem:[%s642 + $0x18] sm:$0xff]
    %v2829 = vld [vmem:[%s642 + $0x20] sm:$0xff]
    %v2830 = vld [vmem:[%s642 + $0x28] sm:$0xff]
    %v2831 = vld [vmem:[%s642 + $0x30] sm:$0xff]
    %v2832 = vld [vmem:[%s642 + $0x38] sm:$0xff]
    %v2833 = vld [vmem:[%s1279] sm:$0xff]
    %v2834 = vld [vmem:[%s1279 + $0x8] sm:$0xff]
    %v2835 = vld [vmem:[%s1279 + $0x10] sm:$0xff]
    %v2836 = vld [vmem:[%s1279 + $0x18] sm:$0xff]
    %v2837 = vld [vmem:[%s796] sm:$0xff]
    %v2838 = vld [vmem:[%s796 + $0x8] sm:$0xff]
    %v2839 = vld [vmem:[%s796 + $0x10] sm:$0xff]
    %v2840 = vld [vmem:[%s796 + $0x18] sm:$0xff]
    %v2841 = vld [vmem:[%s796 + $0x20] sm:$0xff]
    %v2842 = vld [vmem:[%s796 + $0x28] sm:$0xff]
    %v2843 = vld [vmem:[%s796 + $0x30] sm:$0xff]
    %v2844 = vld [vmem:[%s796 + $0x38] sm:$0xff]
    %v2846 = vsel %vm1292, %v2833, 0
    %v2849 = vsel %vm1292, %v2834, 0
    %v2852 = vsel %vm1292, %v2835, 0
    %v2855 = vsel %vm1292, %v2836, 0
    %2857 = vmatprep.subr.mxu0 0.0
    %2858 = vmatpush1.msra.mxu0 0.0
    %2859 = vmatprep.subr.mxu0 0.0
    %2860 = vmatpush1.msra.mxu0 0.0
    %2861 = vmatprep.subr.mxu0 0.0
    %2862 = vmatpush1.msra.mxu0 0.0
    %2863 = vmatprep.subr.mxu0 0.0
    %2864 = vmatpush1.msra.mxu0 0.0
    %2865 = vmatprep.subr.mxu0 0.0
    %2866 = vmatpush1.msra.mxu0 0.0
    %2867 = vmatprep.subr.mxu0 0.0
    %2868 = vmatpush1.msra.mxu0 0.0
    %2869 = vmatprep.subr.mxu0 0.0
    %2870 = vmatpush1.msra.mxu0 0.0
    %2871 = vmatprep.subr.mxu0 0.0
    %2872 = vmatpush1.msra.mxu0 0.0
    %2873 = vmatprep.subr.mxu0 0.0
    %2874 = vmatpush1.msra.mxu0 0.0
    %2875 = vmatprep.subr.mxu0 0.0
    %2876 = vmatpush1.msra.mxu0 0.0
    %2877 = vmatprep.subr.mxu0 0.0
    %2878 = vmatpush1.msra.mxu0 0.0
    %2879 = vmatprep.subr.mxu0 0.0
    %2880 = vmatpush1.msra.mxu0 0.0
    %2881 = vmatprep.subr.mxu0 %v2844
    %2882 = vmatpush1.msra.mxu0 %v2843
    %2883 = vmatprep.subr.mxu0 %v2842
    %2884 = vmatpush1.msra.mxu0 %v2841
    %2885 = vmatprep.subr.mxu0 %v2840
    %2886 = vmatpush1.msra.mxu0 %v2839
    %2887 = vmatprep.subr.mxu0 %v2838
    %2888 = vmatpush1.msra.mxu0 %v2837
    %2889 = vmatprep.subr.mxu0 0.0
    %2890 = vmatpush2.msra.mxu0 0.0
    %2891 = vmatprep.subr.mxu0 0.0
    %2892 = vmatpush2.msra.mxu0 0.0
    %2893 = vmatprep.subr.mxu0 0.0
    %2894 = vmatpush2.msra.mxu0 0.0
    %2895 = vmatprep.subr.mxu0 0.0
    %2896 = vmatpush2.msra.mxu0 0.0
    %2897 = vmatprep.subr.mxu0 0.0
    %2898 = vmatpush2.msra.mxu0 0.0
    %2899 = vmatprep.subr.mxu0 0.0
    %2900 = vmatpush2.msra.mxu0 0.0
    %2901 = vmatprep.subr.mxu0 0.0
    %2902 = vmatpush2.msra.mxu0 0.0
    %2903 = vmatprep.subr.mxu0 0.0
    %2904 = vmatpush2.msra.mxu0 0.0
    %2905 = vmatprep.subr.mxu0 0.0
    %2906 = vmatpush2.msra.mxu0 0.0
    %2907 = vmatprep.subr.mxu0 0.0
    %2908 = vmatpush2.msra.mxu0 0.0
    %2909 = vmatprep.subr.mxu0 0.0
    %2910 = vmatpush2.msra.mxu0 0.0
    %2911 = vmatprep.subr.mxu0 0.0
    %2912 = vmatpush2.msra.mxu0 0.0
    %2913 = vmatprep.subr.mxu0 0.0
    %2914 = vmatpush2.msra.mxu0 0.0
    %2915 = vmatprep.subr.mxu0 0.0
    %2916 = vmatpush2.msra.mxu0 0.0
    %2917 = vmatprep.subr.mxu0 0.0
    %2918 = vmatpush2.msra.mxu0 0.0
    %2919 = vmatprep.subr.mxu0 0.0
    %2920 = vmatpush2.msra.mxu0 0.0
    %2921 = vmatprep.mubr.f32.mxu0 0.0
    %2922 = vmatmul.mubr.f32.gmra.mxu0 %v2846
    %v2923 = vpop.f32.mrf.mxu0
    %v2924 = vadd.f32 0.0, %v2923
    %v2925 = vpop.f32.mrf.mxu0
    %v2926 = vadd.f32 0.0, %v2925
    %2927 = vmatprep.mubr.f32.mxu0 0.0
    %2928 = vmatmul.mubr.f32.gmra.mxu0 %v2849
    %v2929 = vpop.f32.mrf.mxu0
    %v2930 = vadd.f32 0.0, %v2929
    %v2931 = vpop.f32.mrf.mxu0
    %v2932 = vadd.f32 0.0, %v2931
    %2933 = vmatprep.mubr.f32.mxu0 0.0
    %2934 = vmatmul.mubr.f32.gmra.mxu0 %v2852
    %v2935 = vpop.f32.mrf.mxu0
    %v2936 = vadd.f32 0.0, %v2935
    %v2937 = vpop.f32.mrf.mxu0
    %v2938 = vadd.f32 0.0, %v2937
    %2939 = vmatprep.mubr.f32.mxu0 0.0
    %2940 = vmatmul.mubr.f32.gmra.mxu0 %v2855
    %v2941 = vpop.f32.mrf.mxu0
    %v2942 = vadd.f32 0.0, %v2941
    %v2943 = vpop.f32.mrf.mxu0
    %v2944 = vadd.f32 0.0, %v2943
    %2945 = vdwg.mxu0
    %v2947 = vsel %vm1292, %v2821, 0
    %v2950 = vsel %vm1292, %v2822, 0
    %v2953 = vsel %vm1292, %v2823, 0
    %v2956 = vsel %vm1292, %v2824, 0
    %2958 = vmatprep.subr.mxu0 0.0
    %2959 = vmatpush1.msra.mxu0 0.0
    %2960 = vmatprep.subr.mxu0 0.0
    %2961 = vmatpush1.msra.mxu0 0.0
    %2962 = vmatprep.subr.mxu0 0.0
    %2963 = vmatpush1.msra.mxu0 0.0
    %2964 = vmatprep.subr.mxu0 0.0
    %2965 = vmatpush1.msra.mxu0 0.0
    %2966 = vmatprep.subr.mxu0 0.0
    %2967 = vmatpush1.msra.mxu0 0.0
    %2968 = vmatprep.subr.mxu0 0.0
    %2969 = vmatpush1.msra.mxu0 0.0
    %2970 = vmatprep.subr.mxu0 0.0
    %2971 = vmatpush1.msra.mxu0 0.0
    %2972 = vmatprep.subr.mxu0 0.0
    %2973 = vmatpush1.msra.mxu0 0.0
    %2974 = vmatprep.subr.mxu0 0.0
    %2975 = vmatpush1.msra.mxu0 0.0
    %2976 = vmatprep.subr.mxu0 0.0
    %2977 = vmatpush1.msra.mxu0 0.0
    %2978 = vmatprep.subr.mxu0 0.0
    %2979 = vmatpush1.msra.mxu0 0.0
    %2980 = vmatprep.subr.mxu0 0.0
    %2981 = vmatpush1.msra.mxu0 0.0
    %2982 = vmatprep.subr.mxu0 %v2832
    %2983 = vmatpush1.msra.mxu0 %v2831
    %2984 = vmatprep.subr.mxu0 %v2830
    %2985 = vmatpush1.msra.mxu0 %v2829
    %2986 = vmatprep.subr.mxu0 %v2828
    %2987 = vmatpush1.msra.mxu0 %v2827
    %2988 = vmatprep.subr.mxu0 %v2826
    %2989 = vmatpush1.msra.mxu0 %v2825
    %2990 = vmatprep.subr.mxu0 0.0
    %2991 = vmatpush2.msra.mxu0 0.0
    %2992 = vmatprep.subr.mxu0 0.0
    %2993 = vmatpush2.msra.mxu0 0.0
    %2994 = vmatprep.subr.mxu0 0.0
    %2995 = vmatpush2.msra.mxu0 0.0
    %2996 = vmatprep.subr.mxu0 0.0
    %2997 = vmatpush2.msra.mxu0 0.0
    %2998 = vmatprep.subr.mxu0 0.0
    %2999 = vmatpush2.msra.mxu0 0.0
    %3000 = vmatprep.subr.mxu0 0.0
    %3001 = vmatpush2.msra.mxu0 0.0
    %3002 = vmatprep.subr.mxu0 0.0
    %3003 = vmatpush2.msra.mxu0 0.0
    %3004 = vmatprep.subr.mxu0 0.0
    %3005 = vmatpush2.msra.mxu0 0.0
    %3006 = vmatprep.subr.mxu0 0.0
    %3007 = vmatpush2.msra.mxu0 0.0
    %3008 = vmatprep.subr.mxu0 0.0
    %3009 = vmatpush2.msra.mxu0 0.0
    %3010 = vmatprep.subr.mxu0 0.0
    %3011 = vmatpush2.msra.mxu0 0.0
    %3012 = vmatprep.subr.mxu0 0.0
    %3013 = vmatpush2.msra.mxu0 0.0
    %3014 = vmatprep.subr.mxu0 0.0
    %3015 = vmatpush2.msra.mxu0 0.0
    %3016 = vmatprep.subr.mxu0 0.0
    %3017 = vmatpush2.msra.mxu0 0.0
    %3018 = vmatprep.subr.mxu0 0.0
    %3019 = vmatpush2.msra.mxu0 0.0
    %3020 = vmatprep.subr.mxu0 0.0
    %3021 = vmatpush2.msra.mxu0 0.0
    %3022 = vmatprep.mubr.f32.mxu0 0.0
    %3023 = vmatmul.mubr.f32.gmra.mxu0 %v2947
    %v3024 = vpop.f32.mrf.mxu0
    %v3025 = vadd.f32 %v2924, %v3024
    %v3026 = vpop.f32.mrf.mxu0
    %v3027 = vadd.f32 %v2926, %v3026
    %3028 = vmatprep.mubr.f32.mxu0 0.0
    %3029 = vmatmul.mubr.f32.gmra.mxu0 %v2950
    %v3030 = vpop.f32.mrf.mxu0
    %v3031 = vadd.f32 %v2930, %v3030
    %v3032 = vpop.f32.mrf.mxu0
    %v3033 = vadd.f32 %v2932, %v3032
    %3034 = vmatprep.mubr.f32.mxu0 0.0
    %3035 = vmatmul.mubr.f32.gmra.mxu0 %v2953
    %v3036 = vpop.f32.mrf.mxu0
    %v3037 = vadd.f32 %v2936, %v3036
    %v3038 = vpop.f32.mrf.mxu0
    %v3039 = vadd.f32 %v2938, %v3038
    %3040 = vmatprep.mubr.f32.mxu0 0.0
    %3041 = vmatmul.mubr.f32.gmra.mxu0 %v2956
    %v3042 = vpop.f32.mrf.mxu0
    %v3043 = vadd.f32 %v2942, %v3042
    %v3044 = vpop.f32.mrf.mxu0
    %v3045 = vadd.f32 %v2944, %v3044
    %3046 = vdwg.mxu0
    %v3047 = vld [vmem:[%s1495] sm:$0xff]
    %v3048 = vld [vmem:[%s1495 + $0x8] sm:$0xff]
    %v3049 = vld [vmem:[%s1495 + $0x10] sm:$0xff]
    %v3050 = vld [vmem:[%s1495 + $0x18] sm:$0xff]
    %v3051 = vld [vmem:[%s950] sm:$0xff]
    %v3052 = vld [vmem:[%s950 + $0x8] sm:$0xff]
    %v3053 = vld [vmem:[%s950 + $0x10] sm:$0xff]
    %v3054 = vld [vmem:[%s950 + $0x18] sm:$0xff]
    %v3055 = vld [vmem:[%s950 + $0x20] sm:$0xff]
    %v3056 = vld [vmem:[%s950 + $0x28] sm:$0xff]
    %v3057 = vld [vmem:[%s950 + $0x30] sm:$0xff]
    %v3058 = vld [vmem:[%s950 + $0x38] sm:$0xff]
    %v3060 = vsel %vm1292, %v3047, 0
    %v3063 = vsel %vm1292, %v3048, 0
    %v3066 = vsel %vm1292, %v3049, 0
    %v3069 = vsel %vm1292, %v3050, 0
    %3071 = vmatprep.subr.mxu0 0.0
    %3072 = vmatpush1.msra.mxu0 0.0
    %3073 = vmatprep.subr.mxu0 0.0
    %3074 = vmatpush1.msra.mxu0 0.0
    %3075 = vmatprep.subr.mxu0 0.0
    %3076 = vmatpush1.msra.mxu0 0.0
    %3077 = vmatprep.subr.mxu0 0.0
    %3078 = vmatpush1.msra.mxu0 0.0
    %3079 = vmatprep.subr.mxu0 0.0
    %3080 = vmatpush1.msra.mxu0 0.0
    %3081 = vmatprep.subr.mxu0 0.0
    %3082 = vmatpush1.msra.mxu0 0.0
    %3083 = vmatprep.subr.mxu0 0.0
    %3084 = vmatpush1.msra.mxu0 0.0
    %3085 = vmatprep.subr.mxu0 0.0
    %3086 = vmatpush1.msra.mxu0 0.0
    %3087 = vmatprep.subr.mxu0 0.0
    %3088 = vmatpush1.msra.mxu0 0.0
    %3089 = vmatprep.subr.mxu0 0.0
    %3090 = vmatpush1.msra.mxu0 0.0
    %3091 = vmatprep.subr.mxu0 0.0
    %3092 = vmatpush1.msra.mxu0 0.0
    %3093 = vmatprep.subr.mxu0 0.0
    %3094 = vmatpush1.msra.mxu0 0.0
    %3095 = vmatprep.subr.mxu0 %v3058
    %3096 = vmatpush1.msra.mxu0 %v3057
    %3097 = vmatprep.subr.mxu0 %v3056
    %3098 = vmatpush1.msra.mxu0 %v3055
    %3099 = vmatprep.subr.mxu0 %v3054
    %3100 = vmatpush1.msra.mxu0 %v3053
    %3101 = vmatprep.subr.mxu0 %v3052
    %3102 = vmatpush1.msra.mxu0 %v3051
    %3103 = vmatprep.subr.mxu0 0.0
    %3104 = vmatpush2.msra.mxu0 0.0
    %3105 = vmatprep.subr.mxu0 0.0
    %3106 = vmatpush2.msra.mxu0 0.0
    %3107 = vmatprep.subr.mxu0 0.0
    %3108 = vmatpush2.msra.mxu0 0.0
    %3109 = vmatprep.subr.mxu0 0.0
    %3110 = vmatpush2.msra.mxu0 0.0
    %3111 = vmatprep.subr.mxu0 0.0
    %3112 = vmatpush2.msra.mxu0 0.0
    %3113 = vmatprep.subr.mxu0 0.0
    %3114 = vmatpush2.msra.mxu0 0.0
    %3115 = vmatprep.subr.mxu0 0.0
    %3116 = vmatpush2.msra.mxu0 0.0
    %3117 = vmatprep.subr.mxu0 0.0
    %3118 = vmatpush2.msra.mxu0 0.0
    %3119 = vmatprep.subr.mxu0 0.0
    %3120 = vmatpush2.msra.mxu0 0.0
    %3121 = vmatprep.subr.mxu0 0.0
    %3122 = vmatpush2.msra.mxu0 0.0
    %3123 = vmatprep.subr.mxu0 0.0
    %3124 = vmatpush2.msra.mxu0 0.0
    %3125 = vmatprep.subr.mxu0 0.0
    %3126 = vmatpush2.msra.mxu0 0.0
    %3127 = vmatprep.subr.mxu0 0.0
    %3128 = vmatpush2.msra.mxu0 0.0
    %3129 = vmatprep.subr.mxu0 0.0
    %3130 = vmatpush2.msra.mxu0 0.0
    %3131 = vmatprep.subr.mxu0 0.0
    %3132 = vmatpush2.msra.mxu0 0.0
    %3133 = vmatprep.subr.mxu0 0.0
    %3134 = vmatpush2.msra.mxu0 0.0
    %3135 = vmatprep.mubr.f32.mxu0 0.0
    %3136 = vmatmul.mubr.f32.gmra.mxu0 %v3060
    %v3137 = vpop.f32.mrf.mxu0
    %v3138 = vadd.f32 0.0, %v3137
    %v3139 = vpop.f32.mrf.mxu0
    %v3140 = vadd.f32 0.0, %v3139
    %3141 = vmatprep.mubr.f32.mxu0 0.0
    %3142 = vmatmul.mubr.f32.gmra.mxu0 %v3063
    %v3143 = vpop.f32.mrf.mxu0
    %v3144 = vadd.f32 0.0, %v3143
    %v3145 = vpop.f32.mrf.mxu0
    %v3146 = vadd.f32 0.0, %v3145
    %3147 = vmatprep.mubr.f32.mxu0 0.0
    %3148 = vmatmul.mubr.f32.gmra.mxu0 %v3066
    %v3149 = vpop.f32.mrf.mxu0
    %v3150 = vadd.f32 0.0, %v3149
    %v3151 = vpop.f32.mrf.mxu0
    %v3152 = vadd.f32 0.0, %v3151
    %3153 = vmatprep.mubr.f32.mxu0 0.0
    %3154 = vmatmul.mubr.f32.gmra.mxu0 %v3069
    %v3155 = vpop.f32.mrf.mxu0
    %v3156 = vadd.f32 0.0, %v3155
    %v3157 = vpop.f32.mrf.mxu0
    %v3158 = vadd.f32 0.0, %v3157
    %3159 = vdwg.mxu0
    %v3160 = vadd.f32 %v3025, %v3138
    %v3161 = vadd.f32 %v3027, %v3140
    %v3162 = vadd.f32 %v3031, %v3144
    %v3163 = vadd.f32 %v3033, %v3146
    %v3164 = vadd.f32 %v3037, %v3150
    %v3165 = vadd.f32 %v3039, %v3152
    %v3166 = vadd.f32 %v3043, %v3156
    %v3167 = vadd.f32 %v3045, %v3158
    %v3168 = vld [vmem:[%s4] sm:$0xff]
    %v3169 = vld [vmem:[%s4 + $0x8] sm:$0xff]
    %v3170 = vld [vmem:[%s4 + $0x10] sm:$0xff]
    %v3171 = vld [vmem:[%s4 + $0x18] sm:$0xff]
    %3173 = vset.pattern.permute.xlu0 0
    %3174 = vperm.xlu0 %3173, %v3168
    %v3175 = vpop.permute.xlu0 %3174
    %3178 = vset.pattern.permute.xlu0 0
    %3179 = vperm.xlu0 %3178, %v3169
    %v3180 = vpop.permute.xlu0 %3179
    %3183 = vset.pattern.permute.xlu0 0
    %3184 = vperm.xlu0 %3183, %v3170
    %v3185 = vpop.permute.xlu0 %3184
    %3188 = vset.pattern.permute.xlu0 0
    %3189 = vperm.xlu0 %3188, %v3171
    %v3190 = vpop.permute.xlu0 %3189
    %v3192 = vadd.f32 %v3160, %v3175
    %v3193 = vadd.f32 %v3161, %v3175
    %v3194 = vadd.f32 %v3162, %v3180
    %v3195 = vadd.f32 %v3163, %v3180
    %v3196 = vadd.f32 %v3164, %v3185
    %v3197 = vadd.f32 %v3165, %v3185
    %v3198 = vadd.f32 %v3166, %v3190
    %v3199 = vadd.f32 %v3167, %v3190
    %s3200 = scalar_lea.vmem [#allocation6], 256
    %3201 = vst [vmem:[%s3200] sm:$0xff] %v3192
    %3202 = vst [vmem:[%s3200 + $0x8] sm:$0xff] %v3193
    %3203 = vst [vmem:[%s3200 + $0x10] sm:$0xff] %v3194
    %3204 = vst [vmem:[%s3200 + $0x18] sm:$0xff] %v3195
    %3205 = vst [vmem:[%s3200 + $0x20] sm:$0xff] %v3196
    %3206 = vst [vmem:[%s3200 + $0x28] sm:$0xff] %v3197
    %3207 = vst [vmem:[%s3200 + $0x30] sm:$0xff] %v3198
    %3208 = vst [vmem:[%s3200 + $0x38] sm:$0xff] %v3199
    %v3209 = vld [vmem:[%s3] sm:$0xff]
    %v3210 = vld [vmem:[%s3 + $0x8] sm:$0xff]
    %v3211 = vld [vmem:[%s3 + $0x10] sm:$0xff]
    %v3212 = vld [vmem:[%s3 + $0x18] sm:$0xff]
    %v3213 = vld [vmem:[%s796] sm:$0xff]
    %v3214 = vld [vmem:[%s796 + $0x8] sm:$0xff]
    %v3215 = vld [vmem:[%s796 + $0x10] sm:$0xff]
    %v3216 = vld [vmem:[%s796 + $0x18] sm:$0xff]
    %v3217 = vld [vmem:[%s796 + $0x20] sm:$0xff]
    %v3218 = vld [vmem:[%s796 + $0x28] sm:$0xff]
    %v3219 = vld [vmem:[%s796 + $0x30] sm:$0xff]
    %v3220 = vld [vmem:[%s796 + $0x38] sm:$0xff]
    %v3221 = vld [vmem:[%s1279] sm:$0xff]
    %v3222 = vld [vmem:[%s1279 + $0x8] sm:$0xff]
    %v3223 = vld [vmem:[%s1279 + $0x10] sm:$0xff]
    %v3224 = vld [vmem:[%s1279 + $0x18] sm:$0xff]
    %v3225 = vld [vmem:[%s950] sm:$0xff]
    %v3226 = vld [vmem:[%s950 + $0x8] sm:$0xff]
    %v3227 = vld [vmem:[%s950 + $0x10] sm:$0xff]
    %v3228 = vld [vmem:[%s950 + $0x18] sm:$0xff]
    %v3229 = vld [vmem:[%s950 + $0x20] sm:$0xff]
    %v3230 = vld [vmem:[%s950 + $0x28] sm:$0xff]
    %v3231 = vld [vmem:[%s950 + $0x30] sm:$0xff]
    %v3232 = vld [vmem:[%s950 + $0x38] sm:$0xff]
    %v3234 = vsel %vm1292, %v3221, 0
    %v3237 = vsel %vm1292, %v3222, 0
    %v3240 = vsel %vm1292, %v3223, 0
    %v3243 = vsel %vm1292, %v3224, 0
    %3245 = vmatprep.subr.mxu0 0.0
    %3246 = vmatpush1.msra.mxu0 0.0
    %3247 = vmatprep.subr.mxu0 0.0
    %3248 = vmatpush1.msra.mxu0 0.0
    %3249 = vmatprep.subr.mxu0 0.0
    %3250 = vmatpush1.msra.mxu0 0.0
    %3251 = vmatprep.subr.mxu0 0.0
    %3252 = vmatpush1.msra.mxu0 0.0
    %3253 = vmatprep.subr.mxu0 0.0
    %3254 = vmatpush1.msra.mxu0 0.0
    %3255 = vmatprep.subr.mxu0 0.0
    %3256 = vmatpush1.msra.mxu0 0.0
    %3257 = vmatprep.subr.mxu0 0.0
    %3258 = vmatpush1.msra.mxu0 0.0
    %3259 = vmatprep.subr.mxu0 0.0
    %3260 = vmatpush1.msra.mxu0 0.0
    %3261 = vmatprep.subr.mxu0 0.0
    %3262 = vmatpush1.msra.mxu0 0.0
    %3263 = vmatprep.subr.mxu0 0.0
    %3264 = vmatpush1.msra.mxu0 0.0
    %3265 = vmatprep.subr.mxu0 0.0
    %3266 = vmatpush1.msra.mxu0 0.0
    %3267 = vmatprep.subr.mxu0 0.0
    %3268 = vmatpush1.msra.mxu0 0.0
    %3269 = vmatprep.subr.mxu0 %v3232
    %3270 = vmatpush1.msra.mxu0 %v3231
    %3271 = vmatprep.subr.mxu0 %v3230
    %3272 = vmatpush1.msra.mxu0 %v3229
    %3273 = vmatprep.subr.mxu0 %v3228
    %3274 = vmatpush1.msra.mxu0 %v3227
    %3275 = vmatprep.subr.mxu0 %v3226
    %3276 = vmatpush1.msra.mxu0 %v3225
    %3277 = vmatprep.subr.mxu0 0.0
    %3278 = vmatpush2.msra.mxu0 0.0
    %3279 = vmatprep.subr.mxu0 0.0
    %3280 = vmatpush2.msra.mxu0 0.0
    %3281 = vmatprep.subr.mxu0 0.0
    %3282 = vmatpush2.msra.mxu0 0.0
    %3283 = vmatprep.subr.mxu0 0.0
    %3284 = vmatpush2.msra.mxu0 0.0
    %3285 = vmatprep.subr.mxu0 0.0
    %3286 = vmatpush2.msra.mxu0 0.0
    %3287 = vmatprep.subr.mxu0 0.0
    %3288 = vmatpush2.msra.mxu0 0.0
    %3289 = vmatprep.subr.mxu0 0.0
    %3290 = vmatpush2.msra.mxu0 0.0
    %3291 = vmatprep.subr.mxu0 0.0
    %3292 = vmatpush2.msra.mxu0 0.0
    %3293 = vmatprep.subr.mxu0 0.0
    %3294 = vmatpush2.msra.mxu0 0.0
    %3295 = vmatprep.subr.mxu0 0.0
    %3296 = vmatpush2.msra.mxu0 0.0
    %3297 = vmatprep.subr.mxu0 0.0
    %3298 = vmatpush2.msra.mxu0 0.0
    %3299 = vmatprep.subr.mxu0 0.0
    %3300 = vmatpush2.msra.mxu0 0.0
    %3301 = vmatprep.subr.mxu0 0.0
    %3302 = vmatpush2.msra.mxu0 0.0
    %3303 = vmatprep.subr.mxu0 0.0
    %3304 = vmatpush2.msra.mxu0 0.0
    %3305 = vmatprep.subr.mxu0 0.0
    %3306 = vmatpush2.msra.mxu0 0.0
    %3307 = vmatprep.subr.mxu0 0.0
    %3308 = vmatpush2.msra.mxu0 0.0
    %3309 = vmatprep.mubr.f32.mxu0 0.0
    %3310 = vmatmul.mubr.f32.gmra.mxu0 %v3234
    %v3311 = vpop.f32.mrf.mxu0
    %v3312 = vadd.f32 0.0, %v3311
    %v3313 = vpop.f32.mrf.mxu0
    %v3314 = vadd.f32 0.0, %v3313
    %3315 = vmatprep.mubr.f32.mxu0 0.0
    %3316 = vmatmul.mubr.f32.gmra.mxu0 %v3237
    %v3317 = vpop.f32.mrf.mxu0
    %v3318 = vadd.f32 0.0, %v3317
    %v3319 = vpop.f32.mrf.mxu0
    %v3320 = vadd.f32 0.0, %v3319
    %3321 = vmatprep.mubr.f32.mxu0 0.0
    %3322 = vmatmul.mubr.f32.gmra.mxu0 %v3240
    %v3323 = vpop.f32.mrf.mxu0
    %v3324 = vadd.f32 0.0, %v3323
    %v3325 = vpop.f32.mrf.mxu0
    %v3326 = vadd.f32 0.0, %v3325
    %3327 = vmatprep.mubr.f32.mxu0 0.0
    %3328 = vmatmul.mubr.f32.gmra.mxu0 %v3243
    %v3329 = vpop.f32.mrf.mxu0
    %v3330 = vadd.f32 0.0, %v3329
    %v3331 = vpop.f32.mrf.mxu0
    %v3332 = vadd.f32 0.0, %v3331
    %3333 = vdwg.mxu0
    %v3335 = vsel %vm1292, %v3209, 0
    %v3338 = vsel %vm1292, %v3210, 0
    %v3341 = vsel %vm1292, %v3211, 0
    %v3344 = vsel %vm1292, %v3212, 0
    %3346 = vmatprep.subr.mxu0 0.0
    %3347 = vmatpush1.msra.mxu0 0.0
    %3348 = vmatprep.subr.mxu0 0.0
    %3349 = vmatpush1.msra.mxu0 0.0
    %3350 = vmatprep.subr.mxu0 0.0
    %3351 = vmatpush1.msra.mxu0 0.0
    %3352 = vmatprep.subr.mxu0 0.0
    %3353 = vmatpush1.msra.mxu0 0.0
    %3354 = vmatprep.subr.mxu0 0.0
    %3355 = vmatpush1.msra.mxu0 0.0
    %3356 = vmatprep.subr.mxu0 0.0
    %3357 = vmatpush1.msra.mxu0 0.0
    %3358 = vmatprep.subr.mxu0 0.0
    %3359 = vmatpush1.msra.mxu0 0.0
    %3360 = vmatprep.subr.mxu0 0.0
    %3361 = vmatpush1.msra.mxu0 0.0
    %3362 = vmatprep.subr.mxu0 0.0
    %3363 = vmatpush1.msra.mxu0 0.0
    %3364 = vmatprep.subr.mxu0 0.0
    %3365 = vmatpush1.msra.mxu0 0.0
    %3366 = vmatprep.subr.mxu0 0.0
    %3367 = vmatpush1.msra.mxu0 0.0
    %3368 = vmatprep.subr.mxu0 0.0
    %3369 = vmatpush1.msra.mxu0 0.0
    %3370 = vmatprep.subr.mxu0 %v3220
    %3371 = vmatpush1.msra.mxu0 %v3219
    %3372 = vmatprep.subr.mxu0 %v3218
    %3373 = vmatpush1.msra.mxu0 %v3217
    %3374 = vmatprep.subr.mxu0 %v3216
    %3375 = vmatpush1.msra.mxu0 %v3215
    %3376 = vmatprep.subr.mxu0 %v3214
    %3377 = vmatpush1.msra.mxu0 %v3213
    %3378 = vmatprep.subr.mxu0 0.0
    %3379 = vmatpush2.msra.mxu0 0.0
    %3380 = vmatprep.subr.mxu0 0.0
    %3381 = vmatpush2.msra.mxu0 0.0
    %3382 = vmatprep.subr.mxu0 0.0
    %3383 = vmatpush2.msra.mxu0 0.0
    %3384 = vmatprep.subr.mxu0 0.0
    %3385 = vmatpush2.msra.mxu0 0.0
    %3386 = vmatprep.subr.mxu0 0.0
    %3387 = vmatpush2.msra.mxu0 0.0
    %3388 = vmatprep.subr.mxu0 0.0
    %3389 = vmatpush2.msra.mxu0 0.0
    %3390 = vmatprep.subr.mxu0 0.0
    %3391 = vmatpush2.msra.mxu0 0.0
    %3392 = vmatprep.subr.mxu0 0.0
    %3393 = vmatpush2.msra.mxu0 0.0
    %3394 = vmatprep.subr.mxu0 0.0
    %3395 = vmatpush2.msra.mxu0 0.0
    %3396 = vmatprep.subr.mxu0 0.0
    %3397 = vmatpush2.msra.mxu0 0.0
    %3398 = vmatprep.subr.mxu0 0.0
    %3399 = vmatpush2.msra.mxu0 0.0
    %3400 = vmatprep.subr.mxu0 0.0
    %3401 = vmatpush2.msra.mxu0 0.0
    %3402 = vmatprep.subr.mxu0 0.0
    %3403 = vmatpush2.msra.mxu0 0.0
    %3404 = vmatprep.subr.mxu0 0.0
    %3405 = vmatpush2.msra.mxu0 0.0
    %3406 = vmatprep.subr.mxu0 0.0
    %3407 = vmatpush2.msra.mxu0 0.0
    %3408 = vmatprep.subr.mxu0 0.0
    %3409 = vmatpush2.msra.mxu0 0.0
    %3410 = vmatprep.mubr.f32.mxu0 0.0
    %3411 = vmatmul.mubr.f32.gmra.mxu0 %v3335
    %v3412 = vpop.f32.mrf.mxu0
    %v3413 = vadd.f32 %v3312, %v3412
    %v3414 = vpop.f32.mrf.mxu0
    %v3415 = vadd.f32 %v3314, %v3414
    %3416 = vmatprep.mubr.f32.mxu0 0.0
    %3417 = vmatmul.mubr.f32.gmra.mxu0 %v3338
    %v3418 = vpop.f32.mrf.mxu0
    %v3419 = vadd.f32 %v3318, %v3418
    %v3420 = vpop.f32.mrf.mxu0
    %v3421 = vadd.f32 %v3320, %v3420
    %3422 = vmatprep.mubr.f32.mxu0 0.0
    %3423 = vmatmul.mubr.f32.gmra.mxu0 %v3341
    %v3424 = vpop.f32.mrf.mxu0
    %v3425 = vadd.f32 %v3324, %v3424
    %v3426 = vpop.f32.mrf.mxu0
    %v3427 = vadd.f32 %v3326, %v3426
    %3428 = vmatprep.mubr.f32.mxu0 0.0
    %3429 = vmatmul.mubr.f32.gmra.mxu0 %v3344
    %v3430 = vpop.f32.mrf.mxu0
    %v3431 = vadd.f32 %v3330, %v3430
    %v3432 = vpop.f32.mrf.mxu0
    %v3433 = vadd.f32 %v3332, %v3432
    %3434 = vdwg.mxu0
    %v3435 = vld [vmem:[%s1495] sm:$0xff]
    %v3436 = vld [vmem:[%s1495 + $0x8] sm:$0xff]
    %v3437 = vld [vmem:[%s1495 + $0x10] sm:$0xff]
    %v3438 = vld [vmem:[%s1495 + $0x18] sm:$0xff]
    %v3439 = vld [vmem:[%s1104] sm:$0xff]
    %v3440 = vld [vmem:[%s1104 + $0x8] sm:$0xff]
    %v3441 = vld [vmem:[%s1104 + $0x10] sm:$0xff]
    %v3442 = vld [vmem:[%s1104 + $0x18] sm:$0xff]
    %v3443 = vld [vmem:[%s1104 + $0x20] sm:$0xff]
    %v3444 = vld [vmem:[%s1104 + $0x28] sm:$0xff]
    %v3445 = vld [vmem:[%s1104 + $0x30] sm:$0xff]
    %v3446 = vld [vmem:[%s1104 + $0x38] sm:$0xff]
    %v3448 = vsel %vm1292, %v3435, 0
    %v3451 = vsel %vm1292, %v3436, 0
    %v3454 = vsel %vm1292, %v3437, 0
    %v3457 = vsel %vm1292, %v3438, 0
    %3459 = vmatprep.subr.mxu0 0.0
    %3460 = vmatpush1.msra.mxu0 0.0
    %3461 = vmatprep.subr.mxu0 0.0
    %3462 = vmatpush1.msra.mxu0 0.0
    %3463 = vmatprep.subr.mxu0 0.0
    %3464 = vmatpush1.msra.mxu0 0.0
    %3465 = vmatprep.subr.mxu0 0.0
    %3466 = vmatpush1.msra.mxu0 0.0
    %3467 = vmatprep.subr.mxu0 0.0
    %3468 = vmatpush1.msra.mxu0 0.0
    %3469 = vmatprep.subr.mxu0 0.0
    %3470 = vmatpush1.msra.mxu0 0.0
    %3471 = vmatprep.subr.mxu0 0.0
    %3472 = vmatpush1.msra.mxu0 0.0
    %3473 = vmatprep.subr.mxu0 0.0
    %3474 = vmatpush1.msra.mxu0 0.0
    %3475 = vmatprep.subr.mxu0 0.0
    %3476 = vmatpush1.msra.mxu0 0.0
    %3477 = vmatprep.subr.mxu0 0.0
    %3478 = vmatpush1.msra.mxu0 0.0
    %3479 = vmatprep.subr.mxu0 0.0
    %3480 = vmatpush1.msra.mxu0 0.0
    %3481 = vmatprep.subr.mxu0 0.0
    %3482 = vmatpush1.msra.mxu0 0.0
    %3483 = vmatprep.subr.mxu0 %v3446
    %3484 = vmatpush1.msra.mxu0 %v3445
    %3485 = vmatprep.subr.mxu0 %v3444
    %3486 = vmatpush1.msra.mxu0 %v3443
    %3487 = vmatprep.subr.mxu0 %v3442
    %3488 = vmatpush1.msra.mxu0 %v3441
    %3489 = vmatprep.subr.mxu0 %v3440
    %3490 = vmatpush1.msra.mxu0 %v3439
    %3491 = vmatprep.subr.mxu0 0.0
    %3492 = vmatpush2.msra.mxu0 0.0
    %3493 = vmatprep.subr.mxu0 0.0
    %3494 = vmatpush2.msra.mxu0 0.0
    %3495 = vmatprep.subr.mxu0 0.0
    %3496 = vmatpush2.msra.mxu0 0.0
    %3497 = vmatprep.subr.mxu0 0.0
    %3498 = vmatpush2.msra.mxu0 0.0
    %3499 = vmatprep.subr.mxu0 0.0
    %3500 = vmatpush2.msra.mxu0 0.0
    %3501 = vmatprep.subr.mxu0 0.0
    %3502 = vmatpush2.msra.mxu0 0.0
    %3503 = vmatprep.subr.mxu0 0.0
    %3504 = vmatpush2.msra.mxu0 0.0
    %3505 = vmatprep.subr.mxu0 0.0
    %3506 = vmatpush2.msra.mxu0 0.0
    %3507 = vmatprep.subr.mxu0 0.0
    %3508 = vmatpush2.msra.mxu0 0.0
    %3509 = vmatprep.subr.mxu0 0.0
    %3510 = vmatpush2.msra.mxu0 0.0
    %3511 = vmatprep.subr.mxu0 0.0
    %3512 = vmatpush2.msra.mxu0 0.0
    %3513 = vmatprep.subr.mxu0 0.0
    %3514 = vmatpush2.msra.mxu0 0.0
    %3515 = vmatprep.subr.mxu0 0.0
    %3516 = vmatpush2.msra.mxu0 0.0
    %3517 = vmatprep.subr.mxu0 0.0
    %3518 = vmatpush2.msra.mxu0 0.0
    %3519 = vmatprep.subr.mxu0 0.0
    %3520 = vmatpush2.msra.mxu0 0.0
    %3521 = vmatprep.subr.mxu0 0.0
    %3522 = vmatpush2.msra.mxu0 0.0
    %3523 = vmatprep.mubr.f32.mxu0 0.0
    %3524 = vmatmul.mubr.f32.gmra.mxu0 %v3448
    %v3525 = vpop.f32.mrf.mxu0
    %v3526 = vadd.f32 0.0, %v3525
    %v3527 = vpop.f32.mrf.mxu0
    %v3528 = vadd.f32 0.0, %v3527
    %3529 = vmatprep.mubr.f32.mxu0 0.0
    %3530 = vmatmul.mubr.f32.gmra.mxu0 %v3451
    %v3531 = vpop.f32.mrf.mxu0
    %v3532 = vadd.f32 0.0, %v3531
    %v3533 = vpop.f32.mrf.mxu0
    %v3534 = vadd.f32 0.0, %v3533
    %3535 = vmatprep.mubr.f32.mxu0 0.0
    %3536 = vmatmul.mubr.f32.gmra.mxu0 %v3454
    %v3537 = vpop.f32.mrf.mxu0
    %v3538 = vadd.f32 0.0, %v3537
    %v3539 = vpop.f32.mrf.mxu0
    %v3540 = vadd.f32 0.0, %v3539
    %3541 = vmatprep.mubr.f32.mxu0 0.0
    %3542 = vmatmul.mubr.f32.gmra.mxu0 %v3457
    %v3543 = vpop.f32.mrf.mxu0
    %v3544 = vadd.f32 0.0, %v3543
    %v3545 = vpop.f32.mrf.mxu0
    %v3546 = vadd.f32 0.0, %v3545
    %3547 = vdwg.mxu0
    %v3548 = vadd.f32 %v3413, %v3526
    %v3549 = vadd.f32 %v3415, %v3528
    %v3550 = vadd.f32 %v3419, %v3532
    %v3551 = vadd.f32 %v3421, %v3534
    %v3552 = vadd.f32 %v3425, %v3538
    %v3553 = vadd.f32 %v3427, %v3540
    %v3554 = vadd.f32 %v3431, %v3544
    %v3555 = vadd.f32 %v3433, %v3546
    %v3556 = vld [vmem:[%s4] sm:$0xff]
    %v3557 = vld [vmem:[%s4 + $0x8] sm:$0xff]
    %v3558 = vld [vmem:[%s4 + $0x10] sm:$0xff]
    %v3559 = vld [vmem:[%s4 + $0x18] sm:$0xff]
    %3561 = vset.pattern.permute.xlu0 0
    %3562 = vperm.xlu0 %3561, %v3556
    %v3563 = vpop.permute.xlu0 %3562
    %3566 = vset.pattern.permute.xlu0 0
    %3567 = vperm.xlu0 %3566, %v3557
    %v3568 = vpop.permute.xlu0 %3567
    %3571 = vset.pattern.permute.xlu0 0
    %3572 = vperm.xlu0 %3571, %v3558
    %v3573 = vpop.permute.xlu0 %3572
    %3576 = vset.pattern.permute.xlu0 0
    %3577 = vperm.xlu0 %3576, %v3559
    %v3578 = vpop.permute.xlu0 %3577
    %v3580 = vadd.f32 %v3548, %v3563
    %v3581 = vadd.f32 %v3549, %v3563
    %v3582 = vadd.f32 %v3550, %v3568
    %v3583 = vadd.f32 %v3551, %v3568
    %v3584 = vadd.f32 %v3552, %v3573
    %v3585 = vadd.f32 %v3553, %v3573
    %v3586 = vadd.f32 %v3554, %v3578
    %v3587 = vadd.f32 %v3555, %v3578
    %s3588 = scalar_lea.vmem [#allocation6], 320
    %3589 = vst [vmem:[%s3588] sm:$0xff] %v3580
    %3590 = vst [vmem:[%s3588 + $0x8] sm:$0xff] %v3581
    %3591 = vst [vmem:[%s3588 + $0x10] sm:$0xff] %v3582
    %3592 = vst [vmem:[%s3588 + $0x18] sm:$0xff] %v3583
    %3593 = vst [vmem:[%s3588 + $0x20] sm:$0xff] %v3584
    %3594 = vst [vmem:[%s3588 + $0x28] sm:$0xff] %v3585
    %3595 = vst [vmem:[%s3588 + $0x30] sm:$0xff] %v3586
    %3596 = vst [vmem:[%s3588 + $0x38] sm:$0xff] %v3587
    %v3597 = vld [vmem:[%s3] sm:$0xff]
    %v3598 = vld [vmem:[%s3 + $0x8] sm:$0xff]
    %v3599 = vld [vmem:[%s3 + $0x10] sm:$0xff]
    %v3600 = vld [vmem:[%s3 + $0x18] sm:$0xff]
    %v3601 = vld [vmem:[%s950] sm:$0xff]
    %v3602 = vld [vmem:[%s950 + $0x8] sm:$0xff]
    %v3603 = vld [vmem:[%s950 + $0x10] sm:$0xff]
    %v3604 = vld [vmem:[%s950 + $0x18] sm:$0xff]
    %v3605 = vld [vmem:[%s950 + $0x20] sm:$0xff]
    %v3606 = vld [vmem:[%s950 + $0x28] sm:$0xff]
    %v3607 = vld [vmem:[%s950 + $0x30] sm:$0xff]
    %v3608 = vld [vmem:[%s950 + $0x38] sm:$0xff]
    %v3609 = vld [vmem:[%s1279] sm:$0xff]
    %v3610 = vld [vmem:[%s1279 + $0x8] sm:$0xff]
    %v3611 = vld [vmem:[%s1279 + $0x10] sm:$0xff]
    %v3612 = vld [vmem:[%s1279 + $0x18] sm:$0xff]
    %v3613 = vld [vmem:[%s1104] sm:$0xff]
    %v3614 = vld [vmem:[%s1104 + $0x8] sm:$0xff]
    %v3615 = vld [vmem:[%s1104 + $0x10] sm:$0xff]
    %v3616 = vld [vmem:[%s1104 + $0x18] sm:$0xff]
    %v3617 = vld [vmem:[%s1104 + $0x20] sm:$0xff]
    %v3618 = vld [vmem:[%s1104 + $0x28] sm:$0xff]
    %v3619 = vld [vmem:[%s1104 + $0x30] sm:$0xff]
    %v3620 = vld [vmem:[%s1104 + $0x38] sm:$0xff]
    %v3622 = vsel %vm1292, %v3609, 0
    %v3625 = vsel %vm1292, %v3610, 0
    %v3628 = vsel %vm1292, %v3611, 0
    %v3631 = vsel %vm1292, %v3612, 0
    %3633 = vmatprep.subr.mxu0 0.0
    %3634 = vmatpush1.msra.mxu0 0.0
    %3635 = vmatprep.subr.mxu0 0.0
    %3636 = vmatpush1.msra.mxu0 0.0
    %3637 = vmatprep.subr.mxu0 0.0
    %3638 = vmatpush1.msra.mxu0 0.0
    %3639 = vmatprep.subr.mxu0 0.0
    %3640 = vmatpush1.msra.mxu0 0.0
    %3641 = vmatprep.subr.mxu0 0.0
    %3642 = vmatpush1.msra.mxu0 0.0
    %3643 = vmatprep.subr.mxu0 0.0
    %3644 = vmatpush1.msra.mxu0 0.0
    %3645 = vmatprep.subr.mxu0 0.0
    %3646 = vmatpush1.msra.mxu0 0.0
    %3647 = vmatprep.subr.mxu0 0.0
    %3648 = vmatpush1.msra.mxu0 0.0
    %3649 = vmatprep.subr.mxu0 0.0
    %3650 = vmatpush1.msra.mxu0 0.0
    %3651 = vmatprep.subr.mxu0 0.0
    %3652 = vmatpush1.msra.mxu0 0.0
    %3653 = vmatprep.subr.mxu0 0.0
    %3654 = vmatpush1.msra.mxu0 0.0
    %3655 = vmatprep.subr.mxu0 0.0
    %3656 = vmatpush1.msra.mxu0 0.0
    %3657 = vmatprep.subr.mxu0 %v3620
    %3658 = vmatpush1.msra.mxu0 %v3619
    %3659 = vmatprep.subr.mxu0 %v3618
    %3660 = vmatpush1.msra.mxu0 %v3617
    %3661 = vmatprep.subr.mxu0 %v3616
    %3662 = vmatpush1.msra.mxu0 %v3615
    %3663 = vmatprep.subr.mxu0 %v3614
    %3664 = vmatpush1.msra.mxu0 %v3613
    %3665 = vmatprep.subr.mxu0 0.0
    %3666 = vmatpush2.msra.mxu0 0.0
    %3667 = vmatprep.subr.mxu0 0.0
    %3668 = vmatpush2.msra.mxu0 0.0
    %3669 = vmatprep.subr.mxu0 0.0
    %3670 = vmatpush2.msra.mxu0 0.0
    %3671 = vmatprep.subr.mxu0 0.0
    %3672 = vmatpush2.msra.mxu0 0.0
    %3673 = vmatprep.subr.mxu0 0.0
    %3674 = vmatpush2.msra.mxu0 0.0
    %3675 = vmatprep.subr.mxu0 0.0
    %3676 = vmatpush2.msra.mxu0 0.0
    %3677 = vmatprep.subr.mxu0 0.0
    %3678 = vmatpush2.msra.mxu0 0.0
    %3679 = vmatprep.subr.mxu0 0.0
    %3680 = vmatpush2.msra.mxu0 0.0
    %3681 = vmatprep.subr.mxu0 0.0
    %3682 = vmatpush2.msra.mxu0 0.0
    %3683 = vmatprep.subr.mxu0 0.0
    %3684 = vmatpush2.msra.mxu0 0.0
    %3685 = vmatprep.subr.mxu0 0.0
    %3686 = vmatpush2.msra.mxu0 0.0
    %3687 = vmatprep.subr.mxu0 0.0
    %3688 = vmatpush2.msra.mxu0 0.0
    %3689 = vmatprep.subr.mxu0 0.0
    %3690 = vmatpush2.msra.mxu0 0.0
    %3691 = vmatprep.subr.mxu0 0.0
    %3692 = vmatpush2.msra.mxu0 0.0
    %3693 = vmatprep.subr.mxu0 0.0
    %3694 = vmatpush2.msra.mxu0 0.0
    %3695 = vmatprep.subr.mxu0 0.0
    %3696 = vmatpush2.msra.mxu0 0.0
    %3697 = vmatprep.mubr.f32.mxu0 0.0
    %3698 = vmatmul.mubr.f32.gmra.mxu0 %v3622
    %v3699 = vpop.f32.mrf.mxu0
    %v3700 = vadd.f32 0.0, %v3699
    %v3701 = vpop.f32.mrf.mxu0
    %v3702 = vadd.f32 0.0, %v3701
    %3703 = vmatprep.mubr.f32.mxu0 0.0
    %3704 = vmatmul.mubr.f32.gmra.mxu0 %v3625
    %v3705 = vpop.f32.mrf.mxu0
    %v3706 = vadd.f32 0.0, %v3705
    %v3707 = vpop.f32.mrf.mxu0
    %v3708 = vadd.f32 0.0, %v3707
    %3709 = vmatprep.mubr.f32.mxu0 0.0
    %3710 = vmatmul.mubr.f32.gmra.mxu0 %v3628
    %v3711 = vpop.f32.mrf.mxu0
    %v3712 = vadd.f32 0.0, %v3711
    %v3713 = vpop.f32.mrf.mxu0
    %v3714 = vadd.f32 0.0, %v3713
    %3715 = vmatprep.mubr.f32.mxu0 0.0
    %3716 = vmatmul.mubr.f32.gmra.mxu0 %v3631
    %v3717 = vpop.f32.mrf.mxu0
    %v3718 = vadd.f32 0.0, %v3717
    %v3719 = vpop.f32.mrf.mxu0
    %v3720 = vadd.f32 0.0, %v3719
    %3721 = vdwg.mxu0
    %v3723 = vsel %vm1292, %v3597, 0
    %v3726 = vsel %vm1292, %v3598, 0
    %v3729 = vsel %vm1292, %v3599, 0
    %v3732 = vsel %vm1292, %v3600, 0
    %3734 = vmatprep.subr.mxu0 0.0
    %3735 = vmatpush1.msra.mxu0 0.0
    %3736 = vmatprep.subr.mxu0 0.0
    %3737 = vmatpush1.msra.mxu0 0.0
    %3738 = vmatprep.subr.mxu0 0.0
    %3739 = vmatpush1.msra.mxu0 0.0
    %3740 = vmatprep.subr.mxu0 0.0
    %3741 = vmatpush1.msra.mxu0 0.0
    %3742 = vmatprep.subr.mxu0 0.0
    %3743 = vmatpush1.msra.mxu0 0.0
    %3744 = vmatprep.subr.mxu0 0.0
    %3745 = vmatpush1.msra.mxu0 0.0
    %3746 = vmatprep.subr.mxu0 0.0
    %3747 = vmatpush1.msra.mxu0 0.0
    %3748 = vmatprep.subr.mxu0 0.0
    %3749 = vmatpush1.msra.mxu0 0.0
    %3750 = vmatprep.subr.mxu0 0.0
    %3751 = vmatpush1.msra.mxu0 0.0
    %3752 = vmatprep.subr.mxu0 0.0
    %3753 = vmatpush1.msra.mxu0 0.0
    %3754 = vmatprep.subr.mxu0 0.0
    %3755 = vmatpush1.msra.mxu0 0.0
    %3756 = vmatprep.subr.mxu0 0.0
    %3757 = vmatpush1.msra.mxu0 0.0
    %3758 = vmatprep.subr.mxu0 %v3608
    %3759 = vmatpush1.msra.mxu0 %v3607
    %3760 = vmatprep.subr.mxu0 %v3606
    %3761 = vmatpush1.msra.mxu0 %v3605
    %3762 = vmatprep.subr.mxu0 %v3604
    %3763 = vmatpush1.msra.mxu0 %v3603
    %3764 = vmatprep.subr.mxu0 %v3602
    %3765 = vmatpush1.msra.mxu0 %v3601
    %3766 = vmatprep.subr.mxu0 0.0
    %3767 = vmatpush2.msra.mxu0 0.0
    %3768 = vmatprep.subr.mxu0 0.0
    %3769 = vmatpush2.msra.mxu0 0.0
    %3770 = vmatprep.subr.mxu0 0.0
    %3771 = vmatpush2.msra.mxu0 0.0
    %3772 = vmatprep.subr.mxu0 0.0
    %3773 = vmatpush2.msra.mxu0 0.0
    %3774 = vmatprep.subr.mxu0 0.0
    %3775 = vmatpush2.msra.mxu0 0.0
    %3776 = vmatprep.subr.mxu0 0.0
    %3777 = vmatpush2.msra.mxu0 0.0
    %3778 = vmatprep.subr.mxu0 0.0
    %3779 = vmatpush2.msra.mxu0 0.0
    %3780 = vmatprep.subr.mxu0 0.0
    %3781 = vmatpush2.msra.mxu0 0.0
    %3782 = vmatprep.subr.mxu0 0.0
    %3783 = vmatpush2.msra.mxu0 0.0
    %3784 = vmatprep.subr.mxu0 0.0
    %3785 = vmatpush2.msra.mxu0 0.0
    %3786 = vmatprep.subr.mxu0 0.0
    %3787 = vmatpush2.msra.mxu0 0.0
    %3788 = vmatprep.subr.mxu0 0.0
    %3789 = vmatpush2.msra.mxu0 0.0
    %3790 = vmatprep.subr.mxu0 0.0
    %3791 = vmatpush2.msra.mxu0 0.0
    %3792 = vmatprep.subr.mxu0 0.0
    %3793 = vmatpush2.msra.mxu0 0.0
    %3794 = vmatprep.subr.mxu0 0.0
    %3795 = vmatpush2.msra.mxu0 0.0
    %3796 = vmatprep.subr.mxu0 0.0
    %3797 = vmatpush2.msra.mxu0 0.0
    %3798 = vmatprep.mubr.f32.mxu0 0.0
    %3799 = vmatmul.mubr.f32.gmra.mxu0 %v3723
    %v3800 = vpop.f32.mrf.mxu0
    %v3801 = vadd.f32 %v3700, %v3800
    %v3802 = vpop.f32.mrf.mxu0
    %v3803 = vadd.f32 %v3702, %v3802
    %3804 = vmatprep.mubr.f32.mxu0 0.0
    %3805 = vmatmul.mubr.f32.gmra.mxu0 %v3726
    %v3806 = vpop.f32.mrf.mxu0
    %v3807 = vadd.f32 %v3706, %v3806
    %v3808 = vpop.f32.mrf.mxu0
    %v3809 = vadd.f32 %v3708, %v3808
    %3810 = vmatprep.mubr.f32.mxu0 0.0
    %3811 = vmatmul.mubr.f32.gmra.mxu0 %v3729
    %v3812 = vpop.f32.mrf.mxu0
    %v3813 = vadd.f32 %v3712, %v3812
    %v3814 = vpop.f32.mrf.mxu0
    %v3815 = vadd.f32 %v3714, %v3814
    %3816 = vmatprep.mubr.f32.mxu0 0.0
    %3817 = vmatmul.mubr.f32.gmra.mxu0 %v3732
    %v3818 = vpop.f32.mrf.mxu0
    %v3819 = vadd.f32 %v3718, %v3818
    %v3820 = vpop.f32.mrf.mxu0
    %v3821 = vadd.f32 %v3720, %v3820
    %3822 = vdwg.mxu0
    %v3823 = vld [vmem:[%s1495] sm:$0xff]
    %v3824 = vld [vmem:[%s1495 + $0x8] sm:$0xff]
    %v3825 = vld [vmem:[%s1495 + $0x10] sm:$0xff]
    %v3826 = vld [vmem:[%s1495 + $0x18] sm:$0xff]
    %v3827 = vld [vmem:[%s1258] sm:$0xff]
    %v3828 = vld [vmem:[%s1258 + $0x8] sm:$0xff]
    %v3829 = vld [vmem:[%s1258 + $0x10] sm:$0xff]
    %v3830 = vld [vmem:[%s1258 + $0x18] sm:$0xff]
    %v3831 = vld [vmem:[%s1258 + $0x20] sm:$0xff]
    %v3832 = vld [vmem:[%s1258 + $0x28] sm:$0xff]
    %v3833 = vld [vmem:[%s1258 + $0x30] sm:$0xff]
    %v3834 = vld [vmem:[%s1258 + $0x38] sm:$0xff]
    %v3836 = vsel %vm1292, %v3823, 0
    %v3839 = vsel %vm1292, %v3824, 0
    %v3842 = vsel %vm1292, %v3825, 0
    %v3845 = vsel %vm1292, %v3826, 0
    %3847 = vmatprep.subr.mxu0 0.0
    %3848 = vmatpush1.msra.mxu0 0.0
    %3849 = vmatprep.subr.mxu0 0.0
    %3850 = vmatpush1.msra.mxu0 0.0
    %3851 = vmatprep.subr.mxu0 0.0
    %3852 = vmatpush1.msra.mxu0 0.0
    %3853 = vmatprep.subr.mxu0 0.0
    %3854 = vmatpush1.msra.mxu0 0.0
    %3855 = vmatprep.subr.mxu0 0.0
    %3856 = vmatpush1.msra.mxu0 0.0
    %3857 = vmatprep.subr.mxu0 0.0
    %3858 = vmatpush1.msra.mxu0 0.0
    %3859 = vmatprep.subr.mxu0 0.0
    %3860 = vmatpush1.msra.mxu0 0.0
    %3861 = vmatprep.subr.mxu0 0.0
    %3862 = vmatpush1.msra.mxu0 0.0
    %3863 = vmatprep.subr.mxu0 0.0
    %3864 = vmatpush1.msra.mxu0 0.0
    %3865 = vmatprep.subr.mxu0 0.0
    %3866 = vmatpush1.msra.mxu0 0.0
    %3867 = vmatprep.subr.mxu0 0.0
    %3868 = vmatpush1.msra.mxu0 0.0
    %3869 = vmatprep.subr.mxu0 0.0
    %3870 = vmatpush1.msra.mxu0 0.0
    %3871 = vmatprep.subr.mxu0 %v3834
    %3872 = vmatpush1.msra.mxu0 %v3833
    %3873 = vmatprep.subr.mxu0 %v3832
    %3874 = vmatpush1.msra.mxu0 %v3831
    %3875 = vmatprep.subr.mxu0 %v3830
    %3876 = vmatpush1.msra.mxu0 %v3829
    %3877 = vmatprep.subr.mxu0 %v3828
    %3878 = vmatpush1.msra.mxu0 %v3827
    %3879 = vmatprep.subr.mxu0 0.0
    %3880 = vmatpush2.msra.mxu0 0.0
    %3881 = vmatprep.subr.mxu0 0.0
    %3882 = vmatpush2.msra.mxu0 0.0
    %3883 = vmatprep.subr.mxu0 0.0
    %3884 = vmatpush2.msra.mxu0 0.0
    %3885 = vmatprep.subr.mxu0 0.0
    %3886 = vmatpush2.msra.mxu0 0.0
    %3887 = vmatprep.subr.mxu0 0.0
    %3888 = vmatpush2.msra.mxu0 0.0
    %3889 = vmatprep.subr.mxu0 0.0
    %3890 = vmatpush2.msra.mxu0 0.0
    %3891 = vmatprep.subr.mxu0 0.0
    %3892 = vmatpush2.msra.mxu0 0.0
    %3893 = vmatprep.subr.mxu0 0.0
    %3894 = vmatpush2.msra.mxu0 0.0
    %3895 = vmatprep.subr.mxu0 0.0
    %3896 = vmatpush2.msra.mxu0 0.0
    %3897 = vmatprep.subr.mxu0 0.0
    %3898 = vmatpush2.msra.mxu0 0.0
    %3899 = vmatprep.subr.mxu0 0.0
    %3900 = vmatpush2.msra.mxu0 0.0
    %3901 = vmatprep.subr.mxu0 0.0
    %3902 = vmatpush2.msra.mxu0 0.0
    %3903 = vmatprep.subr.mxu0 0.0
    %3904 = vmatpush2.msra.mxu0 0.0
    %3905 = vmatprep.subr.mxu0 0.0
    %3906 = vmatpush2.msra.mxu0 0.0
    %3907 = vmatprep.subr.mxu0 0.0
    %3908 = vmatpush2.msra.mxu0 0.0
    %3909 = vmatprep.subr.mxu0 0.0
    %3910 = vmatpush2.msra.mxu0 0.0
    %3911 = vmatprep.mubr.f32.mxu0 0.0
    %3912 = vmatmul.mubr.f32.gmra.mxu0 %v3836
    %v3913 = vpop.f32.mrf.mxu0
    %v3914 = vadd.f32 0.0, %v3913
    %v3915 = vpop.f32.mrf.mxu0
    %v3916 = vadd.f32 0.0, %v3915
    %3917 = vmatprep.mubr.f32.mxu0 0.0
    %3918 = vmatmul.mubr.f32.gmra.mxu0 %v3839
    %v3919 = vpop.f32.mrf.mxu0
    %v3920 = vadd.f32 0.0, %v3919
    %v3921 = vpop.f32.mrf.mxu0
    %v3922 = vadd.f32 0.0, %v3921
    %3923 = vmatprep.mubr.f32.mxu0 0.0
    %3924 = vmatmul.mubr.f32.gmra.mxu0 %v3842
    %v3925 = vpop.f32.mrf.mxu0
    %v3926 = vadd.f32 0.0, %v3925
    %v3927 = vpop.f32.mrf.mxu0
    %v3928 = vadd.f32 0.0, %v3927
    %3929 = vmatprep.mubr.f32.mxu0 0.0
    %3930 = vmatmul.mubr.f32.gmra.mxu0 %v3845
    %v3931 = vpop.f32.mrf.mxu0
    %v3932 = vadd.f32 0.0, %v3931
    %v3933 = vpop.f32.mrf.mxu0
    %v3934 = vadd.f32 0.0, %v3933
    %3935 = vdwg.mxu0
    %v3936 = vadd.f32 %v3801, %v3914
    %v3937 = vadd.f32 %v3803, %v3916
    %v3938 = vadd.f32 %v3807, %v3920
    %v3939 = vadd.f32 %v3809, %v3922
    %v3940 = vadd.f32 %v3813, %v3926
    %v3941 = vadd.f32 %v3815, %v3928
    %v3942 = vadd.f32 %v3819, %v3932
    %v3943 = vadd.f32 %v3821, %v3934
    %v3944 = vld [vmem:[%s4] sm:$0xff]
    %v3945 = vld [vmem:[%s4 + $0x8] sm:$0xff]
    %v3946 = vld [vmem:[%s4 + $0x10] sm:$0xff]
    %v3947 = vld [vmem:[%s4 + $0x18] sm:$0xff]
    %3949 = vset.pattern.permute.xlu0 0
    %3950 = vperm.xlu0 %3949, %v3944
    %v3951 = vpop.permute.xlu0 %3950
    %3954 = vset.pattern.permute.xlu0 0
    %3955 = vperm.xlu0 %3954, %v3945
    %v3956 = vpop.permute.xlu0 %3955
    %3959 = vset.pattern.permute.xlu0 0
    %3960 = vperm.xlu0 %3959, %v3946
    %v3961 = vpop.permute.xlu0 %3960
    %3964 = vset.pattern.permute.xlu0 0
    %3965 = vperm.xlu0 %3964, %v3947
    %v3966 = vpop.permute.xlu0 %3965
    %v3968 = vadd.f32 %v3936, %v3951
    %v3969 = vadd.f32 %v3937, %v3951
    %v3970 = vadd.f32 %v3938, %v3956
    %v3971 = vadd.f32 %v3939, %v3956
    %v3972 = vadd.f32 %v3940, %v3961
    %v3973 = vadd.f32 %v3941, %v3961
    %v3974 = vadd.f32 %v3942, %v3966
    %v3975 = vadd.f32 %v3943, %v3966
    %s3976 = scalar_lea.vmem [#allocation6], 384
    %3977 = vst [vmem:[%s3976] sm:$0xff] %v3968
    %3978 = vst [vmem:[%s3976 + $0x8] sm:$0xff] %v3969
    %3979 = vst [vmem:[%s3976 + $0x10] sm:$0xff] %v3970
    %3980 = vst [vmem:[%s3976 + $0x18] sm:$0xff] %v3971
    %3981 = vst [vmem:[%s3976 + $0x20] sm:$0xff] %v3972
    %3982 = vst [vmem:[%s3976 + $0x28] sm:$0xff] %v3973
    %3983 = vst [vmem:[%s3976 + $0x30] sm:$0xff] %v3974
    %3984 = vst [vmem:[%s3976 + $0x38] sm:$0xff] %v3975
    %v3985 = vld [vmem:[%s3] sm:$0xff]
    %v3986 = vld [vmem:[%s3 + $0x8] sm:$0xff]
    %v3987 = vld [vmem:[%s3 + $0x10] sm:$0xff]
    %v3988 = vld [vmem:[%s3 + $0x18] sm:$0xff]
    %v3989 = vld [vmem:[%s1104] sm:$0xff]
    %v3990 = vld [vmem:[%s1104 + $0x8] sm:$0xff]
    %v3991 = vld [vmem:[%s1104 + $0x10] sm:$0xff]
    %v3992 = vld [vmem:[%s1104 + $0x18] sm:$0xff]
    %v3993 = vld [vmem:[%s1104 + $0x20] sm:$0xff]
    %v3994 = vld [vmem:[%s1104 + $0x28] sm:$0xff]
    %v3995 = vld [vmem:[%s1104 + $0x30] sm:$0xff]
    %v3996 = vld [vmem:[%s1104 + $0x38] sm:$0xff]
    %v3997 = vld [vmem:[%s1279] sm:$0xff]
    %v3998 = vld [vmem:[%s1279 + $0x8] sm:$0xff]
    %v3999 = vld [vmem:[%s1279 + $0x10] sm:$0xff]
    %v4000 = vld [vmem:[%s1279 + $0x18] sm:$0xff]
    %v4001 = vld [vmem:[%s1258] sm:$0xff]
    %v4002 = vld [vmem:[%s1258 + $0x8] sm:$0xff]
    %v4003 = vld [vmem:[%s1258 + $0x10] sm:$0xff]
    %v4004 = vld [vmem:[%s1258 + $0x18] sm:$0xff]
    %v4005 = vld [vmem:[%s1258 + $0x20] sm:$0xff]
    %v4006 = vld [vmem:[%s1258 + $0x28] sm:$0xff]
    %v4007 = vld [vmem:[%s1258 + $0x30] sm:$0xff]
    %v4008 = vld [vmem:[%s1258 + $0x38] sm:$0xff]
    %v4010 = vsel %vm1292, %v3997, 0
    %v4013 = vsel %vm1292, %v3998, 0
    %v4016 = vsel %vm1292, %v3999, 0
    %v4019 = vsel %vm1292, %v4000, 0
    %4021 = vmatprep.subr.mxu0 0.0
    %4022 = vmatpush1.msra.mxu0 0.0
    %4023 = vmatprep.subr.mxu0 0.0
    %4024 = vmatpush1.msra.mxu0 0.0
    %4025 = vmatprep.subr.mxu0 0.0
    %4026 = vmatpush1.msra.mxu0 0.0
    %4027 = vmatprep.subr.mxu0 0.0
    %4028 = vmatpush1.msra.mxu0 0.0
    %4029 = vmatprep.subr.mxu0 0.0
    %4030 = vmatpush1.msra.mxu0 0.0
    %4031 = vmatprep.subr.mxu0 0.0
    %4032 = vmatpush1.msra.mxu0 0.0
    %4033 = vmatprep.subr.mxu0 0.0
    %4034 = vmatpush1.msra.mxu0 0.0
    %4035 = vmatprep.subr.mxu0 0.0
    %4036 = vmatpush1.msra.mxu0 0.0
    %4037 = vmatprep.subr.mxu0 0.0
    %4038 = vmatpush1.msra.mxu0 0.0
    %4039 = vmatprep.subr.mxu0 0.0
    %4040 = vmatpush1.msra.mxu0 0.0
    %4041 = vmatprep.subr.mxu0 0.0
    %4042 = vmatpush1.msra.mxu0 0.0
    %4043 = vmatprep.subr.mxu0 0.0
    %4044 = vmatpush1.msra.mxu0 0.0
    %4045 = vmatprep.subr.mxu0 %v4008
    %4046 = vmatpush1.msra.mxu0 %v4007
    %4047 = vmatprep.subr.mxu0 %v4006
    %4048 = vmatpush1.msra.mxu0 %v4005
    %4049 = vmatprep.subr.mxu0 %v4004
    %4050 = vmatpush1.msra.mxu0 %v4003
    %4051 = vmatprep.subr.mxu0 %v4002
    %4052 = vmatpush1.msra.mxu0 %v4001
    %4053 = vmatprep.subr.mxu0 0.0
    %4054 = vmatpush2.msra.mxu0 0.0
    %4055 = vmatprep.subr.mxu0 0.0
    %4056 = vmatpush2.msra.mxu0 0.0
    %4057 = vmatprep.subr.mxu0 0.0
    %4058 = vmatpush2.msra.mxu0 0.0
    %4059 = vmatprep.subr.mxu0 0.0
    %4060 = vmatpush2.msra.mxu0 0.0
    %4061 = vmatprep.subr.mxu0 0.0
    %4062 = vmatpush2.msra.mxu0 0.0
    %4063 = vmatprep.subr.mxu0 0.0
    %4064 = vmatpush2.msra.mxu0 0.0
    %4065 = vmatprep.subr.mxu0 0.0
    %4066 = vmatpush2.msra.mxu0 0.0
    %4067 = vmatprep.subr.mxu0 0.0
    %4068 = vmatpush2.msra.mxu0 0.0
    %4069 = vmatprep.subr.mxu0 0.0
    %4070 = vmatpush2.msra.mxu0 0.0
    %4071 = vmatprep.subr.mxu0 0.0
    %4072 = vmatpush2.msra.mxu0 0.0
    %4073 = vmatprep.subr.mxu0 0.0
    %4074 = vmatpush2.msra.mxu0 0.0
    %4075 = vmatprep.subr.mxu0 0.0
    %4076 = vmatpush2.msra.mxu0 0.0
    %4077 = vmatprep.subr.mxu0 0.0
    %4078 = vmatpush2.msra.mxu0 0.0
    %4079 = vmatprep.subr.mxu0 0.0
    %4080 = vmatpush2.msra.mxu0 0.0
    %4081 = vmatprep.subr.mxu0 0.0
    %4082 = vmatpush2.msra.mxu0 0.0
    %4083 = vmatprep.subr.mxu0 0.0
    %4084 = vmatpush2.msra.mxu0 0.0
    %4085 = vmatprep.mubr.f32.mxu0 0.0
    %4086 = vmatmul.mubr.f32.gmra.mxu0 %v4010
    %v4087 = vpop.f32.mrf.mxu0
    %v4088 = vadd.f32 0.0, %v4087
    %v4089 = vpop.f32.mrf.mxu0
    %v4090 = vadd.f32 0.0, %v4089
    %4091 = vmatprep.mubr.f32.mxu0 0.0
    %4092 = vmatmul.mubr.f32.gmra.mxu0 %v4013
    %v4093 = vpop.f32.mrf.mxu0
    %v4094 = vadd.f32 0.0, %v4093
    %v4095 = vpop.f32.mrf.mxu0
    %v4096 = vadd.f32 0.0, %v4095
    %4097 = vmatprep.mubr.f32.mxu0 0.0
    %4098 = vmatmul.mubr.f32.gmra.mxu0 %v4016
    %v4099 = vpop.f32.mrf.mxu0
    %v4100 = vadd.f32 0.0, %v4099
    %v4101 = vpop.f32.mrf.mxu0
    %v4102 = vadd.f32 0.0, %v4101
    %4103 = vmatprep.mubr.f32.mxu0 0.0
    %4104 = vmatmul.mubr.f32.gmra.mxu0 %v4019
    %v4105 = vpop.f32.mrf.mxu0
    %v4106 = vadd.f32 0.0, %v4105
    %v4107 = vpop.f32.mrf.mxu0
    %v4108 = vadd.f32 0.0, %v4107
    %4109 = vdwg.mxu0
    %v4111 = vsel %vm1292, %v3985, 0
    %v4114 = vsel %vm1292, %v3986, 0
    %v4117 = vsel %vm1292, %v3987, 0
    %v4120 = vsel %vm1292, %v3988, 0
    %4122 = vmatprep.subr.mxu0 0.0
    %4123 = vmatpush1.msra.mxu0 0.0
    %4124 = vmatprep.subr.mxu0 0.0
    %4125 = vmatpush1.msra.mxu0 0.0
    %4126 = vmatprep.subr.mxu0 0.0
    %4127 = vmatpush1.msra.mxu0 0.0
    %4128 = vmatprep.subr.mxu0 0.0
    %4129 = vmatpush1.msra.mxu0 0.0
    %4130 = vmatprep.subr.mxu0 0.0
    %4131 = vmatpush1.msra.mxu0 0.0
    %4132 = vmatprep.subr.mxu0 0.0
    %4133 = vmatpush1.msra.mxu0 0.0
    %4134 = vmatprep.subr.mxu0 0.0
    %4135 = vmatpush1.msra.mxu0 0.0
    %4136 = vmatprep.subr.mxu0 0.0
    %4137 = vmatpush1.msra.mxu0 0.0
    %4138 = vmatprep.subr.mxu0 0.0
    %4139 = vmatpush1.msra.mxu0 0.0
    %4140 = vmatprep.subr.mxu0 0.0
    %4141 = vmatpush1.msra.mxu0 0.0
    %4142 = vmatprep.subr.mxu0 0.0
    %4143 = vmatpush1.msra.mxu0 0.0
    %4144 = vmatprep.subr.mxu0 0.0
    %4145 = vmatpush1.msra.mxu0 0.0
    %4146 = vmatprep.subr.mxu0 %v3996
    %4147 = vmatpush1.msra.mxu0 %v3995
    %4148 = vmatprep.subr.mxu0 %v3994
    %4149 = vmatpush1.msra.mxu0 %v3993
    %4150 = vmatprep.subr.mxu0 %v3992
    %4151 = vmatpush1.msra.mxu0 %v3991
    %4152 = vmatprep.subr.mxu0 %v3990
    %4153 = vmatpush1.msra.mxu0 %v3989
    %4154 = vmatprep.subr.mxu0 0.0
    %4155 = vmatpush2.msra.mxu0 0.0
    %4156 = vmatprep.subr.mxu0 0.0
    %4157 = vmatpush2.msra.mxu0 0.0
    %4158 = vmatprep.subr.mxu0 0.0
    %4159 = vmatpush2.msra.mxu0 0.0
    %4160 = vmatprep.subr.mxu0 0.0
    %4161 = vmatpush2.msra.mxu0 0.0
    %4162 = vmatprep.subr.mxu0 0.0
    %4163 = vmatpush2.msra.mxu0 0.0
    %4164 = vmatprep.subr.mxu0 0.0
    %4165 = vmatpush2.msra.mxu0 0.0
    %4166 = vmatprep.subr.mxu0 0.0
    %4167 = vmatpush2.msra.mxu0 0.0
    %4168 = vmatprep.subr.mxu0 0.0
    %4169 = vmatpush2.msra.mxu0 0.0
    %4170 = vmatprep.subr.mxu0 0.0
    %4171 = vmatpush2.msra.mxu0 0.0
    %4172 = vmatprep.subr.mxu0 0.0
    %4173 = vmatpush2.msra.mxu0 0.0
    %4174 = vmatprep.subr.mxu0 0.0
    %4175 = vmatpush2.msra.mxu0 0.0
    %4176 = vmatprep.subr.mxu0 0.0
    %4177 = vmatpush2.msra.mxu0 0.0
    %4178 = vmatprep.subr.mxu0 0.0
    %4179 = vmatpush2.msra.mxu0 0.0
    %4180 = vmatprep.subr.mxu0 0.0
    %4181 = vmatpush2.msra.mxu0 0.0
    %4182 = vmatprep.subr.mxu0 0.0
    %4183 = vmatpush2.msra.mxu0 0.0
    %4184 = vmatprep.subr.mxu0 0.0
    %4185 = vmatpush2.msra.mxu0 0.0
    %4186 = vmatprep.mubr.f32.mxu0 0.0
    %4187 = vmatmul.mubr.f32.gmra.mxu0 %v4111
    %v4188 = vpop.f32.mrf.mxu0
    %v4189 = vadd.f32 %v4088, %v4188
    %v4190 = vpop.f32.mrf.mxu0
    %v4191 = vadd.f32 %v4090, %v4190
    %4192 = vmatprep.mubr.f32.mxu0 0.0
    %4193 = vmatmul.mubr.f32.gmra.mxu0 %v4114
    %v4194 = vpop.f32.mrf.mxu0
    %v4195 = vadd.f32 %v4094, %v4194
    %v4196 = vpop.f32.mrf.mxu0
    %v4197 = vadd.f32 %v4096, %v4196
    %4198 = vmatprep.mubr.f32.mxu0 0.0
    %4199 = vmatmul.mubr.f32.gmra.mxu0 %v4117
    %v4200 = vpop.f32.mrf.mxu0
    %v4201 = vadd.f32 %v4100, %v4200
    %v4202 = vpop.f32.mrf.mxu0
    %v4203 = vadd.f32 %v4102, %v4202
    %4204 = vmatprep.mubr.f32.mxu0 0.0
    %4205 = vmatmul.mubr.f32.gmra.mxu0 %v4120
    %v4206 = vpop.f32.mrf.mxu0
    %v4207 = vadd.f32 %v4106, %v4206
    %v4208 = vpop.f32.mrf.mxu0
    %v4209 = vadd.f32 %v4108, %v4208
    %4210 = vdwg.mxu0
    %v4211 = vld [vmem:[%s1495] sm:$0xff]
    %v4212 = vld [vmem:[%s1495 + $0x8] sm:$0xff]
    %v4213 = vld [vmem:[%s1495 + $0x10] sm:$0xff]
    %v4214 = vld [vmem:[%s1495 + $0x18] sm:$0xff]
    %v4215 = vld [vmem:[#allocation2] sm:$0xff]
    %v4216 = vld [vmem:[#allocation2 + $0x8] sm:$0xff]
    %v4217 = vld [vmem:[#allocation2 + $0x10] sm:$0xff]
    %v4218 = vld [vmem:[#allocation2 + $0x18] sm:$0xff]
    %v4219 = vld [vmem:[#allocation2 + $0x20] sm:$0xff]
    %v4220 = vld [vmem:[#allocation2 + $0x28] sm:$0xff]
    %v4221 = vld [vmem:[#allocation2 + $0x30] sm:$0xff]
    %v4222 = vld [vmem:[#allocation2 + $0x38] sm:$0xff]
    %v4224 = vsel %vm1292, %v4211, 0
    %v4227 = vsel %vm1292, %v4212, 0
    %v4230 = vsel %vm1292, %v4213, 0
    %v4233 = vsel %vm1292, %v4214, 0
    %4235 = vmatprep.subr.mxu0 0.0
    %4236 = vmatpush1.msra.mxu0 0.0
    %4237 = vmatprep.subr.mxu0 0.0
    %4238 = vmatpush1.msra.mxu0 0.0
    %4239 = vmatprep.subr.mxu0 0.0
    %4240 = vmatpush1.msra.mxu0 0.0
    %4241 = vmatprep.subr.mxu0 0.0
    %4242 = vmatpush1.msra.mxu0 0.0
    %4243 = vmatprep.subr.mxu0 0.0
    %4244 = vmatpush1.msra.mxu0 0.0
    %4245 = vmatprep.subr.mxu0 0.0
    %4246 = vmatpush1.msra.mxu0 0.0
    %4247 = vmatprep.subr.mxu0 0.0
    %4248 = vmatpush1.msra.mxu0 0.0
    %4249 = vmatprep.subr.mxu0 0.0
    %4250 = vmatpush1.msra.mxu0 0.0
    %4251 = vmatprep.subr.mxu0 0.0
    %4252 = vmatpush1.msra.mxu0 0.0
    %4253 = vmatprep.subr.mxu0 0.0
    %4254 = vmatpush1.msra.mxu0 0.0
    %4255 = vmatprep.subr.mxu0 0.0
    %4256 = vmatpush1.msra.mxu0 0.0
    %4257 = vmatprep.subr.mxu0 0.0
    %4258 = vmatpush1.msra.mxu0 0.0
    %4259 = vmatprep.subr.mxu0 %v4222
    %4260 = vmatpush1.msra.mxu0 %v4221
    %4261 = vmatprep.subr.mxu0 %v4220
    %4262 = vmatpush1.msra.mxu0 %v4219
    %4263 = vmatprep.subr.mxu0 %v4218
    %4264 = vmatpush1.msra.mxu0 %v4217
    %4265 = vmatprep.subr.mxu0 %v4216
    %4266 = vmatpush1.msra.mxu0 %v4215
    %4267 = vmatprep.subr.mxu0 0.0
    %4268 = vmatpush2.msra.mxu0 0.0
    %4269 = vmatprep.subr.mxu0 0.0
    %4270 = vmatpush2.msra.mxu0 0.0
    %4271 = vmatprep.subr.mxu0 0.0
    %4272 = vmatpush2.msra.mxu0 0.0
    %4273 = vmatprep.subr.mxu0 0.0
    %4274 = vmatpush2.msra.mxu0 0.0
    %4275 = vmatprep.subr.mxu0 0.0
    %4276 = vmatpush2.msra.mxu0 0.0
    %4277 = vmatprep.subr.mxu0 0.0
    %4278 = vmatpush2.msra.mxu0 0.0
    %4279 = vmatprep.subr.mxu0 0.0
    %4280 = vmatpush2.msra.mxu0 0.0
    %4281 = vmatprep.subr.mxu0 0.0
    %4282 = vmatpush2.msra.mxu0 0.0
    %4283 = vmatprep.subr.mxu0 0.0
    %4284 = vmatpush2.msra.mxu0 0.0
    %4285 = vmatprep.subr.mxu0 0.0
    %4286 = vmatpush2.msra.mxu0 0.0
    %4287 = vmatprep.subr.mxu0 0.0
    %4288 = vmatpush2.msra.mxu0 0.0
    %4289 = vmatprep.subr.mxu0 0.0
    %4290 = vmatpush2.msra.mxu0 0.0
    %4291 = vmatprep.subr.mxu0 0.0
    %4292 = vmatpush2.msra.mxu0 0.0
    %4293 = vmatprep.subr.mxu0 0.0
    %4294 = vmatpush2.msra.mxu0 0.0
    %4295 = vmatprep.subr.mxu0 0.0
    %4296 = vmatpush2.msra.mxu0 0.0
    %4297 = vmatprep.subr.mxu0 0.0
    %4298 = vmatpush2.msra.mxu0 0.0
    %4299 = vmatprep.mubr.f32.mxu0 0.0
    %4300 = vmatmul.mubr.f32.gmra.mxu0 %v4224
    %v4301 = vpop.f32.mrf.mxu0
    %v4302 = vadd.f32 0.0, %v4301
    %v4303 = vpop.f32.mrf.mxu0
    %v4304 = vadd.f32 0.0, %v4303
    %4305 = vmatprep.mubr.f32.mxu0 0.0
    %4306 = vmatmul.mubr.f32.gmra.mxu0 %v4227
    %v4307 = vpop.f32.mrf.mxu0
    %v4308 = vadd.f32 0.0, %v4307
    %v4309 = vpop.f32.mrf.mxu0
    %v4310 = vadd.f32 0.0, %v4309
    %4311 = vmatprep.mubr.f32.mxu0 0.0
    %4312 = vmatmul.mubr.f32.gmra.mxu0 %v4230
    %v4313 = vpop.f32.mrf.mxu0
    %v4314 = vadd.f32 0.0, %v4313
    %v4315 = vpop.f32.mrf.mxu0
    %v4316 = vadd.f32 0.0, %v4315
    %4317 = vmatprep.mubr.f32.mxu0 0.0
    %4318 = vmatmul.mubr.f32.gmra.mxu0 %v4233
    %v4319 = vpop.f32.mrf.mxu0
    %v4320 = vadd.f32 0.0, %v4319
    %v4321 = vpop.f32.mrf.mxu0
    %v4322 = vadd.f32 0.0, %v4321
    %4323 = vdwg.mxu0
    %v4324 = vadd.f32 %v4189, %v4302
    %v4325 = vadd.f32 %v4191, %v4304
    %v4326 = vadd.f32 %v4195, %v4308
    %v4327 = vadd.f32 %v4197, %v4310
    %v4328 = vadd.f32 %v4201, %v4314
    %v4329 = vadd.f32 %v4203, %v4316
    %v4330 = vadd.f32 %v4207, %v4320
    %v4331 = vadd.f32 %v4209, %v4322
    %v4332 = vld [vmem:[%s4] sm:$0xff]
    %v4333 = vld [vmem:[%s4 + $0x8] sm:$0xff]
    %v4334 = vld [vmem:[%s4 + $0x10] sm:$0xff]
    %v4335 = vld [vmem:[%s4 + $0x18] sm:$0xff]
    %4337 = vset.pattern.permute.xlu0 0
    %4338 = vperm.xlu0 %4337, %v4332
    %v4339 = vpop.permute.xlu0 %4338
    %4342 = vset.pattern.permute.xlu0 0
    %4343 = vperm.xlu0 %4342, %v4333
    %v4344 = vpop.permute.xlu0 %4343
    %4347 = vset.pattern.permute.xlu0 0
    %4348 = vperm.xlu0 %4347, %v4334
    %v4349 = vpop.permute.xlu0 %4348
    %4352 = vset.pattern.permute.xlu0 0
    %4353 = vperm.xlu0 %4352, %v4335
    %v4354 = vpop.permute.xlu0 %4353
    %v4356 = vadd.f32 %v4324, %v4339
    %v4357 = vadd.f32 %v4325, %v4339
    %v4358 = vadd.f32 %v4326, %v4344
    %v4359 = vadd.f32 %v4327, %v4344
    %v4360 = vadd.f32 %v4328, %v4349
    %v4361 = vadd.f32 %v4329, %v4349
    %v4362 = vadd.f32 %v4330, %v4354
    %v4363 = vadd.f32 %v4331, %v4354
    %s4364 = scalar_lea.vmem [#allocation6], 448
    %4365 = vst [vmem:[%s4364] sm:$0xff] %v4356
    %4366 = vst [vmem:[%s4364 + $0x8] sm:$0xff] %v4357
    %4367 = vst [vmem:[%s4364 + $0x10] sm:$0xff] %v4358
    %4368 = vst [vmem:[%s4364 + $0x18] sm:$0xff] %v4359
    %4369 = vst [vmem:[%s4364 + $0x20] sm:$0xff] %v4360
    %4370 = vst [vmem:[%s4364 + $0x28] sm:$0xff] %v4361
    %4371 = vst [vmem:[%s4364 + $0x30] sm:$0xff] %v4362
    %4372 = vst [vmem:[%s4364 + $0x38] sm:$0xff] %v4363
    // Predicated region
    $region26: #{tpu_custom_call.1} parent=1 // pred_check
      _
    $region27: #{tpu_custom_call.1} parent=1 // pred_check_branch
      %4374 = sbr.rel (0) target = $region29
    $region28: #{tpu_custom_call.1} parent=1 // pred_region
      %s4376 = ssub.s32 8192, 8192
      %4377 = vsyncadd [#allocation5], %s4376
      %s4378 = sshll.u32 [#allocation6], 4
      %s4379 = int_to_ptr.vmem [resolvable:$true] %s4378
      %4384 = dma.vmem_to_hbm [thread:$0]  %s4379, 8192, %s5, [#allocation5], 256, 256, 16
    $region29: #{tpu_custom_call.1} parent=1 // pred_fallthru
      _
    // Predicated region
    $region30: #{tpu_custom_call.1} parent=1 // pred_check
      _
    $region31: #{tpu_custom_call.1} parent=1 // pred_check_branch
      %4386 = sbr.rel (0) target = $region33
    $region32: #{tpu_custom_call.1} parent=1 // pred_region
      %4387 = dma.done [#allocation5], 8192
    $region33: #{tpu_custom_call.1} parent=1 // pred_fallthru
      _
    %4388 = vsyncpa [#allocation4], 1
    %4389 = vsyncpa [#allocation5], 1

</llo_original>
